<compile_context>
chip_gen: v5e
topology: v5e:2x2
jax: 0.10.0
libtpu: 0.0.40
codegen_flags: <defaults>
</compile_context>

<pallas_src>
import functools
import math

import jax
import jax.numpy as jnp
from jax.experimental import pallas as pl
from jax.experimental.pallas import tpu as pltpu


# ----------------------------------------------------------------------------
# Helpers
# ----------------------------------------------------------------------------
def _round_up(n, m):
    return ((n + m - 1) // m) * m


def _physical_vmem_bytes():
    try:
        return int(pltpu.get_tpu_info().vmem_capacity_bytes)
    except Exception:
        # Conservative fallback (v7x per-TC size); safe on every generation.
        return 64 << 20


def _vmem_budget_bytes(block_m, d_model, d_ff, w_itemsize, io_itemsize,
                       single_buffer_weights):
    wmul = 1 if single_buffer_weights else 2
    weights = (d_model * 2 * d_ff + d_ff * d_model) * w_itemsize * wmul
    io_tiles = 2 * 2 * block_m * d_model * io_itemsize        # x + out, dbl-buffered
    interm = block_m * (2 * d_ff + d_ff + 2 * d_model) * 4    # f32 temporaries
    total = int((weights + io_tiles + interm) * 1.5)          # compiler-scratch headroom
    cap = int(_physical_vmem_bytes() * 0.78)                  # ~100 MiB v5e/v6e, ~50 MiB v7x
    return max(min(total, cap), 32 << 20)


def _single_buffer_supported():
    """Explicit feature check for pipeline_mode=pl.Buffered(1) (no broad
    exception handling around the actual compile)."""
    if not hasattr(pl, "Buffered"):
        return False
    try:
        pl.BlockSpec((8, 128), lambda i: (0, 0), pipeline_mode=pl.Buffered(1))
        return True
    except Exception:
        return False


_SINGLE_BUFFER_WEIGHTS = _single_buffer_supported()


# ----------------------------------------------------------------------------
# Kernel
# ----------------------------------------------------------------------------
def _smffn_kernel(x_ref, w13_ref, w2_ref, o_ref, *, approx_gelu):
    d_ff, d_model = w2_ref.shape

    w13 = w13_ref[...]                                    # (d_model, 2*d_ff), compute dtype
    x = x_ref[...].astype(w13.dtype)                      # VPU cast, hidden under MXU

    # Fused x @ [W1 | W3] -> (TM, 2*d_ff); both branches share the LHS tile.
    ht = jnp.dot(x, w13, preferred_element_type=jnp.float32)
    h = ht[:, :d_ff]                                      # pre-GELU branch
    a = ht[:, d_ff:d_ff + d_model]                        # modulation value
    wg = ht[:, d_ff + d_model:]                           # modulation gate
    # (all lane slices fall on multiples of 128 since d_model % 128 == 0)

    if approx_gelu:
        # tanh-approx GELU: EUP slot, cheaper in the small-d_model VALU-bound regime.
        g = jax.nn.gelu(h, approximate=True)
    else:
        # Exact (erf) GELU, matching torch.nn.functional.gelu default.
        g = 0.5 * h * (1.0 + jax.lax.erf(h * (1.0 / math.sqrt(2.0))))

    x1 = jnp.dot(g.astype(w2_ref.dtype), w2_ref[...],
                 preferred_element_type=jnp.float32)      # (TM, d_model)
    x2 = a * jax.nn.sigmoid(wg)

    o_ref[...] = (x1 + x2).astype(o_ref.dtype)


# ----------------------------------------------------------------------------
# Wrappers
# ----------------------------------------------------------------------------
def fuse_smffn_weights(w1, w2, w3, compute_dtype=jnp.bfloat16):
    """Call ONCE at parameter-init time.  Fuses the two matmuls that share x as
    LHS into a single (d_model, 2*d_ff) matrix and casts weights to the MXU
    compute dtype (default bf16; pass jnp.float32 for exact torch parity)."""
    w13 = jnp.concatenate([w1, w3], axis=1).astype(compute_dtype)
    return w13, w2.astype(compute_dtype)


@functools.partial(jax.jit,
                   static_argnames=("block_m", "single_buffer_weights", "approx_gelu"))
def _smffn_impl(x, w13, w2, *, block_m, single_buffer_weights, approx_gelu):
    B, S, d_model = x.shape
    d_ff = w2.shape[0]
    N = B * S

    x2d = x.reshape(N, d_model)                           # free (contiguous) reshape

    # Clamp the row tile; ragged N is handled by Pallas partial-tile masking —
    # no jnp.pad copy of the activations.
    block_m = int(min(block_m, _round_up(N, 128)))
    grid_m = pl.cdiv(N, block_m)

    def w_spec(shape):
        if single_buffer_weights:
            # Constant index_map across the grid -> no need to double-buffer.
            return pl.BlockSpec(shape, lambda i: (0, 0), pipeline_mode=pl.Buffered(1))
        return pl.BlockSpec(shape, lambda i: (0, 0))

    kernel = functools.partial(_smffn_kernel, approx_gelu=approx_gelu)

    out = pl.pallas_call(
        kernel,
        out_shape=jax.ShapeDtypeStruct((N, d_model), x.dtype),
        grid_spec=pltpu.PrefetchScalarGridSpec(
            num_scalar_prefetch=0,
            grid=(grid_m,),
            in_specs=[
                pl.BlockSpec((block_m, d_model), lambda i: (i, 0)),   # x tile
                w_spec((d_model, 2 * d_ff)),                          # fused [W1|W3]
                w_spec((d_ff, d_model)),                              # W2
            ],
            out_specs=pl.BlockSpec((block_m, d_model), lambda i: (i, 0)),
        ),
        compiler_params=pltpu.CompilerParams(
            dimension_semantics=("parallel",),   # megacore-shardable row axis
            vmem_limit_bytes=_vmem_budget_bytes(
                block_m, d_model, d_ff,
                w13.dtype.itemsize, x.dtype.itemsize, single_buffer_weights),
        ),
    )(x2d, w13, w2)

    return out.reshape(B, S, d_model)


def smffn(x, params, *, block_m=512, approx_gelu=False):
    """SM-FFN forward.

    x:      (B, S, d_model)
    params: (w13, w2) from fuse_smffn_weights(w1, w2, w3); w1/w3 are the
            (d_model, d_ff) pre-transposed nn.Linear weights, w2 is (d_ff, d_model).
    """
    w13, w2 = params
    d_model = x.shape[-1]
    d_ff = w2.shape[0]
    assert d_model % 128 == 0, (
        "SMFFN Pallas kernel requires d_model % 128 == 0 "
        "(lane-dense ht slices and unmasked output stores)")
    assert d_ff == 2 * d_model, "SMFFN requires d_ff == 2 * d_model"
    assert w13.shape == (d_model, 2 * d_ff), "params must come from fuse_smffn_weights"
    return _smffn_impl(x, w13, w2, block_m=int(block_m),
                       single_buffer_weights=_SINGLE_BUFFER_WEIGHTS,
                       approx_gelu=bool(approx_gelu))


def smffn_ref(x, w1, w2, w3):
    h = jax.nn.gelu(x @ w1, approximate=False)
    x1 = h @ w2
    t = x @ w3
    a, w = jnp.split(t, 2, axis=-1)
    return x1 + a * jax.nn.sigmoid(w)


# ----------------------------------------------------------------------------
# Self-test
# ----------------------------------------------------------------------------
if __name__ == "__main__":
    key = jax.random.PRNGKey(0)
    # Lane-dense test config: d_model multiple of 128; N = B*S = 512 so the
    # grid has 2 parallel steps at block_m=256 (megacore-shardable on v7x).
    B, S, d_model = 2, 256, 128
    d_ff = 2 * d_model

    kx, k1, k2, k3 = jax.random.split(key, 4)
    x = jax.random.normal(kx, (B, S, d_model), dtype=jnp.float32)
    # nn.Linear weights are (out, in); stored pre-transposed so y = x @ W.
    w1 = jax.random.normal(k1, (d_model, d_ff), dtype=jnp.float32) * 0.05
    w2 = jax.random.normal(k2, (d_ff, d_model), dtype=jnp.float32) * 0.05
    w3 = jax.random.normal(k3, (d_model, d_ff), dtype=jnp.float32) * 0.05

    ref = smffn_ref(x, w1, w2, w3)

    # 1) f32 compute path: exact parity with the torch reference semantics.
    params_f32 = fuse_smffn_weights(w1, w2, w3, compute_dtype=jnp.float32)
    out_f32 = jax.block_until_ready(smffn(x, params_f32, block_m=256))
    assert out_f32.shape == (B, S, d_model)
    assert jnp.allclose(out_f32, ref, atol=1e-4, rtol=1e-4), "f32 path mismatch vs reference"

    # 2) Default bf16 MXU path: native MXU rate; looser tolerance (bf16 inputs,
    #    f32 accumulation).
    params_bf16 = fuse_smffn_weights(w1, w2, w3)   # bf16 default
    out_bf16 = jax.block_until_ready(smffn(x, params_bf16, block_m=256))
    assert out_bf16.shape == (B, S, d_model)
    assert jnp.allclose(out_bf16, ref, atol=5e-2, rtol=5e-2), "bf16 path mismatch vs reference"

    print("KERNEL_OK")
</pallas_src>

<mosaic_0001>
module attributes {stable_mosaic.version = 11 : i64} {
  func.func @_smffn_kernel(%arg0: i32, %arg1: memref<256x128xf32, #tpu.memory_space<vmem>>, %arg2: memref<128x512xf32, #tpu.memory_space<vmem>>, %arg3: memref<256x128xf32, #tpu.memory_space<vmem>>, %arg4: memref<256x128xf32, #tpu.memory_space<vmem>>) attributes {dimension_semantics = [#tpu.dimension_semantics<parallel>], iteration_bounds = array<i64: 2>, scalar_prefetch = 0 : i64, scratch_operands = 0 : i64, tpu.core_type = #tpu.core_type<tc>, window_params = [{transform_indices = @transform_0, window_bounds = array<i64: 256, 128>}, {pipeline_mode = #tpu.pipeline_mode<synchronous>, transform_indices = @transform_1, window_bounds = array<i64: 128, 512>}, {pipeline_mode = #tpu.pipeline_mode<synchronous>, transform_indices = @transform_2, window_bounds = array<i64: 256, 128>}, {transform_indices = @transform_3, window_bounds = array<i64: 256, 128>}]} {
    %c0 = arith.constant 0 : index
    %c0_0 = arith.constant 0 : index
    %0 = vector.load %arg2[%c0, %c0_0] : memref<128x512xf32, #tpu.memory_space<vmem>>, vector<128x512xf32>
    %c0_1 = arith.constant 0 : index
    %c0_2 = arith.constant 0 : index
    %1 = vector.load %arg1[%c0_1, %c0_2] : memref<256x128xf32, #tpu.memory_space<vmem>>, vector<256x128xf32>
    %cst = arith.constant dense<0.000000e+00> : vector<256x512xf32>
    %2 = tpu.matmul %1, %0, %cst {dimension_numbers = #tpu.dot_dimension_numbers<[1], [0], [0], [1], [0, 0, 1, 1], [], []>} : vector<256x128xf32>, vector<128x512xf32>, vector<256x512xf32> -> vector<256x512xf32>
    %3 = vector.extract_strided_slice %2 {offsets = [0, 0], sizes = [256, 256], strides = [1, 1]} : vector<256x512xf32> to vector<256x256xf32>
    %4 = vector.extract_strided_slice %2 {offsets = [0, 256], sizes = [256, 128], strides = [1, 1]} : vector<256x512xf32> to vector<256x128xf32>
    %5 = vector.extract_strided_slice %2 {offsets = [0, 384], sizes = [256, 128], strides = [1, 1]} : vector<256x512xf32> to vector<256x128xf32>
    %cst_3 = arith.constant 5.000000e-01 : f32
    %6 = vector.broadcast %cst_3 : f32 to vector<256x256xf32>
    %7 = arith.mulf %6, %3 : vector<256x256xf32>
    %cst_4 = arith.constant 0.707106769 : f32
    %8 = vector.broadcast %cst_4 : f32 to vector<256x256xf32>
    %9 = arith.mulf %3, %8 : vector<256x256xf32>
    %10 = math.erf %9 : vector<256x256xf32>
    %cst_5 = arith.constant 1.000000e+00 : f32
    %11 = vector.broadcast %cst_5 : f32 to vector<256x256xf32>
    %12 = arith.addf %11, %10 : vector<256x256xf32>
    %13 = arith.mulf %7, %12 : vector<256x256xf32>
    %c0_6 = arith.constant 0 : index
    %c0_7 = arith.constant 0 : index
    %14 = vector.load %arg3[%c0_6, %c0_7] : memref<256x128xf32, #tpu.memory_space<vmem>>, vector<256x128xf32>
    %cst_8 = arith.constant dense<0.000000e+00> : vector<256x128xf32>
    %15 = tpu.matmul %13, %14, %cst_8 {dimension_numbers = #tpu.dot_dimension_numbers<[1], [0], [0], [1], [0, 0, 1, 1], [], []>} : vector<256x256xf32>, vector<256x128xf32>, vector<256x128xf32> -> vector<256x128xf32>
    %16 = arith.negf %5 : vector<256x128xf32>
    %17 = math.exp %16 : vector<256x128xf32>
    %cst_9 = arith.constant 1.000000e+00 : f32
    %18 = vector.broadcast %cst_9 : f32 to vector<256x128xf32>
    %19 = arith.addf %18, %17 : vector<256x128xf32>
    %20 = arith.divf %18, %19 : vector<256x128xf32>
    %21 = arith.mulf %4, %20 : vector<256x128xf32>
    %22 = arith.addf %15, %21 : vector<256x128xf32>
    %c0_10 = arith.constant 0 : index
    %c0_11 = arith.constant 0 : index
    %23 = vector.load %arg4[%c0_10, %c0_11] : memref<256x128xf32, #tpu.memory_space<vmem>>, vector<256x128xf32>
    tpu.vector_store %arg4[%c0_10, %c0_11], %22 {strides = array<i32>} : memref<256x128xf32, #tpu.memory_space<vmem>>, vector<256x128xf32>,
    return
  }
  func.func @transform_0(%arg0: i32) -> (i32, i32) {
    %c0_i32 = arith.constant 0 : i32
    %c0_i32_0 = arith.constant 0 : i32
    return %arg0, %c0_i32 : i32, i32
  }
  func.func @transform_1(%arg0: i32) -> (i32, i32) {
    %c0_i32 = arith.constant 0 : i32
    %c0_i32_0 = arith.constant 0 : i32
    %c0_i32_1 = arith.constant 0 : i32
    return %c0_i32, %c0_i32_0 : i32, i32
  }
  func.func @transform_2(%arg0: i32) -> (i32, i32) {
    %c0_i32 = arith.constant 0 : i32
    %c0_i32_0 = arith.constant 0 : i32
    %c0_i32_1 = arith.constant 0 : i32
    return %c0_i32, %c0_i32_0 : i32, i32
  }
  func.func @transform_3(%arg0: i32) -> (i32, i32) {
    %c0_i32 = arith.constant 0 : i32
    %c0_i32_0 = arith.constant 0 : i32
    return %arg0, %c0_i32 : i32, i32
  }
}

</mosaic_0001>

<llo_original>
// kernel: _smffn_impl.1
$region0: #{_smffn_impl.1}
  #allocation0 [shape = 'u32[]', space=smem, size = 0x4, offset = 0x4, fixed_abs, tag = 'smem constant byte address 0x4 - core index']
  #allocation1 [shape = 'u32[72,128]{1,0:T(1,128)}', space=vmem, size = 0x9000, scoped, tag = 'internal scratch']
  %s0 = inlined_call_operand.hbm [shape: f32[512,128], index: 0, kind: input, shape index: {}]
  %s1 = inlined_call_operand.hbm [shape: f32[128,512], index: 1, kind: input, shape index: {}]
  %s2 = inlined_call_operand.hbm [shape: f32[256,128], index: 2, kind: input, shape index: {}]
  %s3 = inlined_call_operand.hbm [shape: f32[512,128], index: 3, kind: output, shape index: {}]
  %s4 = sld [smem:[#allocation0]]
  $region57: #{_smffn_impl.1} parent=0
    _
  %s6 = ssub.s32 1, %s4
  %s7 = scalar_select 0, %s6, %s4
  $region1: #{_smffn_impl.1} parent=0
    #allocation2 [shape = 'u8[262144]{0}', space=vmem, size = 0x40000, scoped, tag = 'input window, operand 0']
    #allocation3 [shape = 's32[2]{0}', space=sflag, size = 0x8, scoped, tag = 'scoped memory for _smffn_impl.1']
    #allocation4 [shape = 's32[2]{0}', space=sflag, size = 0x8, scoped, tag = 'scoped memory for _smffn_impl.1']
    #allocation5 [shape = 'u8[262144]{0}', space=vmem, size = 0x40000, scoped, tag = 'input window, operand 1, single buffered']
    #allocation6 [shape = 's32[1]{0}', space=sflag, size = 0x4, scoped, tag = 'scoped memory for _smffn_impl.1']
    #allocation7 [shape = 'u8[131072]{0}', space=vmem, size = 0x20000, scoped, tag = 'input window, operand 2, single buffered']
    #allocation8 [shape = 'u8[262144]{0}', space=vmem, size = 0x40000, scoped, tag = 'output window, operand 0']
    %8 = vsyncpa [#allocation3], 0
    %s9 = scalar_lea.sflag [#allocation3], 1
    %10 = vsyncpa %s9, 0
    %11 = vsyncpa [#allocation6], 0
    %12 = vsyncpa [#allocation4], 0
    %s13 = scalar_lea.sflag [#allocation4], 1
    %14 = vsyncpa %s13, 0
    loop: start=0, step=1, limit=4
    $region2: #{_smffn_impl.1} parent=1 // loop_pre_header
      _
    $region3: #{_smffn_impl.1} parent=1 // loop_header
      %s16 = sphi 0, %s20
      %p17 = scmp.ge.s32.totalorder %s16, 4
      %s26 = sphi 0, %s28
      %s29 = sphi 0, %s26
      %s30 = sphi 0, %s29
      %s46 = sphi 0, %s30
      %s50 = sphi 0, %s50
      %s52 = sphi 0, %s50
      %s53 = sphi 0, %s52
      %s67 = sphi 0, %s53
      %s71 = sphi 0, %s71
      %s73 = sphi 0, %s71
      %s74 = sphi 0, %s73
      %s88 = sphi 0, %s74
      %s94 = sphi 0, %s96
      %s97 = sphi 0, %s94
      %s98 = sphi 0, %s97
      %s114 = sphi 0, %s98
    $region4: #{_smffn_impl.1} parent=1 // loop_header_branch
      %19 = sbr.rel (%p17) target = $region8
    $region5: #{_smffn_impl.1} parent=1 // loop_body
      %s21 = ssub.s32 %s16, 1
      %s22 = ssub.s32 %s16, 2
      %s23 = sadd.s32 %s16, 1
      %s24 = ssub.s32 %s16, %s23
      %p25 = scmp.eq.s32.totalorder %s24, 0
      %s27 = sadd.s32 %s26, 1
      %s28 = scalar_select %p25, %s26, %s27
      %p31 = pneg %p25
      %p32 = scmp.eq.s32.totalorder %s16, 1
      %p33 = por %p31, %p32
      %p34 = scmp.ne.s32.totalorder %s26, %s29
      %p35 = scmp.eq.s32.totalorder %s16, 0
      %p36 = por %p34, %p35
      %p37 = scmp.ne.s32.totalorder %s26, %s29
      %p38 = scmp.eq.s32.totalorder %s21, 1
      %p39 = por %p37, %p38
      %p40 = scmp.ne.s32.totalorder %s29, %s30
      %p41 = scmp.eq.s32.totalorder %s21, 0
      %p42 = por %p40, %p41
      %p43 = scmp.ne.s32.totalorder %s29, %s30
      %p44 = scmp.eq.s32.totalorder %s22, 1
      %p45 = por %p43, %p44
      %p47 = scmp.ne.s32.totalorder %s30, %s46
      %p48 = scmp.eq.s32.totalorder %s22, 0
      %p49 = por %p47, %p48
      %s51 = sadd.s32 %s50, 1
      %p54 = scmp.eq.s32.totalorder %s16, 1
      %p55 = scmp.ne.s32.totalorder %s50, %s52
      %p56 = scmp.eq.s32.totalorder %s16, 0
      %p57 = por %p55, %p56
      %p58 = scmp.ne.s32.totalorder %s50, %s52
      %p59 = scmp.eq.s32.totalorder %s21, 1
      %p60 = por %p58, %p59
      %p61 = scmp.ne.s32.totalorder %s52, %s53
      %p62 = scmp.eq.s32.totalorder %s21, 0
      %p63 = por %p61, %p62
      %p64 = scmp.ne.s32.totalorder %s52, %s53
      %p65 = scmp.eq.s32.totalorder %s22, 1
      %p66 = por %p64, %p65
      %p68 = scmp.ne.s32.totalorder %s53, %s67
      %p69 = scmp.eq.s32.totalorder %s22, 0
      %p70 = por %p68, %p69
      %s72 = sadd.s32 %s71, 1
      %p75 = scmp.eq.s32.totalorder %s16, 1
      %p76 = scmp.ne.s32.totalorder %s71, %s73
      %p77 = scmp.eq.s32.totalorder %s16, 0
      %p78 = por %p76, %p77
      %p79 = scmp.ne.s32.totalorder %s71, %s73
      %p80 = scmp.eq.s32.totalorder %s21, 1
      %p81 = por %p79, %p80
      %p82 = scmp.ne.s32.totalorder %s73, %s74
      %p83 = scmp.eq.s32.totalorder %s21, 0
      %p84 = por %p82, %p83
      %p85 = scmp.ne.s32.totalorder %s73, %s74
      %p86 = scmp.eq.s32.totalorder %s22, 1
      %p87 = por %p85, %p86
      %p89 = scmp.ne.s32.totalorder %s74, %s88
      %p90 = scmp.eq.s32.totalorder %s22, 0
      %p91 = por %p89, %p90
      %s92 = ssub.s32 %s16, %s23
      %p93 = scmp.eq.s32.totalorder %s92, 0
      %s95 = sadd.s32 %s94, 1
      %s96 = scalar_select %p93, %s94, %s95
      %p99 = pneg %p93
      %p100 = scmp.eq.s32.totalorder %s16, 1
      %p101 = por %p99, %p100
      %p102 = scmp.ne.s32.totalorder %s94, %s97
      %p103 = scmp.eq.s32.totalorder %s16, 0
      %p104 = por %p102, %p103
      %p105 = scmp.ne.s32.totalorder %s94, %s97
      %p106 = scmp.eq.s32.totalorder %s21, 1
      %p107 = por %p105, %p106
      %p108 = scmp.ne.s32.totalorder %s97, %s98
      %p109 = scmp.eq.s32.totalorder %s21, 0
      %p110 = por %p108, %p109
      %p111 = scmp.ne.s32.totalorder %s97, %s98
      %p112 = scmp.eq.s32.totalorder %s22, 1
      %p113 = por %p111, %p112
      %p115 = scmp.ne.s32.totalorder %s98, %s114
      %p116 = scmp.eq.s32.totalorder %s22, 0
      %p117 = por %p115, %p116
      %p118 = scmp.le.s32.totalorder 1, %s16
      %p119 = scmp.lt.s32.totalorder %s16, 3
      %p120 = pnand %p118, %p119
      %p121 = pneg %p120
      // Predicated region
      $region9: #{_smffn_impl.1} parent=5 // pred_check
        _
      $region10: #{_smffn_impl.1} parent=5 // pred_check_branch
        %123 = sbr.rel (%p120) target = $region12
      $region11: #{_smffn_impl.1} parent=5 // pred_region
        %s124 = ssub.s32 %s16, 1
        // Predicated region
        $region13: #{_smffn_impl.1} parent=11 // pred_check
          %p125 = pneg %p63
        $region14: #{_smffn_impl.1} parent=11 // pred_check_branch
          %127 = sbr.rel (%p125) target = $region16
        $region15: #{_smffn_impl.1} parent=11 // pred_region
          %129 = vsyncadd [#allocation6], 0
          %s130 = sshll.u32 %s1, 4
          %s131 = int_to_ptr.hbm [resolvable:$true] %s130
          %s132 = sshll.u32 [#allocation5], 4
          %s133 = int_to_ptr.vmem [resolvable:$true] %s132
          %138 = dma.hbm_to_vmem [thread:$0]  %s131, 8192, %s133, [#allocation6], 512, 512, 32
        $region16: #{_smffn_impl.1} parent=11 // pred_fallthru
          _
        // Predicated region
        $region17: #{_smffn_impl.1} parent=11 // pred_check
          %p139 = pneg %p84
        $region18: #{_smffn_impl.1} parent=11 // pred_check_branch
          %141 = sbr.rel (%p139) target = $region20
        $region19: #{_smffn_impl.1} parent=11 // pred_region
          %143 = vsyncadd [#allocation6], 0
          %s144 = sshll.u32 %s2, 4
          %s145 = int_to_ptr.hbm [resolvable:$true] %s144
          %s146 = sshll.u32 [#allocation7], 4
          %s147 = int_to_ptr.vmem [resolvable:$true] %s146
          %152 = dma.hbm_to_vmem [thread:$0]  %s145, 4096, %s147, [#allocation6], 128, 128, 8
        $region20: #{_smffn_impl.1} parent=11 // pred_fallthru
          _
      $region12: #{_smffn_impl.1} parent=5 // pred_fallthru
        _
      %p153 = scmp.lt.s32.totalorder %s16, 2
      // Predicated region
      $region21: #{_smffn_impl.1} parent=5 // pred_check
        %p154 = pneg %p153
      $region22: #{_smffn_impl.1} parent=5 // pred_check_branch
        %156 = sbr.rel (%p154) target = $region24
      $region23: #{_smffn_impl.1} parent=5 // pred_region
        // Predicated region
        $region25: #{_smffn_impl.1} parent=23 // pred_check
          %p157 = pneg %p36
        $region26: #{_smffn_impl.1} parent=23 // pred_check_branch
          %159 = sbr.rel (%p157) target = $region28
        $region27: #{_smffn_impl.1} parent=23 // pred_region
          %s160 = sand.u32 %s26, 1
          %s161 = scalar_lea.sflag [#allocation3], %s160
          %s162 = sand.u32 %s26, 1
          %s163 = smul.addr %s162, 256
          %s164 = scalar_lea.vmem [#allocation2], %s163
          %s165 = smul.u32 32, %s16
          %167 = vsyncadd %s161, 0
          %s168 = smul.addr %s165, 8
          %s169 = scalar_lea.hbm %s0, %s168
          %s170 = sshll.u32 %s169, 4
          %s171 = int_to_ptr.hbm [resolvable:$true] %s170
          %s172 = sshll.u32 %s164, 4
          %s173 = int_to_ptr.vmem [resolvable:$true] %s172
          %178 = dma.hbm_to_vmem [thread:$0]  %s171, 4096, %s173, %s161, 128, 128, 8
        $region28: #{_smffn_impl.1} parent=23 // pred_fallthru
          _
      $region24: #{_smffn_impl.1} parent=5 // pred_fallthru
        _
      %p179 = scmp.le.s32.totalorder 1, %s16
      %p180 = scmp.lt.s32.totalorder %s16, 3
      %p181 = pnand %p179, %p180
      %p182 = pneg %p181
      // Predicated region
      $region29: #{_smffn_impl.1} parent=5 // pred_check
        _
      $region30: #{_smffn_impl.1} parent=5 // pred_check_branch
        %184 = sbr.rel (%p181) target = $region32
      $region31: #{_smffn_impl.1} parent=5 // pred_region
        %s185 = ssub.s32 %s16, 1
        %s186 = sand.u32 %s29, 1
        %s187 = scalar_lea.sflag [#allocation3], %s186
        %s188 = sand.u32 %s29, 1
        %s189 = smul.addr %s188, 256
        %s190 = scalar_lea.vmem [#allocation2], %s189
        // Predicated region
        $region33: #{_smffn_impl.1} parent=31 // pred_check
          %p191 = pneg %p42
        $region34: #{_smffn_impl.1} parent=31 // pred_check_branch
          %193 = sbr.rel (%p191) target = $region36
        $region35: #{_smffn_impl.1} parent=31 // pred_region
          %195 = dma.done %s187, 4096
        $region36: #{_smffn_impl.1} parent=31 // pred_fallthru
          _
        // Predicated region
        $region37: #{_smffn_impl.1} parent=31 // pred_check
          %p196 = pneg %p63
        $region38: #{_smffn_impl.1} parent=31 // pred_check_branch
          %198 = sbr.rel (%p196) target = $region40
        $region39: #{_smffn_impl.1} parent=31 // pred_region
          %200 = dma.done [#allocation6], 8192
        $region40: #{_smffn_impl.1} parent=31 // pred_fallthru
          _
        // Predicated region
        $region41: #{_smffn_impl.1} parent=31 // pred_check
          %p201 = pneg %p84
        $region42: #{_smffn_impl.1} parent=31 // pred_check_branch
          %203 = sbr.rel (%p201) target = $region44
        $region43: #{_smffn_impl.1} parent=31 // pred_region
          %205 = dma.done [#allocation6], 4096
        $region44: #{_smffn_impl.1} parent=31 // pred_fallthru
          _
        %s206 = sand.u32 %s29, 1
        %s207 = scalar_lea.sflag [#allocation3], %s206
        %s208 = sand.u32 %s29, 1
        %s209 = smul.addr %s208, 256
        %s210 = scalar_lea.vmem [#allocation2], %s209
        %p211 = pneg %p42
        %p212 = pneg %p39
        %p213 = pneg %p63
        %p214 = pneg %p60
        %p215 = pneg %p84
        %p216 = pneg %p81
        %p217 = pneg %p110
        %p218 = pneg %p107
        %s219 = sand.u32 %s97, 1
        %s220 = scalar_lea.sflag [#allocation4], %s219
        %s221 = sand.u32 %s97, 1
        %s222 = smul.addr %s221, 256
        %s223 = scalar_lea.vmem [#allocation8], %s222
        %s224 = smul.u32 32, %s21
        %s225 = smul.u32 32, %s21
        %v226 = vld [vmem:[#allocation5] sm:$0xff]
        %v227 = vld [vmem:[#allocation5 + $0x8] sm:$0xff]
        %v228 = vld [vmem:[#allocation5 + $0x10] sm:$0xff]
        %v229 = vld [vmem:[#allocation5 + $0x18] sm:$0xff]
        %v230 = vld [vmem:[#allocation5 + $0x20] sm:$0xff]
        %v231 = vld [vmem:[#allocation5 + $0x28] sm:$0xff]
        %v232 = vld [vmem:[#allocation5 + $0x30] sm:$0xff]
        %v233 = vld [vmem:[#allocation5 + $0x38] sm:$0xff]
        %v234 = vld [vmem:[#allocation5 + $0x40] sm:$0xff]
        %v235 = vld [vmem:[#allocation5 + $0x48] sm:$0xff]
        %v236 = vld [vmem:[#allocation5 + $0x50] sm:$0xff]
        %v237 = vld [vmem:[#allocation5 + $0x58] sm:$0xff]
        %v238 = vld [vmem:[#allocation5 + $0x60] sm:$0xff]
        %v239 = vld [vmem:[#allocation5 + $0x68] sm:$0xff]
        %v240 = vld [vmem:[#allocation5 + $0x70] sm:$0xff]
        %v241 = vld [vmem:[#allocation5 + $0x78] sm:$0xff]
        %v242 = vld [vmem:[#allocation5 + $0x80] sm:$0xff]
        %v243 = vld [vmem:[#allocation5 + $0x88] sm:$0xff]
        %v244 = vld [vmem:[#allocation5 + $0x90] sm:$0xff]
        %v245 = vld [vmem:[#allocation5 + $0x98] sm:$0xff]
        %v246 = vld [vmem:[#allocation5 + $0xa0] sm:$0xff]
        %v247 = vld [vmem:[#allocation5 + $0xa8] sm:$0xff]
        %v248 = vld [vmem:[#allocation5 + $0xb0] sm:$0xff]
        %v249 = vld [vmem:[#allocation5 + $0xb8] sm:$0xff]
        %v250 = vld [vmem:[#allocation5 + $0xc0] sm:$0xff]
        %v251 = vld [vmem:[#allocation5 + $0xc8] sm:$0xff]
        %v252 = vld [vmem:[#allocation5 + $0xd0] sm:$0xff]
        %v253 = vld [vmem:[#allocation5 + $0xd8] sm:$0xff]
        %v254 = vld [vmem:[#allocation5 + $0xe0] sm:$0xff]
        %v255 = vld [vmem:[#allocation5 + $0xe8] sm:$0xff]
        %v256 = vld [vmem:[#allocation5 + $0xf0] sm:$0xff]
        %v257 = vld [vmem:[#allocation5 + $0xf8] sm:$0xff]
        %v258 = vld [vmem:[#allocation5 + $0x100] sm:$0xff]
        %v259 = vld [vmem:[#allocation5 + $0x108] sm:$0xff]
        %v260 = vld [vmem:[#allocation5 + $0x110] sm:$0xff]
        %v261 = vld [vmem:[#allocation5 + $0x118] sm:$0xff]
        %v262 = vld [vmem:[#allocation5 + $0x120] sm:$0xff]
        %v263 = vld [vmem:[#allocation5 + $0x128] sm:$0xff]
        %v264 = vld [vmem:[#allocation5 + $0x130] sm:$0xff]
        %v265 = vld [vmem:[#allocation5 + $0x138] sm:$0xff]
        %v266 = vld [vmem:[#allocation5 + $0x140] sm:$0xff]
        %v267 = vld [vmem:[#allocation5 + $0x148] sm:$0xff]
        %v268 = vld [vmem:[#allocation5 + $0x150] sm:$0xff]
        %v269 = vld [vmem:[#allocation5 + $0x158] sm:$0xff]
        %v270 = vld [vmem:[#allocation5 + $0x160] sm:$0xff]
        %v271 = vld [vmem:[#allocation5 + $0x168] sm:$0xff]
        %v272 = vld [vmem:[#allocation5 + $0x170] sm:$0xff]
        %v273 = vld [vmem:[#allocation5 + $0x178] sm:$0xff]
        %v274 = vld [vmem:[#allocation5 + $0x180] sm:$0xff]
        %v275 = vld [vmem:[#allocation5 + $0x188] sm:$0xff]
        %v276 = vld [vmem:[#allocation5 + $0x190] sm:$0xff]
        %v277 = vld [vmem:[#allocation5 + $0x198] sm:$0xff]
        %v278 = vld [vmem:[#allocation5 + $0x1a0] sm:$0xff]
        %v279 = vld [vmem:[#allocation5 + $0x1a8] sm:$0xff]
        %v280 = vld [vmem:[#allocation5 + $0x1b0] sm:$0xff]
        %v281 = vld [vmem:[#allocation5 + $0x1b8] sm:$0xff]
        %v282 = vld [vmem:[#allocation5 + $0x1c0] sm:$0xff]
        %v283 = vld [vmem:[#allocation5 + $0x1c8] sm:$0xff]
        %v284 = vld [vmem:[#allocation5 + $0x1d0] sm:$0xff]
        %v285 = vld [vmem:[#allocation5 + $0x1d8] sm:$0xff]
        %v286 = vld [vmem:[#allocation5 + $0x1e0] sm:$0xff]
        %v287 = vld [vmem:[#allocation5 + $0x1e8] sm:$0xff]
        %v288 = vld [vmem:[#allocation5 + $0x1f0] sm:$0xff]
        %v289 = vld [vmem:[#allocation5 + $0x1f8] sm:$0xff]
        %v290 = vld [vmem:[%s190] sm:$0xff]
        %v291 = vld [vmem:[%s190 + $0x8] sm:$0xff]
        %v292 = vld [vmem:[%s190 + $0x10] sm:$0xff]
        %v293 = vld [vmem:[%s190 + $0x18] sm:$0xff]
        %v294 = vld [vmem:[%s190 + $0x20] sm:$0xff]
        %v295 = vld [vmem:[%s190 + $0x28] sm:$0xff]
        %v296 = vld [vmem:[%s190 + $0x30] sm:$0xff]
        %v297 = vld [vmem:[%s190 + $0x38] sm:$0xff]
        %v298 = vld [vmem:[%s190 + $0x40] sm:$0xff]
        %v299 = vld [vmem:[%s190 + $0x48] sm:$0xff]
        %v300 = vld [vmem:[%s190 + $0x50] sm:$0xff]
        %v301 = vld [vmem:[%s190 + $0x58] sm:$0xff]
        %v302 = vld [vmem:[%s190 + $0x60] sm:$0xff]
        %v303 = vld [vmem:[%s190 + $0x68] sm:$0xff]
        %v304 = vld [vmem:[%s190 + $0x70] sm:$0xff]
        %v305 = vld [vmem:[%s190 + $0x78] sm:$0xff]
        %v306 = vld [vmem:[%s190 + $0x80] sm:$0xff]
        %v307 = vld [vmem:[%s190 + $0x88] sm:$0xff]
        %v308 = vld [vmem:[%s190 + $0x90] sm:$0xff]
        %v309 = vld [vmem:[%s190 + $0x98] sm:$0xff]
        %v310 = vld [vmem:[%s190 + $0xa0] sm:$0xff]
        %v311 = vld [vmem:[%s190 + $0xa8] sm:$0xff]
        %v312 = vld [vmem:[%s190 + $0xb0] sm:$0xff]
        %v313 = vld [vmem:[%s190 + $0xb8] sm:$0xff]
        %v314 = vld [vmem:[%s190 + $0xc0] sm:$0xff]
        %v315 = vld [vmem:[%s190 + $0xc8] sm:$0xff]
        %v316 = vld [vmem:[%s190 + $0xd0] sm:$0xff]
        %v317 = vld [vmem:[%s190 + $0xd8] sm:$0xff]
        %v318 = vld [vmem:[%s190 + $0xe0] sm:$0xff]
        %v319 = vld [vmem:[%s190 + $0xe8] sm:$0xff]
        %v320 = vld [vmem:[%s190 + $0xf0] sm:$0xff]
        %v321 = vld [vmem:[%s190 + $0xf8] sm:$0xff]
        %322 = vmatpush.msra.mxu0 %v286
        %323 = vmatpush.msra.mxu0 %v282
        %324 = vmatpush.msra.mxu0 %v278
        %325 = vmatpush.msra.mxu0 %v274
        %326 = vmatpush.msra.mxu0 %v270
        %327 = vmatpush.msra.mxu0 %v266
        %328 = vmatpush.msra.mxu0 %v262
        %329 = vmatpush.msra.mxu0 %v258
        %330 = vmatpush.msra.mxu0 %v254
        %331 = vmatpush.msra.mxu0 %v250
        %332 = vmatpush.msra.mxu0 %v246
        %333 = vmatpush.msra.mxu0 %v242
        %334 = vmatpush.msra.mxu0 %v238
        %335 = vmatpush.msra.mxu0 %v234
        %336 = vmatpush.msra.mxu0 %v230
        %337 = vmatpush.msra.mxu0 %v226
        %338 = vmatmul.f32.gmra.mxu0 %v290
        %v339 = vpop.f32.mrf.mxu0
        %v340 = vadd.f32 0.0, %v339
        %341 = vmatmul.f32.gmra.mxu0 %v291
        %v342 = vpop.f32.mrf.mxu0
        %v343 = vadd.f32 0.0, %v342
        %344 = vmatmul.f32.gmra.mxu0 %v292
        %v345 = vpop.f32.mrf.mxu0
        %v346 = vadd.f32 0.0, %v345
        %347 = vmatmul.f32.gmra.mxu0 %v293
        %v348 = vpop.f32.mrf.mxu0
        %v349 = vadd.f32 0.0, %v348
        %350 = vmatmul.f32.gmra.mxu0 %v294
        %v351 = vpop.f32.mrf.mxu0
        %v352 = vadd.f32 0.0, %v351
        %353 = vmatmul.f32.gmra.mxu0 %v295
        %v354 = vpop.f32.mrf.mxu0
        %v355 = vadd.f32 0.0, %v354
        %356 = vmatmul.f32.gmra.mxu0 %v296
        %v357 = vpop.f32.mrf.mxu0
        %v358 = vadd.f32 0.0, %v357
        %359 = vmatmul.f32.gmra.mxu0 %v297
        %v360 = vpop.f32.mrf.mxu0
        %v361 = vadd.f32 0.0, %v360
        %362 = vmatmul.f32.gmra.mxu0 %v298
        %v363 = vpop.f32.mrf.mxu0
        %v364 = vadd.f32 0.0, %v363
        %365 = vmatmul.f32.gmra.mxu0 %v299
        %v366 = vpop.f32.mrf.mxu0
        %v367 = vadd.f32 0.0, %v366
        %368 = vmatmul.f32.gmra.mxu0 %v300
        %v369 = vpop.f32.mrf.mxu0
        %v370 = vadd.f32 0.0, %v369
        %371 = vmatmul.f32.gmra.mxu0 %v301
        %v372 = vpop.f32.mrf.mxu0
        %v373 = vadd.f32 0.0, %v372
        %374 = vmatmul.f32.gmra.mxu0 %v302
        %v375 = vpop.f32.mrf.mxu0
        %v376 = vadd.f32 0.0, %v375
        %377 = vmatmul.f32.gmra.mxu0 %v303
        %v378 = vpop.f32.mrf.mxu0
        %v379 = vadd.f32 0.0, %v378
        %380 = vmatmul.f32.gmra.mxu0 %v304
        %v381 = vpop.f32.mrf.mxu0
        %v382 = vadd.f32 0.0, %v381
        %383 = vmatmul.f32.gmra.mxu0 %v305
        %v384 = vpop.f32.mrf.mxu0
        %v385 = vadd.f32 0.0, %v384
        %386 = vmatmul.f32.gmra.mxu0 %v306
        %v387 = vpop.f32.mrf.mxu0
        %v388 = vadd.f32 0.0, %v387
        %389 = vmatmul.f32.gmra.mxu0 %v307
        %v390 = vpop.f32.mrf.mxu0
        %v391 = vadd.f32 0.0, %v390
        %392 = vmatmul.f32.gmra.mxu0 %v308
        %v393 = vpop.f32.mrf.mxu0
        %v394 = vadd.f32 0.0, %v393
        %395 = vmatmul.f32.gmra.mxu0 %v309
        %v396 = vpop.f32.mrf.mxu0
        %v397 = vadd.f32 0.0, %v396
        %398 = vmatmul.f32.gmra.mxu0 %v310
        %v399 = vpop.f32.mrf.mxu0
        %v400 = vadd.f32 0.0, %v399
        %401 = vmatmul.f32.gmra.mxu0 %v311
        %v402 = vpop.f32.mrf.mxu0
        %v403 = vadd.f32 0.0, %v402
        %404 = vmatmul.f32.gmra.mxu0 %v312
        %v405 = vpop.f32.mrf.mxu0
        %v406 = vadd.f32 0.0, %v405
        %407 = vmatmul.f32.gmra.mxu0 %v313
        %v408 = vpop.f32.mrf.mxu0
        %v409 = vadd.f32 0.0, %v408
        %410 = vmatmul.f32.gmra.mxu0 %v314
        %v411 = vpop.f32.mrf.mxu0
        %v412 = vadd.f32 0.0, %v411
        %413 = vmatmul.f32.gmra.mxu0 %v315
        %v414 = vpop.f32.mrf.mxu0
        %v415 = vadd.f32 0.0, %v414
        %416 = vmatmul.f32.gmra.mxu0 %v316
        %v417 = vpop.f32.mrf.mxu0
        %v418 = vadd.f32 0.0, %v417
        %419 = vmatmul.f32.gmra.mxu0 %v317
        %v420 = vpop.f32.mrf.mxu0
        %v421 = vadd.f32 0.0, %v420
        %422 = vmatmul.f32.gmra.mxu0 %v318
        %v423 = vpop.f32.mrf.mxu0
        %v424 = vadd.f32 0.0, %v423
        %425 = vmatmul.f32.gmra.mxu0 %v319
        %v426 = vpop.f32.mrf.mxu0
        %v427 = vadd.f32 0.0, %v426
        %428 = vmatmul.f32.gmra.mxu0 %v320
        %v429 = vpop.f32.mrf.mxu0
        %v430 = vadd.f32 0.0, %v429
        %431 = vmatmul.f32.gmra.mxu0 %v321
        %v432 = vpop.f32.mrf.mxu0
        %v433 = vadd.f32 0.0, %v432
        %434 = vdwg.mxu0
        %435 = vmatpush.msra.mxu0 %v287
        %436 = vmatpush.msra.mxu0 %v283
        %437 = vmatpush.msra.mxu0 %v279
        %438 = vmatpush.msra.mxu0 %v275
        %439 = vmatpush.msra.mxu0 %v271
        %440 = vmatpush.msra.mxu0 %v267
        %441 = vmatpush.msra.mxu0 %v263
        %442 = vmatpush.msra.mxu0 %v259
        %443 = vmatpush.msra.mxu0 %v255
        %444 = vmatpush.msra.mxu0 %v251
        %445 = vmatpush.msra.mxu0 %v247
        %446 = vmatpush.msra.mxu0 %v243
        %447 = vmatpush.msra.mxu0 %v239
        %448 = vmatpush.msra.mxu0 %v235
        %449 = vmatpush.msra.mxu0 %v231
        %450 = vmatpush.msra.mxu0 %v227
        %451 = vmatmul.f32.gmra.mxu0 %v290
        %v452 = vpop.f32.mrf.mxu0
        %v453 = vadd.f32 0.0, %v452
        %454 = vmatmul.f32.gmra.mxu0 %v291
        %v455 = vpop.f32.mrf.mxu0
        %v456 = vadd.f32 0.0, %v455
        %457 = vmatmul.f32.gmra.mxu0 %v292
        %v458 = vpop.f32.mrf.mxu0
        %v459 = vadd.f32 0.0, %v458
        %460 = vmatmul.f32.gmra.mxu0 %v293
        %v461 = vpop.f32.mrf.mxu0
        %v462 = vadd.f32 0.0, %v461
        %463 = vmatmul.f32.gmra.mxu0 %v294
        %v464 = vpop.f32.mrf.mxu0
        %v465 = vadd.f32 0.0, %v464
        %466 = vmatmul.f32.gmra.mxu0 %v295
        %v467 = vpop.f32.mrf.mxu0
        %v468 = vadd.f32 0.0, %v467
        %469 = vmatmul.f32.gmra.mxu0 %v296
        %v470 = vpop.f32.mrf.mxu0
        %v471 = vadd.f32 0.0, %v470
        %472 = vmatmul.f32.gmra.mxu0 %v297
        %v473 = vpop.f32.mrf.mxu0
        %v474 = vadd.f32 0.0, %v473
        %475 = vmatmul.f32.gmra.mxu0 %v298
        %v476 = vpop.f32.mrf.mxu0
        %v477 = vadd.f32 0.0, %v476
        %478 = vmatmul.f32.gmra.mxu0 %v299
        %v479 = vpop.f32.mrf.mxu0
        %v480 = vadd.f32 0.0, %v479
        %481 = vmatmul.f32.gmra.mxu0 %v300
        %v482 = vpop.f32.mrf.mxu0
        %v483 = vadd.f32 0.0, %v482
        %484 = vmatmul.f32.gmra.mxu0 %v301
        %v485 = vpop.f32.mrf.mxu0
        %v486 = vadd.f32 0.0, %v485
        %487 = vmatmul.f32.gmra.mxu0 %v302
        %v488 = vpop.f32.mrf.mxu0
        %v489 = vadd.f32 0.0, %v488
        %490 = vmatmul.f32.gmra.mxu0 %v303
        %v491 = vpop.f32.mrf.mxu0
        %v492 = vadd.f32 0.0, %v491
        %493 = vmatmul.f32.gmra.mxu0 %v304
        %v494 = vpop.f32.mrf.mxu0
        %v495 = vadd.f32 0.0, %v494
        %496 = vmatmul.f32.gmra.mxu0 %v305
        %v497 = vpop.f32.mrf.mxu0
        %v498 = vadd.f32 0.0, %v497
        %499 = vmatmul.f32.gmra.mxu0 %v306
        %v500 = vpop.f32.mrf.mxu0
        %v501 = vadd.f32 0.0, %v500
        %502 = vmatmul.f32.gmra.mxu0 %v307
        %v503 = vpop.f32.mrf.mxu0
        %v504 = vadd.f32 0.0, %v503
        %505 = vmatmul.f32.gmra.mxu0 %v308
        %v506 = vpop.f32.mrf.mxu0
        %v507 = vadd.f32 0.0, %v506
        %508 = vmatmul.f32.gmra.mxu0 %v309
        %v509 = vpop.f32.mrf.mxu0
        %v510 = vadd.f32 0.0, %v509
        %511 = vmatmul.f32.gmra.mxu0 %v310
        %v512 = vpop.f32.mrf.mxu0
        %v513 = vadd.f32 0.0, %v512
        %514 = vmatmul.f32.gmra.mxu0 %v311
        %v515 = vpop.f32.mrf.mxu0
        %v516 = vadd.f32 0.0, %v515
        %517 = vmatmul.f32.gmra.mxu0 %v312
        %v518 = vpop.f32.mrf.mxu0
        %v519 = vadd.f32 0.0, %v518
        %520 = vmatmul.f32.gmra.mxu0 %v313
        %v521 = vpop.f32.mrf.mxu0
        %v522 = vadd.f32 0.0, %v521
        %523 = vmatmul.f32.gmra.mxu0 %v314
        %v524 = vpop.f32.mrf.mxu0
        %v525 = vadd.f32 0.0, %v524
        %526 = vmatmul.f32.gmra.mxu0 %v315
        %v527 = vpop.f32.mrf.mxu0
        %v528 = vadd.f32 0.0, %v527
        %529 = vmatmul.f32.gmra.mxu0 %v316
        %v530 = vpop.f32.mrf.mxu0
        %v531 = vadd.f32 0.0, %v530
        %532 = vmatmul.f32.gmra.mxu0 %v317
        %v533 = vpop.f32.mrf.mxu0
        %v534 = vadd.f32 0.0, %v533
        %535 = vmatmul.f32.gmra.mxu0 %v318
        %v536 = vpop.f32.mrf.mxu0
        %v537 = vadd.f32 0.0, %v536
        %538 = vmatmul.f32.gmra.mxu0 %v319
        %v539 = vpop.f32.mrf.mxu0
        %v540 = vadd.f32 0.0, %v539
        %541 = vmatmul.f32.gmra.mxu0 %v320
        %v542 = vpop.f32.mrf.mxu0
        %v543 = vadd.f32 0.0, %v542
        %544 = vmatmul.f32.gmra.mxu0 %v321
        %v545 = vpop.f32.mrf.mxu0
        %v546 = vadd.f32 0.0, %v545
        %547 = vdwg.mxu0
        %548 = vmatpush.msra.mxu0 %v288
        %549 = vmatpush.msra.mxu0 %v284
        %550 = vmatpush.msra.mxu0 %v280
        %551 = vmatpush.msra.mxu0 %v276
        %552 = vmatpush.msra.mxu0 %v272
        %553 = vmatpush.msra.mxu0 %v268
        %554 = vmatpush.msra.mxu0 %v264
        %555 = vmatpush.msra.mxu0 %v260
        %556 = vmatpush.msra.mxu0 %v256
        %557 = vmatpush.msra.mxu0 %v252
        %558 = vmatpush.msra.mxu0 %v248
        %559 = vmatpush.msra.mxu0 %v244
        %560 = vmatpush.msra.mxu0 %v240
        %561 = vmatpush.msra.mxu0 %v236
        %562 = vmatpush.msra.mxu0 %v232
        %563 = vmatpush.msra.mxu0 %v228
        %564 = vmatmul.f32.gmra.mxu0 %v290
        %v565 = vpop.f32.mrf.mxu0
        %v566 = vadd.f32 0.0, %v565
        %567 = vmatmul.f32.gmra.mxu0 %v291
        %v568 = vpop.f32.mrf.mxu0
        %v569 = vadd.f32 0.0, %v568
        %570 = vmatmul.f32.gmra.mxu0 %v292
        %v571 = vpop.f32.mrf.mxu0
        %v572 = vadd.f32 0.0, %v571
        %573 = vmatmul.f32.gmra.mxu0 %v293
        %v574 = vpop.f32.mrf.mxu0
        %v575 = vadd.f32 0.0, %v574
        %576 = vmatmul.f32.gmra.mxu0 %v294
        %v577 = vpop.f32.mrf.mxu0
        %v578 = vadd.f32 0.0, %v577
        %579 = vmatmul.f32.gmra.mxu0 %v295
        %v580 = vpop.f32.mrf.mxu0
        %v581 = vadd.f32 0.0, %v580
        %582 = vmatmul.f32.gmra.mxu0 %v296
        %v583 = vpop.f32.mrf.mxu0
        %v584 = vadd.f32 0.0, %v583
        %585 = vmatmul.f32.gmra.mxu0 %v297
        %v586 = vpop.f32.mrf.mxu0
        %v587 = vadd.f32 0.0, %v586
        %588 = vmatmul.f32.gmra.mxu0 %v298
        %v589 = vpop.f32.mrf.mxu0
        %v590 = vadd.f32 0.0, %v589
        %591 = vmatmul.f32.gmra.mxu0 %v299
        %v592 = vpop.f32.mrf.mxu0
        %v593 = vadd.f32 0.0, %v592
        %594 = vmatmul.f32.gmra.mxu0 %v300
        %v595 = vpop.f32.mrf.mxu0
        %v596 = vadd.f32 0.0, %v595
        %597 = vmatmul.f32.gmra.mxu0 %v301
        %v598 = vpop.f32.mrf.mxu0
        %v599 = vadd.f32 0.0, %v598
        %600 = vmatmul.f32.gmra.mxu0 %v302
        %v601 = vpop.f32.mrf.mxu0
        %v602 = vadd.f32 0.0, %v601
        %603 = vmatmul.f32.gmra.mxu0 %v303
        %v604 = vpop.f32.mrf.mxu0
        %v605 = vadd.f32 0.0, %v604
        %606 = vmatmul.f32.gmra.mxu0 %v304
        %v607 = vpop.f32.mrf.mxu0
        %v608 = vadd.f32 0.0, %v607
        %609 = vmatmul.f32.gmra.mxu0 %v305
        %v610 = vpop.f32.mrf.mxu0
        %v611 = vadd.f32 0.0, %v610
        %612 = vmatmul.f32.gmra.mxu0 %v306
        %v613 = vpop.f32.mrf.mxu0
        %v614 = vadd.f32 0.0, %v613
        %615 = vmatmul.f32.gmra.mxu0 %v307
        %v616 = vpop.f32.mrf.mxu0
        %v617 = vadd.f32 0.0, %v616
        %618 = vmatmul.f32.gmra.mxu0 %v308
        %v619 = vpop.f32.mrf.mxu0
        %v620 = vadd.f32 0.0, %v619
        %621 = vmatmul.f32.gmra.mxu0 %v309
        %v622 = vpop.f32.mrf.mxu0
        %v623 = vadd.f32 0.0, %v622
        %624 = vmatmul.f32.gmra.mxu0 %v310
        %v625 = vpop.f32.mrf.mxu0
        %v626 = vadd.f32 0.0, %v625
        %627 = vmatmul.f32.gmra.mxu0 %v311
        %v628 = vpop.f32.mrf.mxu0
        %v629 = vadd.f32 0.0, %v628
        %630 = vmatmul.f32.gmra.mxu0 %v312
        %v631 = vpop.f32.mrf.mxu0
        %v632 = vadd.f32 0.0, %v631
        %633 = vmatmul.f32.gmra.mxu0 %v313
        %v634 = vpop.f32.mrf.mxu0
        %v635 = vadd.f32 0.0, %v634
        %636 = vmatmul.f32.gmra.mxu0 %v314
        %v637 = vpop.f32.mrf.mxu0
        %v638 = vadd.f32 0.0, %v637
        %639 = vmatmul.f32.gmra.mxu0 %v315
        %v640 = vpop.f32.mrf.mxu0
        %v641 = vadd.f32 0.0, %v640
        %642 = vmatmul.f32.gmra.mxu0 %v316
        %v643 = vpop.f32.mrf.mxu0
        %v644 = vadd.f32 0.0, %v643
        %645 = vmatmul.f32.gmra.mxu0 %v317
        %v646 = vpop.f32.mrf.mxu0
        %v647 = vadd.f32 0.0, %v646
        %648 = vmatmul.f32.gmra.mxu0 %v318
        %v649 = vpop.f32.mrf.mxu0
        %v650 = vadd.f32 0.0, %v649
        %651 = vmatmul.f32.gmra.mxu0 %v319
        %v652 = vpop.f32.mrf.mxu0
        %v653 = vadd.f32 0.0, %v652
        %654 = vmatmul.f32.gmra.mxu0 %v320
        %v655 = vpop.f32.mrf.mxu0
        %v656 = vadd.f32 0.0, %v655
        %657 = vmatmul.f32.gmra.mxu0 %v321
        %v658 = vpop.f32.mrf.mxu0
        %v659 = vadd.f32 0.0, %v658
        %660 = vdwg.mxu0
        %661 = vmatpush.msra.mxu0 %v289
        %662 = vmatpush.msra.mxu0 %v285
        %663 = vmatpush.msra.mxu0 %v281
        %664 = vmatpush.msra.mxu0 %v277
        %665 = vmatpush.msra.mxu0 %v273
        %666 = vmatpush.msra.mxu0 %v269
        %667 = vmatpush.msra.mxu0 %v265
        %668 = vmatpush.msra.mxu0 %v261
        %669 = vmatpush.msra.mxu0 %v257
        %670 = vmatpush.msra.mxu0 %v253
        %671 = vmatpush.msra.mxu0 %v249
        %672 = vmatpush.msra.mxu0 %v245
        %673 = vmatpush.msra.mxu0 %v241
        %674 = vmatpush.msra.mxu0 %v237
        %675 = vmatpush.msra.mxu0 %v233
        %676 = vmatpush.msra.mxu0 %v229
        %677 = vmatmul.f32.gmra.mxu0 %v290
        %v678 = vpop.f32.mrf.mxu0
        %v679 = vadd.f32 0.0, %v678
        %680 = vmatmul.f32.gmra.mxu0 %v291
        %v681 = vpop.f32.mrf.mxu0
        %v682 = vadd.f32 0.0, %v681
        %683 = vmatmul.f32.gmra.mxu0 %v292
        %v684 = vpop.f32.mrf.mxu0
        %v685 = vadd.f32 0.0, %v684
        %686 = vmatmul.f32.gmra.mxu0 %v293
        %v687 = vpop.f32.mrf.mxu0
        %v688 = vadd.f32 0.0, %v687
        %689 = vmatmul.f32.gmra.mxu0 %v294
        %v690 = vpop.f32.mrf.mxu0
        %v691 = vadd.f32 0.0, %v690
        %692 = vmatmul.f32.gmra.mxu0 %v295
        %v693 = vpop.f32.mrf.mxu0
        %v694 = vadd.f32 0.0, %v693
        %695 = vmatmul.f32.gmra.mxu0 %v296
        %v696 = vpop.f32.mrf.mxu0
        %v697 = vadd.f32 0.0, %v696
        %698 = vmatmul.f32.gmra.mxu0 %v297
        %v699 = vpop.f32.mrf.mxu0
        %v700 = vadd.f32 0.0, %v699
        %701 = vmatmul.f32.gmra.mxu0 %v298
        %v702 = vpop.f32.mrf.mxu0
        %v703 = vadd.f32 0.0, %v702
        %704 = vmatmul.f32.gmra.mxu0 %v299
        %v705 = vpop.f32.mrf.mxu0
        %v706 = vadd.f32 0.0, %v705
        %707 = vmatmul.f32.gmra.mxu0 %v300
        %v708 = vpop.f32.mrf.mxu0
        %v709 = vadd.f32 0.0, %v708
        %710 = vmatmul.f32.gmra.mxu0 %v301
        %v711 = vpop.f32.mrf.mxu0
        %v712 = vadd.f32 0.0, %v711
        %713 = vmatmul.f32.gmra.mxu0 %v302
        %v714 = vpop.f32.mrf.mxu0
        %v715 = vadd.f32 0.0, %v714
        %716 = vmatmul.f32.gmra.mxu0 %v303
        %v717 = vpop.f32.mrf.mxu0
        %v718 = vadd.f32 0.0, %v717
        %719 = vmatmul.f32.gmra.mxu0 %v304
        %v720 = vpop.f32.mrf.mxu0
        %v721 = vadd.f32 0.0, %v720
        %722 = vmatmul.f32.gmra.mxu0 %v305
        %v723 = vpop.f32.mrf.mxu0
        %v724 = vadd.f32 0.0, %v723
        %725 = vmatmul.f32.gmra.mxu0 %v306
        %v726 = vpop.f32.mrf.mxu0
        %v727 = vadd.f32 0.0, %v726
        %728 = vmatmul.f32.gmra.mxu0 %v307
        %v729 = vpop.f32.mrf.mxu0
        %v730 = vadd.f32 0.0, %v729
        %731 = vmatmul.f32.gmra.mxu0 %v308
        %v732 = vpop.f32.mrf.mxu0
        %v733 = vadd.f32 0.0, %v732
        %734 = vmatmul.f32.gmra.mxu0 %v309
        %v735 = vpop.f32.mrf.mxu0
        %v736 = vadd.f32 0.0, %v735
        %737 = vmatmul.f32.gmra.mxu0 %v310
        %v738 = vpop.f32.mrf.mxu0
        %v739 = vadd.f32 0.0, %v738
        %740 = vmatmul.f32.gmra.mxu0 %v311
        %v741 = vpop.f32.mrf.mxu0
        %v742 = vadd.f32 0.0, %v741
        %743 = vmatmul.f32.gmra.mxu0 %v312
        %v744 = vpop.f32.mrf.mxu0
        %v745 = vadd.f32 0.0, %v744
        %746 = vmatmul.f32.gmra.mxu0 %v313
        %v747 = vpop.f32.mrf.mxu0
        %v748 = vadd.f32 0.0, %v747
        %749 = vmatmul.f32.gmra.mxu0 %v314
        %v750 = vpop.f32.mrf.mxu0
        %v751 = vadd.f32 0.0, %v750
        %752 = vmatmul.f32.gmra.mxu0 %v315
        %v753 = vpop.f32.mrf.mxu0
        %v754 = vadd.f32 0.0, %v753
        %755 = vmatmul.f32.gmra.mxu0 %v316
        %v756 = vpop.f32.mrf.mxu0
        %v757 = vadd.f32 0.0, %v756
        %758 = vmatmul.f32.gmra.mxu0 %v317
        %v759 = vpop.f32.mrf.mxu0
        %v760 = vadd.f32 0.0, %v759
        %761 = vmatmul.f32.gmra.mxu0 %v318
        %v762 = vpop.f32.mrf.mxu0
        %v763 = vadd.f32 0.0, %v762
        %764 = vmatmul.f32.gmra.mxu0 %v319
        %v765 = vpop.f32.mrf.mxu0
        %v766 = vadd.f32 0.0, %v765
        %767 = vmatmul.f32.gmra.mxu0 %v320
        %v768 = vpop.f32.mrf.mxu0
        %v769 = vadd.f32 0.0, %v768
        %770 = vmatmul.f32.gmra.mxu0 %v321
        %v771 = vpop.f32.mrf.mxu0
        %v772 = vadd.f32 0.0, %v771
        %773 = vdwg.mxu0
        %v774 = vmul.f32 %v340, 0.5
        %v775 = vmul.f32 %v453, 0.5
        %v776 = vmul.f32 %v343, 0.5
        %v777 = vmul.f32 %v456, 0.5
        %v778 = vmul.f32 %v346, 0.5
        %v779 = vmul.f32 %v459, 0.5
        %v780 = vmul.f32 %v349, 0.5
        %v781 = vmul.f32 %v462, 0.5
        %v782 = vmul.f32 %v352, 0.5
        %v783 = vmul.f32 %v465, 0.5
        %v784 = vmul.f32 %v355, 0.5
        %v785 = vmul.f32 %v468, 0.5
        %v786 = vmul.f32 %v358, 0.5
        %v787 = vmul.f32 %v471, 0.5
        %v788 = vmul.f32 %v361, 0.5
        %v789 = vmul.f32 %v474, 0.5
        %v790 = vmul.f32 %v364, 0.5
        %v791 = vmul.f32 %v477, 0.5
        %v792 = vmul.f32 %v367, 0.5
        %v793 = vmul.f32 %v480, 0.5
        %v794 = vmul.f32 %v370, 0.5
        %v795 = vmul.f32 %v483, 0.5
        %v796 = vmul.f32 %v373, 0.5
        %v797 = vmul.f32 %v486, 0.5
        %v798 = vmul.f32 %v376, 0.5
        %v799 = vmul.f32 %v489, 0.5
        %v800 = vmul.f32 %v379, 0.5
        %v801 = vmul.f32 %v492, 0.5
        %v802 = vmul.f32 %v382, 0.5
        %v803 = vmul.f32 %v495, 0.5
        %v804 = vmul.f32 %v385, 0.5
        %v805 = vmul.f32 %v498, 0.5
        %v806 = vmul.f32 %v388, 0.5
        %v807 = vmul.f32 %v501, 0.5
        %v808 = vmul.f32 %v391, 0.5
        %v809 = vmul.f32 %v504, 0.5
        %v810 = vmul.f32 %v394, 0.5
        %v811 = vmul.f32 %v507, 0.5
        %v812 = vmul.f32 %v397, 0.5
        %v813 = vmul.f32 %v510, 0.5
        %v814 = vmul.f32 %v400, 0.5
        %v815 = vmul.f32 %v513, 0.5
        %v816 = vmul.f32 %v403, 0.5
        %v817 = vmul.f32 %v516, 0.5
        %v818 = vmul.f32 %v406, 0.5
        %v819 = vmul.f32 %v519, 0.5
        %v820 = vmul.f32 %v409, 0.5
        %v821 = vmul.f32 %v522, 0.5
        %v822 = vmul.f32 %v412, 0.5
        %v823 = vmul.f32 %v525, 0.5
        %v824 = vmul.f32 %v415, 0.5
        %v825 = vmul.f32 %v528, 0.5
        %v826 = vmul.f32 %v418, 0.5
        %v827 = vmul.f32 %v531, 0.5
        %v828 = vmul.f32 %v421, 0.5
        %v829 = vmul.f32 %v534, 0.5
        %v830 = vmul.f32 %v424, 0.5
        %v831 = vmul.f32 %v537, 0.5
        %v832 = vmul.f32 %v427, 0.5
        %v833 = vmul.f32 %v540, 0.5
        %v834 = vmul.f32 %v430, 0.5
        %v835 = vmul.f32 %v543, 0.5
        %v836 = vmul.f32 %v433, 0.5
        %v837 = vmul.f32 %v546, 0.5
        %v838 = vmul.f32 %v340, 0.70710677
        %v839 = vmul.f32 %v453, 0.70710677
        %v840 = vmul.f32 %v343, 0.70710677
        %v841 = vmul.f32 %v456, 0.70710677
        %v842 = vmul.f32 %v346, 0.70710677
        %v843 = vmul.f32 %v459, 0.70710677
        %v844 = vmul.f32 %v349, 0.70710677
        %v845 = vmul.f32 %v462, 0.70710677
        %v846 = vmul.f32 %v352, 0.70710677
        %v847 = vmul.f32 %v465, 0.70710677
        %v848 = vmul.f32 %v355, 0.70710677
        %v849 = vmul.f32 %v468, 0.70710677
        %v850 = vmul.f32 %v358, 0.70710677
        %v851 = vmul.f32 %v471, 0.70710677
        %v852 = vmul.f32 %v361, 0.70710677
        %v853 = vmul.f32 %v474, 0.70710677
        %v854 = vmul.f32 %v364, 0.70710677
        %v855 = vmul.f32 %v477, 0.70710677
        %v856 = vmul.f32 %v367, 0.70710677
        %v857 = vmul.f32 %v480, 0.70710677
        %v858 = vmul.f32 %v370, 0.70710677
        %v859 = vmul.f32 %v483, 0.70710677
        %v860 = vmul.f32 %v373, 0.70710677
        %v861 = vmul.f32 %v486, 0.70710677
        %v862 = vmul.f32 %v376, 0.70710677
        %v863 = vmul.f32 %v489, 0.70710677
        %v864 = vmul.f32 %v379, 0.70710677
        %v865 = vmul.f32 %v492, 0.70710677
        %v866 = vmul.f32 %v382, 0.70710677
        %v867 = vmul.f32 %v495, 0.70710677
        %v868 = vmul.f32 %v385, 0.70710677
        %v869 = vmul.f32 %v498, 0.70710677
        %v870 = vmul.f32 %v388, 0.70710677
        %v871 = vmul.f32 %v501, 0.70710677
        %v872 = vmul.f32 %v391, 0.70710677
        %v873 = vmul.f32 %v504, 0.70710677
        %v874 = vmul.f32 %v394, 0.70710677
        %v875 = vmul.f32 %v507, 0.70710677
        %v876 = vmul.f32 %v397, 0.70710677
        %v877 = vmul.f32 %v510, 0.70710677
        %v878 = vmul.f32 %v400, 0.70710677
        %v879 = vmul.f32 %v513, 0.70710677
        %v880 = vmul.f32 %v403, 0.70710677
        %v881 = vmul.f32 %v516, 0.70710677
        %v882 = vmul.f32 %v406, 0.70710677
        %v883 = vmul.f32 %v519, 0.70710677
        %v884 = vmul.f32 %v409, 0.70710677
        %v885 = vmul.f32 %v522, 0.70710677
        %v886 = vmul.f32 %v412, 0.70710677
        %v887 = vmul.f32 %v525, 0.70710677
        %v888 = vmul.f32 %v415, 0.70710677
        %v889 = vmul.f32 %v528, 0.70710677
        %v890 = vmul.f32 %v418, 0.70710677
        %v891 = vmul.f32 %v531, 0.70710677
        %v892 = vmul.f32 %v421, 0.70710677
        %v893 = vmul.f32 %v534, 0.70710677
        %v894 = vmul.f32 %v424, 0.70710677
        %v895 = vmul.f32 %v537, 0.70710677
        %v896 = vmul.f32 %v427, 0.70710677
        %v897 = vmul.f32 %v540, 0.70710677
        %v898 = vmul.f32 %v430, 0.70710677
        %v899 = vmul.f32 %v543, 0.70710677
        %v900 = vmul.f32 %v433, 0.70710677
        %v901 = vmul.f32 %v546, 0.70710677
        %v902 = vmul.f32 %v838, %v838
        %v903 = vmin.f32 16.0, %v902
        %v904 = vmul.f32 %v903, 2.1237322e-06
        %v905 = vadd.f32 %v904, 0.00028619796
        %v906 = vmul.f32 %v903, %v905
        %v907 = vadd.f32 %v906, 0.0036580483
        %v908 = vmul.f32 %v903, %v907
        %v909 = vadd.f32 %v908, 0.05243302
        %v910 = vmul.f32 %v903, %v909
        %v911 = vadd.f32 %v910, 0.18741608
        %v912 = vmul.f32 %v903, %v911
        %v913 = vadd.f32 %v912, 1.1283791
        %v914 = vmul.f32 %v838, %v913
        %v915 = vmul.f32 %v903, 3.8918573e-05
        %v916 = vadd.f32 %v915, 0.001143296
        %v917 = vmul.f32 %v903, %v916
        %v918 = vadd.f32 %v917, 0.014752088
        %v919 = vmul.f32 %v903, %v918
        %v920 = vadd.f32 %v919, 0.112945676
        %v921 = vmul.f32 %v903, %v920
        %v922 = vadd.f32 %v921, 0.4994258
        %v923 = vmul.f32 %v903, %v922
        %v924 = vadd.f32 %v923, 1.0
        %v925 = vrcp.pop %v924
        %v926 = vmul.f32 %v924, %v925
        %v927 = vsub.f32 1.0, %v926
        %v928 = vmul.f32 %v925, %v927
        %v929 = vadd.f32 %v925, %v928
        %vm930 = vweird.f32 %v924
        %vm931 = vweird.f32 %v925
        %vm932 = vmor %vm930, %vm931
        %v933 = vsel %vm932, %v925, %v929
        %v934 = vand.u32 2147483647, %v924
        %vm935 = vcmp.eq.f32.partialorder %v934, 8.507059e+37
        %v936 = vand.u32 %v924, 2147483648
        %v937 = vor.u32 1.1754944e-38, %v936
        %v938 = vsel %vm935, %v937, %v933
        %v939 = vmul.f32 %v914, %v938
        %v940 = vmin.f32 %v939, 1.0
        %v941 = vmax.f32 %v940, -1.0
        %v942 = vmul.f32 %v839, %v839
        %v943 = vmin.f32 16.0, %v942
        %v944 = vmul.f32 %v943, 2.1237322e-06
        %v945 = vadd.f32 %v944, 0.00028619796
        %v946 = vmul.f32 %v943, %v945
        %v947 = vadd.f32 %v946, 0.0036580483
        %v948 = vmul.f32 %v943, %v947
        %v949 = vadd.f32 %v948, 0.05243302
        %v950 = vmul.f32 %v943, %v949
        %v951 = vadd.f32 %v950, 0.18741608
        %v952 = vmul.f32 %v943, %v951
        %v953 = vadd.f32 %v952, 1.1283791
        %v954 = vmul.f32 %v839, %v953
        %v955 = vmul.f32 %v943, 3.8918573e-05
        %v956 = vadd.f32 %v955, 0.001143296
        %v957 = vmul.f32 %v943, %v956
        %v958 = vadd.f32 %v957, 0.014752088
        %v959 = vmul.f32 %v943, %v958
        %v960 = vadd.f32 %v959, 0.112945676
        %v961 = vmul.f32 %v943, %v960
        %v962 = vadd.f32 %v961, 0.4994258
        %v963 = vmul.f32 %v943, %v962
        %v964 = vadd.f32 %v963, 1.0
        %v965 = vrcp.pop %v964
        %v966 = vmul.f32 %v964, %v965
        %v967 = vsub.f32 1.0, %v966
        %v968 = vmul.f32 %v965, %v967
        %v969 = vadd.f32 %v965, %v968
        %vm970 = vweird.f32 %v964
        %vm971 = vweird.f32 %v965
        %vm972 = vmor %vm970, %vm971
        %v973 = vsel %vm972, %v965, %v969
        %v974 = vand.u32 2147483647, %v964
        %vm975 = vcmp.eq.f32.partialorder %v974, 8.507059e+37
        %v976 = vand.u32 %v964, 2147483648
        %v977 = vor.u32 1.1754944e-38, %v976
        %v978 = vsel %vm975, %v977, %v973
        %v979 = vmul.f32 %v954, %v978
        %v980 = vmin.f32 %v979, 1.0
        %v981 = vmax.f32 %v980, -1.0
        %v982 = vmul.f32 %v840, %v840
        %v983 = vmin.f32 16.0, %v982
        %v984 = vmul.f32 %v983, 2.1237322e-06
        %v985 = vadd.f32 %v984, 0.00028619796
        %v986 = vmul.f32 %v983, %v985
        %v987 = vadd.f32 %v986, 0.0036580483
        %v988 = vmul.f32 %v983, %v987
        %v989 = vadd.f32 %v988, 0.05243302
        %v990 = vmul.f32 %v983, %v989
        %v991 = vadd.f32 %v990, 0.18741608
        %v992 = vmul.f32 %v983, %v991
        %v993 = vadd.f32 %v992, 1.1283791
        %v994 = vmul.f32 %v840, %v993
        %v995 = vmul.f32 %v983, 3.8918573e-05
        %v996 = vadd.f32 %v995, 0.001143296
        %v997 = vmul.f32 %v983, %v996
        %v998 = vadd.f32 %v997, 0.014752088
        %v999 = vmul.f32 %v983, %v998
        %v1000 = vadd.f32 %v999, 0.112945676
        %v1001 = vmul.f32 %v983, %v1000
        %v1002 = vadd.f32 %v1001, 0.4994258
        %v1003 = vmul.f32 %v983, %v1002
        %v1004 = vadd.f32 %v1003, 1.0
        %v1005 = vrcp.pop %v1004
        %v1006 = vmul.f32 %v1004, %v1005
        %v1007 = vsub.f32 1.0, %v1006
        %v1008 = vmul.f32 %v1005, %v1007
        %v1009 = vadd.f32 %v1005, %v1008
        %vm1010 = vweird.f32 %v1004
        %vm1011 = vweird.f32 %v1005
        %vm1012 = vmor %vm1010, %vm1011
        %v1013 = vsel %vm1012, %v1005, %v1009
        %v1014 = vand.u32 2147483647, %v1004
        %vm1015 = vcmp.eq.f32.partialorder %v1014, 8.507059e+37
        %v1016 = vand.u32 %v1004, 2147483648
        %v1017 = vor.u32 1.1754944e-38, %v1016
        %v1018 = vsel %vm1015, %v1017, %v1013
        %v1019 = vmul.f32 %v994, %v1018
        %v1020 = vmin.f32 %v1019, 1.0
        %v1021 = vmax.f32 %v1020, -1.0
        %v1022 = vmul.f32 %v841, %v841
        %v1023 = vmin.f32 16.0, %v1022
        %v1024 = vmul.f32 %v1023, 2.1237322e-06
        %v1025 = vadd.f32 %v1024, 0.00028619796
        %v1026 = vmul.f32 %v1023, %v1025
        %v1027 = vadd.f32 %v1026, 0.0036580483
        %v1028 = vmul.f32 %v1023, %v1027
        %v1029 = vadd.f32 %v1028, 0.05243302
        %v1030 = vmul.f32 %v1023, %v1029
        %v1031 = vadd.f32 %v1030, 0.18741608
        %v1032 = vmul.f32 %v1023, %v1031
        %v1033 = vadd.f32 %v1032, 1.1283791
        %v1034 = vmul.f32 %v841, %v1033
        %v1035 = vmul.f32 %v1023, 3.8918573e-05
        %v1036 = vadd.f32 %v1035, 0.001143296
        %v1037 = vmul.f32 %v1023, %v1036
        %v1038 = vadd.f32 %v1037, 0.014752088
        %v1039 = vmul.f32 %v1023, %v1038
        %v1040 = vadd.f32 %v1039, 0.112945676
        %v1041 = vmul.f32 %v1023, %v1040
        %v1042 = vadd.f32 %v1041, 0.4994258
        %v1043 = vmul.f32 %v1023, %v1042
        %v1044 = vadd.f32 %v1043, 1.0
        %v1045 = vrcp.pop %v1044
        %v1046 = vmul.f32 %v1044, %v1045
        %v1047 = vsub.f32 1.0, %v1046
        %v1048 = vmul.f32 %v1045, %v1047
        %v1049 = vadd.f32 %v1045, %v1048
        %vm1050 = vweird.f32 %v1044
        %vm1051 = vweird.f32 %v1045
        %vm1052 = vmor %vm1050, %vm1051
        %v1053 = vsel %vm1052, %v1045, %v1049
        %v1054 = vand.u32 2147483647, %v1044
        %vm1055 = vcmp.eq.f32.partialorder %v1054, 8.507059e+37
        %v1056 = vand.u32 %v1044, 2147483648
        %v1057 = vor.u32 1.1754944e-38, %v1056
        %v1058 = vsel %vm1055, %v1057, %v1053
        %v1059 = vmul.f32 %v1034, %v1058
        %v1060 = vmin.f32 %v1059, 1.0
        %v1061 = vmax.f32 %v1060, -1.0
        %v1062 = vmul.f32 %v842, %v842
        %v1063 = vmin.f32 16.0, %v1062
        %v1064 = vmul.f32 %v1063, 2.1237322e-06
        %v1065 = vadd.f32 %v1064, 0.00028619796
        %v1066 = vmul.f32 %v1063, %v1065
        %v1067 = vadd.f32 %v1066, 0.0036580483
        %v1068 = vmul.f32 %v1063, %v1067
        %v1069 = vadd.f32 %v1068, 0.05243302
        %v1070 = vmul.f32 %v1063, %v1069
        %v1071 = vadd.f32 %v1070, 0.18741608
        %v1072 = vmul.f32 %v1063, %v1071
        %v1073 = vadd.f32 %v1072, 1.1283791
        %v1074 = vmul.f32 %v842, %v1073
        %v1075 = vmul.f32 %v1063, 3.8918573e-05
        %v1076 = vadd.f32 %v1075, 0.001143296
        %v1077 = vmul.f32 %v1063, %v1076
        %v1078 = vadd.f32 %v1077, 0.014752088
        %v1079 = vmul.f32 %v1063, %v1078
        %v1080 = vadd.f32 %v1079, 0.112945676
        %v1081 = vmul.f32 %v1063, %v1080
        %v1082 = vadd.f32 %v1081, 0.4994258
        %v1083 = vmul.f32 %v1063, %v1082
        %v1084 = vadd.f32 %v1083, 1.0
        %v1085 = vrcp.pop %v1084
        %v1086 = vmul.f32 %v1084, %v1085
        %v1087 = vsub.f32 1.0, %v1086
        %v1088 = vmul.f32 %v1085, %v1087
        %v1089 = vadd.f32 %v1085, %v1088
        %vm1090 = vweird.f32 %v1084
        %vm1091 = vweird.f32 %v1085
        %vm1092 = vmor %vm1090, %vm1091
        %v1093 = vsel %vm1092, %v1085, %v1089
        %v1094 = vand.u32 2147483647, %v1084
        %vm1095 = vcmp.eq.f32.partialorder %v1094, 8.507059e+37
        %v1096 = vand.u32 %v1084, 2147483648
        %v1097 = vor.u32 1.1754944e-38, %v1096
        %v1098 = vsel %vm1095, %v1097, %v1093
        %v1099 = vmul.f32 %v1074, %v1098
        %v1100 = vmin.f32 %v1099, 1.0
        %v1101 = vmax.f32 %v1100, -1.0
        %v1102 = vmul.f32 %v843, %v843
        %v1103 = vmin.f32 16.0, %v1102
        %v1104 = vmul.f32 %v1103, 2.1237322e-06
        %v1105 = vadd.f32 %v1104, 0.00028619796
        %v1106 = vmul.f32 %v1103, %v1105
        %v1107 = vadd.f32 %v1106, 0.0036580483
        %v1108 = vmul.f32 %v1103, %v1107
        %v1109 = vadd.f32 %v1108, 0.05243302
        %v1110 = vmul.f32 %v1103, %v1109
        %v1111 = vadd.f32 %v1110, 0.18741608
        %v1112 = vmul.f32 %v1103, %v1111
        %v1113 = vadd.f32 %v1112, 1.1283791
        %v1114 = vmul.f32 %v843, %v1113
        %v1115 = vmul.f32 %v1103, 3.8918573e-05
        %v1116 = vadd.f32 %v1115, 0.001143296
        %v1117 = vmul.f32 %v1103, %v1116
        %v1118 = vadd.f32 %v1117, 0.014752088
        %v1119 = vmul.f32 %v1103, %v1118
        %v1120 = vadd.f32 %v1119, 0.112945676
        %v1121 = vmul.f32 %v1103, %v1120
        %v1122 = vadd.f32 %v1121, 0.4994258
        %v1123 = vmul.f32 %v1103, %v1122
        %v1124 = vadd.f32 %v1123, 1.0
        %v1125 = vrcp.pop %v1124
        %v1126 = vmul.f32 %v1124, %v1125
        %v1127 = vsub.f32 1.0, %v1126
        %v1128 = vmul.f32 %v1125, %v1127
        %v1129 = vadd.f32 %v1125, %v1128
        %vm1130 = vweird.f32 %v1124
        %vm1131 = vweird.f32 %v1125
        %vm1132 = vmor %vm1130, %vm1131
        %v1133 = vsel %vm1132, %v1125, %v1129
        %v1134 = vand.u32 2147483647, %v1124
        %vm1135 = vcmp.eq.f32.partialorder %v1134, 8.507059e+37
        %v1136 = vand.u32 %v1124, 2147483648
        %v1137 = vor.u32 1.1754944e-38, %v1136
        %v1138 = vsel %vm1135, %v1137, %v1133
        %v1139 = vmul.f32 %v1114, %v1138
        %v1140 = vmin.f32 %v1139, 1.0
        %v1141 = vmax.f32 %v1140, -1.0
        %v1142 = vmul.f32 %v844, %v844
        %v1143 = vmin.f32 16.0, %v1142
        %v1144 = vmul.f32 %v1143, 2.1237322e-06
        %v1145 = vadd.f32 %v1144, 0.00028619796
        %v1146 = vmul.f32 %v1143, %v1145
        %v1147 = vadd.f32 %v1146, 0.0036580483
        %v1148 = vmul.f32 %v1143, %v1147
        %v1149 = vadd.f32 %v1148, 0.05243302
        %v1150 = vmul.f32 %v1143, %v1149
        %v1151 = vadd.f32 %v1150, 0.18741608
        %v1152 = vmul.f32 %v1143, %v1151
        %v1153 = vadd.f32 %v1152, 1.1283791
        %v1154 = vmul.f32 %v844, %v1153
        %v1155 = vmul.f32 %v1143, 3.8918573e-05
        %v1156 = vadd.f32 %v1155, 0.001143296
        %v1157 = vmul.f32 %v1143, %v1156
        %v1158 = vadd.f32 %v1157, 0.014752088
        %v1159 = vmul.f32 %v1143, %v1158
        %v1160 = vadd.f32 %v1159, 0.112945676
        %v1161 = vmul.f32 %v1143, %v1160
        %v1162 = vadd.f32 %v1161, 0.4994258
        %v1163 = vmul.f32 %v1143, %v1162
        %v1164 = vadd.f32 %v1163, 1.0
        %v1165 = vrcp.pop %v1164
        %v1166 = vmul.f32 %v1164, %v1165
        %v1167 = vsub.f32 1.0, %v1166
        %v1168 = vmul.f32 %v1165, %v1167
        %v1169 = vadd.f32 %v1165, %v1168
        %vm1170 = vweird.f32 %v1164
        %vm1171 = vweird.f32 %v1165
        %vm1172 = vmor %vm1170, %vm1171
        %v1173 = vsel %vm1172, %v1165, %v1169
        %v1174 = vand.u32 2147483647, %v1164
        %vm1175 = vcmp.eq.f32.partialorder %v1174, 8.507059e+37
        %v1176 = vand.u32 %v1164, 2147483648
        %v1177 = vor.u32 1.1754944e-38, %v1176
        %v1178 = vsel %vm1175, %v1177, %v1173
        %v1179 = vmul.f32 %v1154, %v1178
        %v1180 = vmin.f32 %v1179, 1.0
        %v1181 = vmax.f32 %v1180, -1.0
        %v1182 = vmul.f32 %v845, %v845
        %v1183 = vmin.f32 16.0, %v1182
        %v1184 = vmul.f32 %v1183, 2.1237322e-06
        %v1185 = vadd.f32 %v1184, 0.00028619796
        %v1186 = vmul.f32 %v1183, %v1185
        %v1187 = vadd.f32 %v1186, 0.0036580483
        %v1188 = vmul.f32 %v1183, %v1187
        %v1189 = vadd.f32 %v1188, 0.05243302
        %v1190 = vmul.f32 %v1183, %v1189
        %v1191 = vadd.f32 %v1190, 0.18741608
        %v1192 = vmul.f32 %v1183, %v1191
        %v1193 = vadd.f32 %v1192, 1.1283791
        %v1194 = vmul.f32 %v845, %v1193
        %v1195 = vmul.f32 %v1183, 3.8918573e-05
        %v1196 = vadd.f32 %v1195, 0.001143296
        %v1197 = vmul.f32 %v1183, %v1196
        %v1198 = vadd.f32 %v1197, 0.014752088
        %v1199 = vmul.f32 %v1183, %v1198
        %v1200 = vadd.f32 %v1199, 0.112945676
        %v1201 = vmul.f32 %v1183, %v1200
        %v1202 = vadd.f32 %v1201, 0.4994258
        %v1203 = vmul.f32 %v1183, %v1202
        %v1204 = vadd.f32 %v1203, 1.0
        %v1205 = vrcp.pop %v1204
        %v1206 = vmul.f32 %v1204, %v1205
        %v1207 = vsub.f32 1.0, %v1206
        %v1208 = vmul.f32 %v1205, %v1207
        %v1209 = vadd.f32 %v1205, %v1208
        %vm1210 = vweird.f32 %v1204
        %vm1211 = vweird.f32 %v1205
        %vm1212 = vmor %vm1210, %vm1211
        %v1213 = vsel %vm1212, %v1205, %v1209
        %v1214 = vand.u32 2147483647, %v1204
        %vm1215 = vcmp.eq.f32.partialorder %v1214, 8.507059e+37
        %v1216 = vand.u32 %v1204, 2147483648
        %v1217 = vor.u32 1.1754944e-38, %v1216
        %v1218 = vsel %vm1215, %v1217, %v1213
        %v1219 = vmul.f32 %v1194, %v1218
        %v1220 = vmin.f32 %v1219, 1.0
        %v1221 = vmax.f32 %v1220, -1.0
        %v1222 = vmul.f32 %v846, %v846
        %v1223 = vmin.f32 16.0, %v1222
        %v1224 = vmul.f32 %v1223, 2.1237322e-06
        %v1225 = vadd.f32 %v1224, 0.00028619796
        %v1226 = vmul.f32 %v1223, %v1225
        %v1227 = vadd.f32 %v1226, 0.0036580483
        %v1228 = vmul.f32 %v1223, %v1227
        %v1229 = vadd.f32 %v1228, 0.05243302
        %v1230 = vmul.f32 %v1223, %v1229
        %v1231 = vadd.f32 %v1230, 0.18741608
        %v1232 = vmul.f32 %v1223, %v1231
        %v1233 = vadd.f32 %v1232, 1.1283791
        %v1234 = vmul.f32 %v846, %v1233
        %v1235 = vmul.f32 %v1223, 3.8918573e-05
        %v1236 = vadd.f32 %v1235, 0.001143296
        %v1237 = vmul.f32 %v1223, %v1236
        %v1238 = vadd.f32 %v1237, 0.014752088
        %v1239 = vmul.f32 %v1223, %v1238
        %v1240 = vadd.f32 %v1239, 0.112945676
        %v1241 = vmul.f32 %v1223, %v1240
        %v1242 = vadd.f32 %v1241, 0.4994258
        %v1243 = vmul.f32 %v1223, %v1242
        %v1244 = vadd.f32 %v1243, 1.0
        %v1245 = vrcp.pop %v1244
        %v1246 = vmul.f32 %v1244, %v1245
        %v1247 = vsub.f32 1.0, %v1246
        %v1248 = vmul.f32 %v1245, %v1247
        %v1249 = vadd.f32 %v1245, %v1248
        %vm1250 = vweird.f32 %v1244
        %vm1251 = vweird.f32 %v1245
        %vm1252 = vmor %vm1250, %vm1251
        %v1253 = vsel %vm1252, %v1245, %v1249
        %v1254 = vand.u32 2147483647, %v1244
        %vm1255 = vcmp.eq.f32.partialorder %v1254, 8.507059e+37
        %v1256 = vand.u32 %v1244, 2147483648
        %v1257 = vor.u32 1.1754944e-38, %v1256
        %v1258 = vsel %vm1255, %v1257, %v1253
        %v1259 = vmul.f32 %v1234, %v1258
        %v1260 = vmin.f32 %v1259, 1.0
        %v1261 = vmax.f32 %v1260, -1.0
        %v1262 = vmul.f32 %v847, %v847
        %v1263 = vmin.f32 16.0, %v1262
        %v1264 = vmul.f32 %v1263, 2.1237322e-06
        %v1265 = vadd.f32 %v1264, 0.00028619796
        %v1266 = vmul.f32 %v1263, %v1265
        %v1267 = vadd.f32 %v1266, 0.0036580483
        %v1268 = vmul.f32 %v1263, %v1267
        %v1269 = vadd.f32 %v1268, 0.05243302
        %v1270 = vmul.f32 %v1263, %v1269
        %v1271 = vadd.f32 %v1270, 0.18741608
        %v1272 = vmul.f32 %v1263, %v1271
        %v1273 = vadd.f32 %v1272, 1.1283791
        %v1274 = vmul.f32 %v847, %v1273
        %v1275 = vmul.f32 %v1263, 3.8918573e-05
        %v1276 = vadd.f32 %v1275, 0.001143296
        %v1277 = vmul.f32 %v1263, %v1276
        %v1278 = vadd.f32 %v1277, 0.014752088
        %v1279 = vmul.f32 %v1263, %v1278
        %v1280 = vadd.f32 %v1279, 0.112945676
        %v1281 = vmul.f32 %v1263, %v1280
        %v1282 = vadd.f32 %v1281, 0.4994258
        %v1283 = vmul.f32 %v1263, %v1282
        %v1284 = vadd.f32 %v1283, 1.0
        %v1285 = vrcp.pop %v1284
        %v1286 = vmul.f32 %v1284, %v1285
        %v1287 = vsub.f32 1.0, %v1286
        %v1288 = vmul.f32 %v1285, %v1287
        %v1289 = vadd.f32 %v1285, %v1288
        %vm1290 = vweird.f32 %v1284
        %vm1291 = vweird.f32 %v1285
        %vm1292 = vmor %vm1290, %vm1291
        %v1293 = vsel %vm1292, %v1285, %v1289
        %v1294 = vand.u32 2147483647, %v1284
        %vm1295 = vcmp.eq.f32.partialorder %v1294, 8.507059e+37
        %v1296 = vand.u32 %v1284, 2147483648
        %v1297 = vor.u32 1.1754944e-38, %v1296
        %v1298 = vsel %vm1295, %v1297, %v1293
        %v1299 = vmul.f32 %v1274, %v1298
        %v1300 = vmin.f32 %v1299, 1.0
        %v1301 = vmax.f32 %v1300, -1.0
        %v1302 = vmul.f32 %v848, %v848
        %v1303 = vmin.f32 16.0, %v1302
        %v1304 = vmul.f32 %v1303, 2.1237322e-06
        %v1305 = vadd.f32 %v1304, 0.00028619796
        %v1306 = vmul.f32 %v1303, %v1305
        %v1307 = vadd.f32 %v1306, 0.0036580483
        %v1308 = vmul.f32 %v1303, %v1307
        %v1309 = vadd.f32 %v1308, 0.05243302
        %v1310 = vmul.f32 %v1303, %v1309
        %v1311 = vadd.f32 %v1310, 0.18741608
        %v1312 = vmul.f32 %v1303, %v1311
        %v1313 = vadd.f32 %v1312, 1.1283791
        %v1314 = vmul.f32 %v848, %v1313
        %v1315 = vmul.f32 %v1303, 3.8918573e-05
        %v1316 = vadd.f32 %v1315, 0.001143296
        %v1317 = vmul.f32 %v1303, %v1316
        %v1318 = vadd.f32 %v1317, 0.014752088
        %v1319 = vmul.f32 %v1303, %v1318
        %v1320 = vadd.f32 %v1319, 0.112945676
        %v1321 = vmul.f32 %v1303, %v1320
        %v1322 = vadd.f32 %v1321, 0.4994258
        %v1323 = vmul.f32 %v1303, %v1322
        %v1324 = vadd.f32 %v1323, 1.0
        %v1325 = vrcp.pop %v1324
        %v1326 = vmul.f32 %v1324, %v1325
        %v1327 = vsub.f32 1.0, %v1326
        %v1328 = vmul.f32 %v1325, %v1327
        %v1329 = vadd.f32 %v1325, %v1328
        %vm1330 = vweird.f32 %v1324
        %vm1331 = vweird.f32 %v1325
        %vm1332 = vmor %vm1330, %vm1331
        %v1333 = vsel %vm1332, %v1325, %v1329
        %v1334 = vand.u32 2147483647, %v1324
        %vm1335 = vcmp.eq.f32.partialorder %v1334, 8.507059e+37
        %v1336 = vand.u32 %v1324, 2147483648
        %v1337 = vor.u32 1.1754944e-38, %v1336
        %v1338 = vsel %vm1335, %v1337, %v1333
        %v1339 = vmul.f32 %v1314, %v1338
        %v1340 = vmin.f32 %v1339, 1.0
        %v1341 = vmax.f32 %v1340, -1.0
        %v1342 = vmul.f32 %v849, %v849
        %v1343 = vmin.f32 16.0, %v1342
        %v1344 = vmul.f32 %v1343, 2.1237322e-06
        %v1345 = vadd.f32 %v1344, 0.00028619796
        %v1346 = vmul.f32 %v1343, %v1345
        %v1347 = vadd.f32 %v1346, 0.0036580483
        %v1348 = vmul.f32 %v1343, %v1347
        %v1349 = vadd.f32 %v1348, 0.05243302
        %v1350 = vmul.f32 %v1343, %v1349
        %v1351 = vadd.f32 %v1350, 0.18741608
        %v1352 = vmul.f32 %v1343, %v1351
        %v1353 = vadd.f32 %v1352, 1.1283791
        %v1354 = vmul.f32 %v849, %v1353
        %v1355 = vmul.f32 %v1343, 3.8918573e-05
        %v1356 = vadd.f32 %v1355, 0.001143296
        %v1357 = vmul.f32 %v1343, %v1356
        %v1358 = vadd.f32 %v1357, 0.014752088
        %v1359 = vmul.f32 %v1343, %v1358
        %v1360 = vadd.f32 %v1359, 0.112945676
        %v1361 = vmul.f32 %v1343, %v1360
        %v1362 = vadd.f32 %v1361, 0.4994258
        %v1363 = vmul.f32 %v1343, %v1362
        %v1364 = vadd.f32 %v1363, 1.0
        %v1365 = vrcp.pop %v1364
        %v1366 = vmul.f32 %v1364, %v1365
        %v1367 = vsub.f32 1.0, %v1366
        %v1368 = vmul.f32 %v1365, %v1367
        %v1369 = vadd.f32 %v1365, %v1368
        %vm1370 = vweird.f32 %v1364
        %vm1371 = vweird.f32 %v1365
        %vm1372 = vmor %vm1370, %vm1371
        %v1373 = vsel %vm1372, %v1365, %v1369
        %v1374 = vand.u32 2147483647, %v1364
        %vm1375 = vcmp.eq.f32.partialorder %v1374, 8.507059e+37
        %v1376 = vand.u32 %v1364, 2147483648
        %v1377 = vor.u32 1.1754944e-38, %v1376
        %v1378 = vsel %vm1375, %v1377, %v1373
        %v1379 = vmul.f32 %v1354, %v1378
        %v1380 = vmin.f32 %v1379, 1.0
        %v1381 = vmax.f32 %v1380, -1.0
        %v1382 = vmul.f32 %v850, %v850
        %v1383 = vmin.f32 16.0, %v1382
        %v1384 = vmul.f32 %v1383, 2.1237322e-06
        %v1385 = vadd.f32 %v1384, 0.00028619796
        %v1386 = vmul.f32 %v1383, %v1385
        %v1387 = vadd.f32 %v1386, 0.0036580483
        %v1388 = vmul.f32 %v1383, %v1387
        %v1389 = vadd.f32 %v1388, 0.05243302
        %v1390 = vmul.f32 %v1383, %v1389
        %v1391 = vadd.f32 %v1390, 0.18741608
        %v1392 = vmul.f32 %v1383, %v1391
        %v1393 = vadd.f32 %v1392, 1.1283791
        %v1394 = vmul.f32 %v850, %v1393
        %v1395 = vmul.f32 %v1383, 3.8918573e-05
        %v1396 = vadd.f32 %v1395, 0.001143296
        %v1397 = vmul.f32 %v1383, %v1396
        %v1398 = vadd.f32 %v1397, 0.014752088
        %v1399 = vmul.f32 %v1383, %v1398
        %v1400 = vadd.f32 %v1399, 0.112945676
        %v1401 = vmul.f32 %v1383, %v1400
        %v1402 = vadd.f32 %v1401, 0.4994258
        %v1403 = vmul.f32 %v1383, %v1402
        %v1404 = vadd.f32 %v1403, 1.0
        %v1405 = vrcp.pop %v1404
        %v1406 = vmul.f32 %v1404, %v1405
        %v1407 = vsub.f32 1.0, %v1406
        %v1408 = vmul.f32 %v1405, %v1407
        %v1409 = vadd.f32 %v1405, %v1408
        %vm1410 = vweird.f32 %v1404
        %vm1411 = vweird.f32 %v1405
        %vm1412 = vmor %vm1410, %vm1411
        %v1413 = vsel %vm1412, %v1405, %v1409
        %v1414 = vand.u32 2147483647, %v1404
        %vm1415 = vcmp.eq.f32.partialorder %v1414, 8.507059e+37
        %v1416 = vand.u32 %v1404, 2147483648
        %v1417 = vor.u32 1.1754944e-38, %v1416
        %v1418 = vsel %vm1415, %v1417, %v1413
        %v1419 = vmul.f32 %v1394, %v1418
        %v1420 = vmin.f32 %v1419, 1.0
        %v1421 = vmax.f32 %v1420, -1.0
        %v1422 = vmul.f32 %v851, %v851
        %v1423 = vmin.f32 16.0, %v1422
        %v1424 = vmul.f32 %v1423, 2.1237322e-06
        %v1425 = vadd.f32 %v1424, 0.00028619796
        %v1426 = vmul.f32 %v1423, %v1425
        %v1427 = vadd.f32 %v1426, 0.0036580483
        %v1428 = vmul.f32 %v1423, %v1427
        %v1429 = vadd.f32 %v1428, 0.05243302
        %v1430 = vmul.f32 %v1423, %v1429
        %v1431 = vadd.f32 %v1430, 0.18741608
        %v1432 = vmul.f32 %v1423, %v1431
        %v1433 = vadd.f32 %v1432, 1.1283791
        %v1434 = vmul.f32 %v851, %v1433
        %v1435 = vmul.f32 %v1423, 3.8918573e-05
        %v1436 = vadd.f32 %v1435, 0.001143296
        %v1437 = vmul.f32 %v1423, %v1436
        %v1438 = vadd.f32 %v1437, 0.014752088
        %v1439 = vmul.f32 %v1423, %v1438
        %v1440 = vadd.f32 %v1439, 0.112945676
        %v1441 = vmul.f32 %v1423, %v1440
        %v1442 = vadd.f32 %v1441, 0.4994258
        %v1443 = vmul.f32 %v1423, %v1442
        %v1444 = vadd.f32 %v1443, 1.0
        %v1445 = vrcp.pop %v1444
        %v1446 = vmul.f32 %v1444, %v1445
        %v1447 = vsub.f32 1.0, %v1446
        %v1448 = vmul.f32 %v1445, %v1447
        %v1449 = vadd.f32 %v1445, %v1448
        %vm1450 = vweird.f32 %v1444
        %vm1451 = vweird.f32 %v1445
        %vm1452 = vmor %vm1450, %vm1451
        %v1453 = vsel %vm1452, %v1445, %v1449
        %v1454 = vand.u32 2147483647, %v1444
        %vm1455 = vcmp.eq.f32.partialorder %v1454, 8.507059e+37
        %v1456 = vand.u32 %v1444, 2147483648
        %v1457 = vor.u32 1.1754944e-38, %v1456
        %v1458 = vsel %vm1455, %v1457, %v1453
        %v1459 = vmul.f32 %v1434, %v1458
        %v1460 = vmin.f32 %v1459, 1.0
        %v1461 = vmax.f32 %v1460, -1.0
        %v1462 = vmul.f32 %v852, %v852
        %v1463 = vmin.f32 16.0, %v1462
        %v1464 = vmul.f32 %v1463, 2.1237322e-06
        %v1465 = vadd.f32 %v1464, 0.00028619796
        %v1466 = vmul.f32 %v1463, %v1465
        %v1467 = vadd.f32 %v1466, 0.0036580483
        %v1468 = vmul.f32 %v1463, %v1467
        %v1469 = vadd.f32 %v1468, 0.05243302
        %v1470 = vmul.f32 %v1463, %v1469
        %v1471 = vadd.f32 %v1470, 0.18741608
        %v1472 = vmul.f32 %v1463, %v1471
        %v1473 = vadd.f32 %v1472, 1.1283791
        %v1474 = vmul.f32 %v852, %v1473
        %v1475 = vmul.f32 %v1463, 3.8918573e-05
        %v1476 = vadd.f32 %v1475, 0.001143296
        %v1477 = vmul.f32 %v1463, %v1476
        %v1478 = vadd.f32 %v1477, 0.014752088
        %v1479 = vmul.f32 %v1463, %v1478
        %v1480 = vadd.f32 %v1479, 0.112945676
        %v1481 = vmul.f32 %v1463, %v1480
        %v1482 = vadd.f32 %v1481, 0.4994258
        %v1483 = vmul.f32 %v1463, %v1482
        %v1484 = vadd.f32 %v1483, 1.0
        %v1485 = vrcp.pop %v1484
        %v1486 = vmul.f32 %v1484, %v1485
        %v1487 = vsub.f32 1.0, %v1486
        %v1488 = vmul.f32 %v1485, %v1487
        %v1489 = vadd.f32 %v1485, %v1488
        %vm1490 = vweird.f32 %v1484
        %vm1491 = vweird.f32 %v1485
        %vm1492 = vmor %vm1490, %vm1491
        %v1493 = vsel %vm1492, %v1485, %v1489
        %v1494 = vand.u32 2147483647, %v1484
        %vm1495 = vcmp.eq.f32.partialorder %v1494, 8.507059e+37
        %v1496 = vand.u32 %v1484, 2147483648
        %v1497 = vor.u32 1.1754944e-38, %v1496
        %v1498 = vsel %vm1495, %v1497, %v1493
        %v1499 = vmul.f32 %v1474, %v1498
        %v1500 = vmin.f32 %v1499, 1.0
        %v1501 = vmax.f32 %v1500, -1.0
        %v1502 = vmul.f32 %v853, %v853
        %v1503 = vmin.f32 16.0, %v1502
        %v1504 = vmul.f32 %v1503, 2.1237322e-06
        %v1505 = vadd.f32 %v1504, 0.00028619796
        %v1506 = vmul.f32 %v1503, %v1505
        %v1507 = vadd.f32 %v1506, 0.0036580483
        %v1508 = vmul.f32 %v1503, %v1507
        %v1509 = vadd.f32 %v1508, 0.05243302
        %v1510 = vmul.f32 %v1503, %v1509
        %v1511 = vadd.f32 %v1510, 0.18741608
        %v1512 = vmul.f32 %v1503, %v1511
        %v1513 = vadd.f32 %v1512, 1.1283791
        %v1514 = vmul.f32 %v853, %v1513
        %v1515 = vmul.f32 %v1503, 3.8918573e-05
        %v1516 = vadd.f32 %v1515, 0.001143296
        %v1517 = vmul.f32 %v1503, %v1516
        %v1518 = vadd.f32 %v1517, 0.014752088
        %v1519 = vmul.f32 %v1503, %v1518
        %v1520 = vadd.f32 %v1519, 0.112945676
        %v1521 = vmul.f32 %v1503, %v1520
        %v1522 = vadd.f32 %v1521, 0.4994258
        %v1523 = vmul.f32 %v1503, %v1522
        %v1524 = vadd.f32 %v1523, 1.0
        %v1525 = vrcp.pop %v1524
        %v1526 = vmul.f32 %v1524, %v1525
        %v1527 = vsub.f32 1.0, %v1526
        %v1528 = vmul.f32 %v1525, %v1527
        %v1529 = vadd.f32 %v1525, %v1528
        %vm1530 = vweird.f32 %v1524
        %vm1531 = vweird.f32 %v1525
        %vm1532 = vmor %vm1530, %vm1531
        %v1533 = vsel %vm1532, %v1525, %v1529
        %v1534 = vand.u32 2147483647, %v1524
        %vm1535 = vcmp.eq.f32.partialorder %v1534, 8.507059e+37
        %v1536 = vand.u32 %v1524, 2147483648
        %v1537 = vor.u32 1.1754944e-38, %v1536
        %v1538 = vsel %vm1535, %v1537, %v1533
        %v1539 = vmul.f32 %v1514, %v1538
        %v1540 = vmin.f32 %v1539, 1.0
        %v1541 = vmax.f32 %v1540, -1.0
        %v1542 = vmul.f32 %v854, %v854
        %v1543 = vmin.f32 16.0, %v1542
        %v1544 = vmul.f32 %v1543, 2.1237322e-06
        %v1545 = vadd.f32 %v1544, 0.00028619796
        %v1546 = vmul.f32 %v1543, %v1545
        %v1547 = vadd.f32 %v1546, 0.0036580483
        %v1548 = vmul.f32 %v1543, %v1547
        %v1549 = vadd.f32 %v1548, 0.05243302
        %v1550 = vmul.f32 %v1543, %v1549
        %v1551 = vadd.f32 %v1550, 0.18741608
        %v1552 = vmul.f32 %v1543, %v1551
        %v1553 = vadd.f32 %v1552, 1.1283791
        %v1554 = vmul.f32 %v854, %v1553
        %v1555 = vmul.f32 %v1543, 3.8918573e-05
        %v1556 = vadd.f32 %v1555, 0.001143296
        %v1557 = vmul.f32 %v1543, %v1556
        %v1558 = vadd.f32 %v1557, 0.014752088
        %v1559 = vmul.f32 %v1543, %v1558
        %v1560 = vadd.f32 %v1559, 0.112945676
        %v1561 = vmul.f32 %v1543, %v1560
        %v1562 = vadd.f32 %v1561, 0.4994258
        %v1563 = vmul.f32 %v1543, %v1562
        %v1564 = vadd.f32 %v1563, 1.0
        %v1565 = vrcp.pop %v1564
        %v1566 = vmul.f32 %v1564, %v1565
        %v1567 = vsub.f32 1.0, %v1566
        %v1568 = vmul.f32 %v1565, %v1567
        %v1569 = vadd.f32 %v1565, %v1568
        %vm1570 = vweird.f32 %v1564
        %vm1571 = vweird.f32 %v1565
        %vm1572 = vmor %vm1570, %vm1571
        %v1573 = vsel %vm1572, %v1565, %v1569
        %v1574 = vand.u32 2147483647, %v1564
        %vm1575 = vcmp.eq.f32.partialorder %v1574, 8.507059e+37
        %v1576 = vand.u32 %v1564, 2147483648
        %v1577 = vor.u32 1.1754944e-38, %v1576
        %v1578 = vsel %vm1575, %v1577, %v1573
        %v1579 = vmul.f32 %v1554, %v1578
        %v1580 = vmin.f32 %v1579, 1.0
        %v1581 = vmax.f32 %v1580, -1.0
        %v1582 = vmul.f32 %v855, %v855
        %v1583 = vmin.f32 16.0, %v1582
        %v1584 = vmul.f32 %v1583, 2.1237322e-06
        %v1585 = vadd.f32 %v1584, 0.00028619796
        %v1586 = vmul.f32 %v1583, %v1585
        %v1587 = vadd.f32 %v1586, 0.0036580483
        %v1588 = vmul.f32 %v1583, %v1587
        %v1589 = vadd.f32 %v1588, 0.05243302
        %v1590 = vmul.f32 %v1583, %v1589
        %v1591 = vadd.f32 %v1590, 0.18741608
        %v1592 = vmul.f32 %v1583, %v1591
        %v1593 = vadd.f32 %v1592, 1.1283791
        %v1594 = vmul.f32 %v855, %v1593
        %v1595 = vmul.f32 %v1583, 3.8918573e-05
        %v1596 = vadd.f32 %v1595, 0.001143296
        %v1597 = vmul.f32 %v1583, %v1596
        %v1598 = vadd.f32 %v1597, 0.014752088
        %v1599 = vmul.f32 %v1583, %v1598
        %v1600 = vadd.f32 %v1599, 0.112945676
        %v1601 = vmul.f32 %v1583, %v1600
        %v1602 = vadd.f32 %v1601, 0.4994258
        %v1603 = vmul.f32 %v1583, %v1602
        %v1604 = vadd.f32 %v1603, 1.0
        %v1605 = vrcp.pop %v1604
        %v1606 = vmul.f32 %v1604, %v1605
        %v1607 = vsub.f32 1.0, %v1606
        %v1608 = vmul.f32 %v1605, %v1607
        %v1609 = vadd.f32 %v1605, %v1608
        %vm1610 = vweird.f32 %v1604
        %vm1611 = vweird.f32 %v1605
        %vm1612 = vmor %vm1610, %vm1611
        %v1613 = vsel %vm1612, %v1605, %v1609
        %v1614 = vand.u32 2147483647, %v1604
        %vm1615 = vcmp.eq.f32.partialorder %v1614, 8.507059e+37
        %v1616 = vand.u32 %v1604, 2147483648
        %v1617 = vor.u32 1.1754944e-38, %v1616
        %v1618 = vsel %vm1615, %v1617, %v1613
        %v1619 = vmul.f32 %v1594, %v1618
        %v1620 = vmin.f32 %v1619, 1.0
        %v1621 = vmax.f32 %v1620, -1.0
        %v1622 = vmul.f32 %v856, %v856
        %v1623 = vmin.f32 16.0, %v1622
        %v1624 = vmul.f32 %v1623, 2.1237322e-06
        %v1625 = vadd.f32 %v1624, 0.00028619796
        %v1626 = vmul.f32 %v1623, %v1625
        %v1627 = vadd.f32 %v1626, 0.0036580483
        %v1628 = vmul.f32 %v1623, %v1627
        %v1629 = vadd.f32 %v1628, 0.05243302
        %v1630 = vmul.f32 %v1623, %v1629
        %v1631 = vadd.f32 %v1630, 0.18741608
        %v1632 = vmul.f32 %v1623, %v1631
        %v1633 = vadd.f32 %v1632, 1.1283791
        %v1634 = vmul.f32 %v856, %v1633
        %v1635 = vmul.f32 %v1623, 3.8918573e-05
        %v1636 = vadd.f32 %v1635, 0.001143296
        %v1637 = vmul.f32 %v1623, %v1636
        %v1638 = vadd.f32 %v1637, 0.014752088
        %v1639 = vmul.f32 %v1623, %v1638
        %v1640 = vadd.f32 %v1639, 0.112945676
        %v1641 = vmul.f32 %v1623, %v1640
        %v1642 = vadd.f32 %v1641, 0.4994258
        %v1643 = vmul.f32 %v1623, %v1642
        %v1644 = vadd.f32 %v1643, 1.0
        %v1645 = vrcp.pop %v1644
        %v1646 = vmul.f32 %v1644, %v1645
        %v1647 = vsub.f32 1.0, %v1646
        %v1648 = vmul.f32 %v1645, %v1647
        %v1649 = vadd.f32 %v1645, %v1648
        %vm1650 = vweird.f32 %v1644
        %vm1651 = vweird.f32 %v1645
        %vm1652 = vmor %vm1650, %vm1651
        %v1653 = vsel %vm1652, %v1645, %v1649
        %v1654 = vand.u32 2147483647, %v1644
        %vm1655 = vcmp.eq.f32.partialorder %v1654, 8.507059e+37
        %v1656 = vand.u32 %v1644, 2147483648
        %v1657 = vor.u32 1.1754944e-38, %v1656
        %v1658 = vsel %vm1655, %v1657, %v1653
        %v1659 = vmul.f32 %v1634, %v1658
        %v1660 = vmin.f32 %v1659, 1.0
        %v1661 = vmax.f32 %v1660, -1.0
        %v1662 = vmul.f32 %v857, %v857
        %v1663 = vmin.f32 16.0, %v1662
        %v1664 = vmul.f32 %v1663, 2.1237322e-06
        %v1665 = vadd.f32 %v1664, 0.00028619796
        %v1666 = vmul.f32 %v1663, %v1665
        %v1667 = vadd.f32 %v1666, 0.0036580483
        %v1668 = vmul.f32 %v1663, %v1667
        %v1669 = vadd.f32 %v1668, 0.05243302
        %v1670 = vmul.f32 %v1663, %v1669
        %v1671 = vadd.f32 %v1670, 0.18741608
        %v1672 = vmul.f32 %v1663, %v1671
        %v1673 = vadd.f32 %v1672, 1.1283791
        %v1674 = vmul.f32 %v857, %v1673
        %v1675 = vmul.f32 %v1663, 3.8918573e-05
        %v1676 = vadd.f32 %v1675, 0.001143296
        %v1677 = vmul.f32 %v1663, %v1676
        %v1678 = vadd.f32 %v1677, 0.014752088
        %v1679 = vmul.f32 %v1663, %v1678
        %v1680 = vadd.f32 %v1679, 0.112945676
        %v1681 = vmul.f32 %v1663, %v1680
        %v1682 = vadd.f32 %v1681, 0.4994258
        %v1683 = vmul.f32 %v1663, %v1682
        %v1684 = vadd.f32 %v1683, 1.0
        %v1685 = vrcp.pop %v1684
        %v1686 = vmul.f32 %v1684, %v1685
        %v1687 = vsub.f32 1.0, %v1686
        %v1688 = vmul.f32 %v1685, %v1687
        %v1689 = vadd.f32 %v1685, %v1688
        %vm1690 = vweird.f32 %v1684
        %vm1691 = vweird.f32 %v1685
        %vm1692 = vmor %vm1690, %vm1691
        %v1693 = vsel %vm1692, %v1685, %v1689
        %v1694 = vand.u32 2147483647, %v1684
        %vm1695 = vcmp.eq.f32.partialorder %v1694, 8.507059e+37
        %v1696 = vand.u32 %v1684, 2147483648
        %v1697 = vor.u32 1.1754944e-38, %v1696
        %v1698 = vsel %vm1695, %v1697, %v1693
        %v1699 = vmul.f32 %v1674, %v1698
        %v1700 = vmin.f32 %v1699, 1.0
        %v1701 = vmax.f32 %v1700, -1.0
        %v1702 = vmul.f32 %v858, %v858
        %v1703 = vmin.f32 16.0, %v1702
        %v1704 = vmul.f32 %v1703, 2.1237322e-06
        %v1705 = vadd.f32 %v1704, 0.00028619796
        %v1706 = vmul.f32 %v1703, %v1705
        %v1707 = vadd.f32 %v1706, 0.0036580483
        %v1708 = vmul.f32 %v1703, %v1707
        %v1709 = vadd.f32 %v1708, 0.05243302
        %v1710 = vmul.f32 %v1703, %v1709
        %v1711 = vadd.f32 %v1710, 0.18741608
        %v1712 = vmul.f32 %v1703, %v1711
        %v1713 = vadd.f32 %v1712, 1.1283791
        %v1714 = vmul.f32 %v858, %v1713
        %v1715 = vmul.f32 %v1703, 3.8918573e-05
        %v1716 = vadd.f32 %v1715, 0.001143296
        %v1717 = vmul.f32 %v1703, %v1716
        %v1718 = vadd.f32 %v1717, 0.014752088
        %v1719 = vmul.f32 %v1703, %v1718
        %v1720 = vadd.f32 %v1719, 0.112945676
        %v1721 = vmul.f32 %v1703, %v1720
        %v1722 = vadd.f32 %v1721, 0.4994258
        %v1723 = vmul.f32 %v1703, %v1722
        %v1724 = vadd.f32 %v1723, 1.0
        %v1725 = vrcp.pop %v1724
        %v1726 = vmul.f32 %v1724, %v1725
        %v1727 = vsub.f32 1.0, %v1726
        %v1728 = vmul.f32 %v1725, %v1727
        %v1729 = vadd.f32 %v1725, %v1728
        %vm1730 = vweird.f32 %v1724
        %vm1731 = vweird.f32 %v1725
        %vm1732 = vmor %vm1730, %vm1731
        %v1733 = vsel %vm1732, %v1725, %v1729
        %v1734 = vand.u32 2147483647, %v1724
        %vm1735 = vcmp.eq.f32.partialorder %v1734, 8.507059e+37
        %v1736 = vand.u32 %v1724, 2147483648
        %v1737 = vor.u32 1.1754944e-38, %v1736
        %v1738 = vsel %vm1735, %v1737, %v1733
        %v1739 = vmul.f32 %v1714, %v1738
        %v1740 = vmin.f32 %v1739, 1.0
        %v1741 = vmax.f32 %v1740, -1.0
        %v1742 = vmul.f32 %v859, %v859
        %v1743 = vmin.f32 16.0, %v1742
        %v1744 = vmul.f32 %v1743, 2.1237322e-06
        %v1745 = vadd.f32 %v1744, 0.00028619796
        %v1746 = vmul.f32 %v1743, %v1745
        %v1747 = vadd.f32 %v1746, 0.0036580483
        %v1748 = vmul.f32 %v1743, %v1747
        %v1749 = vadd.f32 %v1748, 0.05243302
        %v1750 = vmul.f32 %v1743, %v1749
        %v1751 = vadd.f32 %v1750, 0.18741608
        %v1752 = vmul.f32 %v1743, %v1751
        %v1753 = vadd.f32 %v1752, 1.1283791
        %v1754 = vmul.f32 %v859, %v1753
        %v1755 = vmul.f32 %v1743, 3.8918573e-05
        %v1756 = vadd.f32 %v1755, 0.001143296
        %v1757 = vmul.f32 %v1743, %v1756
        %v1758 = vadd.f32 %v1757, 0.014752088
        %v1759 = vmul.f32 %v1743, %v1758
        %v1760 = vadd.f32 %v1759, 0.112945676
        %v1761 = vmul.f32 %v1743, %v1760
        %v1762 = vadd.f32 %v1761, 0.4994258
        %v1763 = vmul.f32 %v1743, %v1762
        %v1764 = vadd.f32 %v1763, 1.0
        %v1765 = vrcp.pop %v1764
        %v1766 = vmul.f32 %v1764, %v1765
        %v1767 = vsub.f32 1.0, %v1766
        %v1768 = vmul.f32 %v1765, %v1767
        %v1769 = vadd.f32 %v1765, %v1768
        %vm1770 = vweird.f32 %v1764
        %vm1771 = vweird.f32 %v1765
        %vm1772 = vmor %vm1770, %vm1771
        %v1773 = vsel %vm1772, %v1765, %v1769
        %v1774 = vand.u32 2147483647, %v1764
        %vm1775 = vcmp.eq.f32.partialorder %v1774, 8.507059e+37
        %v1776 = vand.u32 %v1764, 2147483648
        %v1777 = vor.u32 1.1754944e-38, %v1776
        %v1778 = vsel %vm1775, %v1777, %v1773
        %v1779 = vmul.f32 %v1754, %v1778
        %v1780 = vmin.f32 %v1779, 1.0
        %v1781 = vmax.f32 %v1780, -1.0
        %v1782 = vmul.f32 %v860, %v860
        %v1783 = vmin.f32 16.0, %v1782
        %v1784 = vmul.f32 %v1783, 2.1237322e-06
        %v1785 = vadd.f32 %v1784, 0.00028619796
        %v1786 = vmul.f32 %v1783, %v1785
        %v1787 = vadd.f32 %v1786, 0.0036580483
        %v1788 = vmul.f32 %v1783, %v1787
        %v1789 = vadd.f32 %v1788, 0.05243302
        %v1790 = vmul.f32 %v1783, %v1789
        %v1791 = vadd.f32 %v1790, 0.18741608
        %v1792 = vmul.f32 %v1783, %v1791
        %v1793 = vadd.f32 %v1792, 1.1283791
        %v1794 = vmul.f32 %v860, %v1793
        %v1795 = vmul.f32 %v1783, 3.8918573e-05
        %v1796 = vadd.f32 %v1795, 0.001143296
        %v1797 = vmul.f32 %v1783, %v1796
        %v1798 = vadd.f32 %v1797, 0.014752088
        %v1799 = vmul.f32 %v1783, %v1798
        %v1800 = vadd.f32 %v1799, 0.112945676
        %v1801 = vmul.f32 %v1783, %v1800
        %v1802 = vadd.f32 %v1801, 0.4994258
        %v1803 = vmul.f32 %v1783, %v1802
        %v1804 = vadd.f32 %v1803, 1.0
        %v1805 = vrcp.pop %v1804
        %v1806 = vmul.f32 %v1804, %v1805
        %v1807 = vsub.f32 1.0, %v1806
        %v1808 = vmul.f32 %v1805, %v1807
        %v1809 = vadd.f32 %v1805, %v1808
        %vm1810 = vweird.f32 %v1804
        %vm1811 = vweird.f32 %v1805
        %vm1812 = vmor %vm1810, %vm1811
        %v1813 = vsel %vm1812, %v1805, %v1809
        %v1814 = vand.u32 2147483647, %v1804
        %vm1815 = vcmp.eq.f32.partialorder %v1814, 8.507059e+37
        %v1816 = vand.u32 %v1804, 2147483648
        %v1817 = vor.u32 1.1754944e-38, %v1816
        %v1818 = vsel %vm1815, %v1817, %v1813
        %v1819 = vmul.f32 %v1794, %v1818
        %v1820 = vmin.f32 %v1819, 1.0
        %v1821 = vmax.f32 %v1820, -1.0
        %v1822 = vmul.f32 %v861, %v861
        %v1823 = vmin.f32 16.0, %v1822
        %v1824 = vmul.f32 %v1823, 2.1237322e-06
        %v1825 = vadd.f32 %v1824, 0.00028619796
        %v1826 = vmul.f32 %v1823, %v1825
        %v1827 = vadd.f32 %v1826, 0.0036580483
        %v1828 = vmul.f32 %v1823, %v1827
        %v1829 = vadd.f32 %v1828, 0.05243302
        %v1830 = vmul.f32 %v1823, %v1829
        %v1831 = vadd.f32 %v1830, 0.18741608
        %v1832 = vmul.f32 %v1823, %v1831
        %v1833 = vadd.f32 %v1832, 1.1283791
        %v1834 = vmul.f32 %v861, %v1833
        %v1835 = vmul.f32 %v1823, 3.8918573e-05
        %v1836 = vadd.f32 %v1835, 0.001143296
        %v1837 = vmul.f32 %v1823, %v1836
        %v1838 = vadd.f32 %v1837, 0.014752088
        %v1839 = vmul.f32 %v1823, %v1838
        %v1840 = vadd.f32 %v1839, 0.112945676
        %v1841 = vmul.f32 %v1823, %v1840
        %v1842 = vadd.f32 %v1841, 0.4994258
        %v1843 = vmul.f32 %v1823, %v1842
        %v1844 = vadd.f32 %v1843, 1.0
        %v1845 = vrcp.pop %v1844
        %v1846 = vmul.f32 %v1844, %v1845
        %v1847 = vsub.f32 1.0, %v1846
        %v1848 = vmul.f32 %v1845, %v1847
        %v1849 = vadd.f32 %v1845, %v1848
        %vm1850 = vweird.f32 %v1844
        %vm1851 = vweird.f32 %v1845
        %vm1852 = vmor %vm1850, %vm1851
        %v1853 = vsel %vm1852, %v1845, %v1849
        %v1854 = vand.u32 2147483647, %v1844
        %vm1855 = vcmp.eq.f32.partialorder %v1854, 8.507059e+37
        %v1856 = vand.u32 %v1844, 2147483648
        %v1857 = vor.u32 1.1754944e-38, %v1856
        %v1858 = vsel %vm1855, %v1857, %v1853
        %v1859 = vmul.f32 %v1834, %v1858
        %v1860 = vmin.f32 %v1859, 1.0
        %v1861 = vmax.f32 %v1860, -1.0
        %v1862 = vmul.f32 %v862, %v862
        %v1863 = vmin.f32 16.0, %v1862
        %v1864 = vmul.f32 %v1863, 2.1237322e-06
        %v1865 = vadd.f32 %v1864, 0.00028619796
        %v1866 = vmul.f32 %v1863, %v1865
        %v1867 = vadd.f32 %v1866, 0.0036580483
        %v1868 = vmul.f32 %v1863, %v1867
        %v1869 = vadd.f32 %v1868, 0.05243302
        %v1870 = vmul.f32 %v1863, %v1869
        %v1871 = vadd.f32 %v1870, 0.18741608
        %v1872 = vmul.f32 %v1863, %v1871
        %v1873 = vadd.f32 %v1872, 1.1283791
        %v1874 = vmul.f32 %v862, %v1873
        %v1875 = vmul.f32 %v1863, 3.8918573e-05
        %v1876 = vadd.f32 %v1875, 0.001143296
        %v1877 = vmul.f32 %v1863, %v1876
        %v1878 = vadd.f32 %v1877, 0.014752088
        %v1879 = vmul.f32 %v1863, %v1878
        %v1880 = vadd.f32 %v1879, 0.112945676
        %v1881 = vmul.f32 %v1863, %v1880
        %v1882 = vadd.f32 %v1881, 0.4994258
        %v1883 = vmul.f32 %v1863, %v1882
        %v1884 = vadd.f32 %v1883, 1.0
        %v1885 = vrcp.pop %v1884
        %v1886 = vmul.f32 %v1884, %v1885
        %v1887 = vsub.f32 1.0, %v1886
        %v1888 = vmul.f32 %v1885, %v1887
        %v1889 = vadd.f32 %v1885, %v1888
        %vm1890 = vweird.f32 %v1884
        %vm1891 = vweird.f32 %v1885
        %vm1892 = vmor %vm1890, %vm1891
        %v1893 = vsel %vm1892, %v1885, %v1889
        %v1894 = vand.u32 2147483647, %v1884
        %vm1895 = vcmp.eq.f32.partialorder %v1894, 8.507059e+37
        %v1896 = vand.u32 %v1884, 2147483648
        %v1897 = vor.u32 1.1754944e-38, %v1896
        %v1898 = vsel %vm1895, %v1897, %v1893
        %v1899 = vmul.f32 %v1874, %v1898
        %v1900 = vmin.f32 %v1899, 1.0
        %v1901 = vmax.f32 %v1900, -1.0
        %v1902 = vmul.f32 %v863, %v863
        %v1903 = vmin.f32 16.0, %v1902
        %v1904 = vmul.f32 %v1903, 2.1237322e-06
        %v1905 = vadd.f32 %v1904, 0.00028619796
        %v1906 = vmul.f32 %v1903, %v1905
        %v1907 = vadd.f32 %v1906, 0.0036580483
        %v1908 = vmul.f32 %v1903, %v1907
        %v1909 = vadd.f32 %v1908, 0.05243302
        %v1910 = vmul.f32 %v1903, %v1909
        %v1911 = vadd.f32 %v1910, 0.18741608
        %v1912 = vmul.f32 %v1903, %v1911
        %v1913 = vadd.f32 %v1912, 1.1283791
        %v1914 = vmul.f32 %v863, %v1913
        %v1915 = vmul.f32 %v1903, 3.8918573e-05
        %v1916 = vadd.f32 %v1915, 0.001143296
        %v1917 = vmul.f32 %v1903, %v1916
        %v1918 = vadd.f32 %v1917, 0.014752088
        %v1919 = vmul.f32 %v1903, %v1918
        %v1920 = vadd.f32 %v1919, 0.112945676
        %v1921 = vmul.f32 %v1903, %v1920
        %v1922 = vadd.f32 %v1921, 0.4994258
        %v1923 = vmul.f32 %v1903, %v1922
        %v1924 = vadd.f32 %v1923, 1.0
        %v1925 = vrcp.pop %v1924
        %v1926 = vmul.f32 %v1924, %v1925
        %v1927 = vsub.f32 1.0, %v1926
        %v1928 = vmul.f32 %v1925, %v1927
        %v1929 = vadd.f32 %v1925, %v1928
        %vm1930 = vweird.f32 %v1924
        %vm1931 = vweird.f32 %v1925
        %vm1932 = vmor %vm1930, %vm1931
        %v1933 = vsel %vm1932, %v1925, %v1929
        %v1934 = vand.u32 2147483647, %v1924
        %vm1935 = vcmp.eq.f32.partialorder %v1934, 8.507059e+37
        %v1936 = vand.u32 %v1924, 2147483648
        %v1937 = vor.u32 1.1754944e-38, %v1936
        %v1938 = vsel %vm1935, %v1937, %v1933
        %v1939 = vmul.f32 %v1914, %v1938
        %v1940 = vmin.f32 %v1939, 1.0
        %v1941 = vmax.f32 %v1940, -1.0
        %v1942 = vmul.f32 %v864, %v864
        %v1943 = vmin.f32 16.0, %v1942
        %v1944 = vmul.f32 %v1943, 2.1237322e-06
        %v1945 = vadd.f32 %v1944, 0.00028619796
        %v1946 = vmul.f32 %v1943, %v1945
        %v1947 = vadd.f32 %v1946, 0.0036580483
        %v1948 = vmul.f32 %v1943, %v1947
        %v1949 = vadd.f32 %v1948, 0.05243302
        %v1950 = vmul.f32 %v1943, %v1949
        %v1951 = vadd.f32 %v1950, 0.18741608
        %v1952 = vmul.f32 %v1943, %v1951
        %v1953 = vadd.f32 %v1952, 1.1283791
        %v1954 = vmul.f32 %v864, %v1953
        %v1955 = vmul.f32 %v1943, 3.8918573e-05
        %v1956 = vadd.f32 %v1955, 0.001143296
        %v1957 = vmul.f32 %v1943, %v1956
        %v1958 = vadd.f32 %v1957, 0.014752088
        %v1959 = vmul.f32 %v1943, %v1958
        %v1960 = vadd.f32 %v1959, 0.112945676
        %v1961 = vmul.f32 %v1943, %v1960
        %v1962 = vadd.f32 %v1961, 0.4994258
        %v1963 = vmul.f32 %v1943, %v1962
        %v1964 = vadd.f32 %v1963, 1.0
        %v1965 = vrcp.pop %v1964
        %v1966 = vmul.f32 %v1964, %v1965
        %v1967 = vsub.f32 1.0, %v1966
        %v1968 = vmul.f32 %v1965, %v1967
        %v1969 = vadd.f32 %v1965, %v1968
        %vm1970 = vweird.f32 %v1964
        %vm1971 = vweird.f32 %v1965
        %vm1972 = vmor %vm1970, %vm1971
        %v1973 = vsel %vm1972, %v1965, %v1969
        %v1974 = vand.u32 2147483647, %v1964
        %vm1975 = vcmp.eq.f32.partialorder %v1974, 8.507059e+37
        %v1976 = vand.u32 %v1964, 2147483648
        %v1977 = vor.u32 1.1754944e-38, %v1976
        %v1978 = vsel %vm1975, %v1977, %v1973
        %v1979 = vmul.f32 %v1954, %v1978
        %v1980 = vmin.f32 %v1979, 1.0
        %v1981 = vmax.f32 %v1980, -1.0
        %v1982 = vmul.f32 %v865, %v865
        %v1983 = vmin.f32 16.0, %v1982
        %v1984 = vmul.f32 %v1983, 2.1237322e-06
        %v1985 = vadd.f32 %v1984, 0.00028619796
        %v1986 = vmul.f32 %v1983, %v1985
        %v1987 = vadd.f32 %v1986, 0.0036580483
        %v1988 = vmul.f32 %v1983, %v1987
        %v1989 = vadd.f32 %v1988, 0.05243302
        %v1990 = vmul.f32 %v1983, %v1989
        %v1991 = vadd.f32 %v1990, 0.18741608
        %v1992 = vmul.f32 %v1983, %v1991
        %v1993 = vadd.f32 %v1992, 1.1283791
        %v1994 = vmul.f32 %v865, %v1993
        %v1995 = vmul.f32 %v1983, 3.8918573e-05
        %v1996 = vadd.f32 %v1995, 0.001143296
        %v1997 = vmul.f32 %v1983, %v1996
        %v1998 = vadd.f32 %v1997, 0.014752088
        %v1999 = vmul.f32 %v1983, %v1998
        %v2000 = vadd.f32 %v1999, 0.112945676
        %v2001 = vmul.f32 %v1983, %v2000
        %v2002 = vadd.f32 %v2001, 0.4994258
        %v2003 = vmul.f32 %v1983, %v2002
        %v2004 = vadd.f32 %v2003, 1.0
        %v2005 = vrcp.pop %v2004
        %v2006 = vmul.f32 %v2004, %v2005
        %v2007 = vsub.f32 1.0, %v2006
        %v2008 = vmul.f32 %v2005, %v2007
        %v2009 = vadd.f32 %v2005, %v2008
        %vm2010 = vweird.f32 %v2004
        %vm2011 = vweird.f32 %v2005
        %vm2012 = vmor %vm2010, %vm2011
        %v2013 = vsel %vm2012, %v2005, %v2009
        %v2014 = vand.u32 2147483647, %v2004
        %vm2015 = vcmp.eq.f32.partialorder %v2014, 8.507059e+37
        %v2016 = vand.u32 %v2004, 2147483648
        %v2017 = vor.u32 1.1754944e-38, %v2016
        %v2018 = vsel %vm2015, %v2017, %v2013
        %v2019 = vmul.f32 %v1994, %v2018
        %v2020 = vmin.f32 %v2019, 1.0
        %v2021 = vmax.f32 %v2020, -1.0
        %v2022 = vmul.f32 %v866, %v866
        %v2023 = vmin.f32 16.0, %v2022
        %v2024 = vmul.f32 %v2023, 2.1237322e-06
        %v2025 = vadd.f32 %v2024, 0.00028619796
        %v2026 = vmul.f32 %v2023, %v2025
        %v2027 = vadd.f32 %v2026, 0.0036580483
        %v2028 = vmul.f32 %v2023, %v2027
        %v2029 = vadd.f32 %v2028, 0.05243302
        %v2030 = vmul.f32 %v2023, %v2029
        %v2031 = vadd.f32 %v2030, 0.18741608
        %v2032 = vmul.f32 %v2023, %v2031
        %v2033 = vadd.f32 %v2032, 1.1283791
        %v2034 = vmul.f32 %v866, %v2033
        %v2035 = vmul.f32 %v2023, 3.8918573e-05
        %v2036 = vadd.f32 %v2035, 0.001143296
        %v2037 = vmul.f32 %v2023, %v2036
        %v2038 = vadd.f32 %v2037, 0.014752088
        %v2039 = vmul.f32 %v2023, %v2038
        %v2040 = vadd.f32 %v2039, 0.112945676
        %v2041 = vmul.f32 %v2023, %v2040
        %v2042 = vadd.f32 %v2041, 0.4994258
        %v2043 = vmul.f32 %v2023, %v2042
        %v2044 = vadd.f32 %v2043, 1.0
        %v2045 = vrcp.pop %v2044
        %v2046 = vmul.f32 %v2044, %v2045
        %v2047 = vsub.f32 1.0, %v2046
        %v2048 = vmul.f32 %v2045, %v2047
        %v2049 = vadd.f32 %v2045, %v2048
        %vm2050 = vweird.f32 %v2044
        %vm2051 = vweird.f32 %v2045
        %vm2052 = vmor %vm2050, %vm2051
        %v2053 = vsel %vm2052, %v2045, %v2049
        %v2054 = vand.u32 2147483647, %v2044
        %vm2055 = vcmp.eq.f32.partialorder %v2054, 8.507059e+37
        %v2056 = vand.u32 %v2044, 2147483648
        %v2057 = vor.u32 1.1754944e-38, %v2056
        %v2058 = vsel %vm2055, %v2057, %v2053
        %v2059 = vmul.f32 %v2034, %v2058
        %v2060 = vmin.f32 %v2059, 1.0
        %v2061 = vmax.f32 %v2060, -1.0
        %v2062 = vmul.f32 %v867, %v867
        %v2063 = vmin.f32 16.0, %v2062
        %v2064 = vmul.f32 %v2063, 2.1237322e-06
        %v2065 = vadd.f32 %v2064, 0.00028619796
        %v2066 = vmul.f32 %v2063, %v2065
        %v2067 = vadd.f32 %v2066, 0.0036580483
        %v2068 = vmul.f32 %v2063, %v2067
        %v2069 = vadd.f32 %v2068, 0.05243302
        %v2070 = vmul.f32 %v2063, %v2069
        %v2071 = vadd.f32 %v2070, 0.18741608
        %v2072 = vmul.f32 %v2063, %v2071
        %v2073 = vadd.f32 %v2072, 1.1283791
        %v2074 = vmul.f32 %v867, %v2073
        %v2075 = vmul.f32 %v2063, 3.8918573e-05
        %v2076 = vadd.f32 %v2075, 0.001143296
        %v2077 = vmul.f32 %v2063, %v2076
        %v2078 = vadd.f32 %v2077, 0.014752088
        %v2079 = vmul.f32 %v2063, %v2078
        %v2080 = vadd.f32 %v2079, 0.112945676
        %v2081 = vmul.f32 %v2063, %v2080
        %v2082 = vadd.f32 %v2081, 0.4994258
        %v2083 = vmul.f32 %v2063, %v2082
        %v2084 = vadd.f32 %v2083, 1.0
        %v2085 = vrcp.pop %v2084
        %v2086 = vmul.f32 %v2084, %v2085
        %v2087 = vsub.f32 1.0, %v2086
        %v2088 = vmul.f32 %v2085, %v2087
        %v2089 = vadd.f32 %v2085, %v2088
        %vm2090 = vweird.f32 %v2084
        %vm2091 = vweird.f32 %v2085
        %vm2092 = vmor %vm2090, %vm2091
        %v2093 = vsel %vm2092, %v2085, %v2089
        %v2094 = vand.u32 2147483647, %v2084
        %vm2095 = vcmp.eq.f32.partialorder %v2094, 8.507059e+37
        %v2096 = vand.u32 %v2084, 2147483648
        %v2097 = vor.u32 1.1754944e-38, %v2096
        %v2098 = vsel %vm2095, %v2097, %v2093
        %v2099 = vmul.f32 %v2074, %v2098
        %v2100 = vmin.f32 %v2099, 1.0
        %v2101 = vmax.f32 %v2100, -1.0
        %v2102 = vmul.f32 %v868, %v868
        %v2103 = vmin.f32 16.0, %v2102
        %v2104 = vmul.f32 %v2103, 2.1237322e-06
        %v2105 = vadd.f32 %v2104, 0.00028619796
        %v2106 = vmul.f32 %v2103, %v2105
        %v2107 = vadd.f32 %v2106, 0.0036580483
        %v2108 = vmul.f32 %v2103, %v2107
        %v2109 = vadd.f32 %v2108, 0.05243302
        %v2110 = vmul.f32 %v2103, %v2109
        %v2111 = vadd.f32 %v2110, 0.18741608
        %v2112 = vmul.f32 %v2103, %v2111
        %v2113 = vadd.f32 %v2112, 1.1283791
        %v2114 = vmul.f32 %v868, %v2113
        %v2115 = vmul.f32 %v2103, 3.8918573e-05
        %v2116 = vadd.f32 %v2115, 0.001143296
        %v2117 = vmul.f32 %v2103, %v2116
        %v2118 = vadd.f32 %v2117, 0.014752088
        %v2119 = vmul.f32 %v2103, %v2118
        %v2120 = vadd.f32 %v2119, 0.112945676
        %v2121 = vmul.f32 %v2103, %v2120
        %v2122 = vadd.f32 %v2121, 0.4994258
        %v2123 = vmul.f32 %v2103, %v2122
        %v2124 = vadd.f32 %v2123, 1.0
        %v2125 = vrcp.pop %v2124
        %v2126 = vmul.f32 %v2124, %v2125
        %v2127 = vsub.f32 1.0, %v2126
        %v2128 = vmul.f32 %v2125, %v2127
        %v2129 = vadd.f32 %v2125, %v2128
        %vm2130 = vweird.f32 %v2124
        %vm2131 = vweird.f32 %v2125
        %vm2132 = vmor %vm2130, %vm2131
        %v2133 = vsel %vm2132, %v2125, %v2129
        %v2134 = vand.u32 2147483647, %v2124
        %vm2135 = vcmp.eq.f32.partialorder %v2134, 8.507059e+37
        %v2136 = vand.u32 %v2124, 2147483648
        %v2137 = vor.u32 1.1754944e-38, %v2136
        %v2138 = vsel %vm2135, %v2137, %v2133
        %v2139 = vmul.f32 %v2114, %v2138
        %v2140 = vmin.f32 %v2139, 1.0
        %v2141 = vmax.f32 %v2140, -1.0
        %v2142 = vmul.f32 %v869, %v869
        %v2143 = vmin.f32 16.0, %v2142
        %v2144 = vmul.f32 %v2143, 2.1237322e-06
        %v2145 = vadd.f32 %v2144, 0.00028619796
        %v2146 = vmul.f32 %v2143, %v2145
        %v2147 = vadd.f32 %v2146, 0.0036580483
        %v2148 = vmul.f32 %v2143, %v2147
        %v2149 = vadd.f32 %v2148, 0.05243302
        %v2150 = vmul.f32 %v2143, %v2149
        %v2151 = vadd.f32 %v2150, 0.18741608
        %v2152 = vmul.f32 %v2143, %v2151
        %v2153 = vadd.f32 %v2152, 1.1283791
        %v2154 = vmul.f32 %v869, %v2153
        %v2155 = vmul.f32 %v2143, 3.8918573e-05
        %v2156 = vadd.f32 %v2155, 0.001143296
        %v2157 = vmul.f32 %v2143, %v2156
        %v2158 = vadd.f32 %v2157, 0.014752088
        %v2159 = vmul.f32 %v2143, %v2158
        %v2160 = vadd.f32 %v2159, 0.112945676
        %v2161 = vmul.f32 %v2143, %v2160
        %v2162 = vadd.f32 %v2161, 0.4994258
        %v2163 = vmul.f32 %v2143, %v2162
        %v2164 = vadd.f32 %v2163, 1.0
        %v2165 = vrcp.pop %v2164
        %v2166 = vmul.f32 %v2164, %v2165
        %v2167 = vsub.f32 1.0, %v2166
        %v2168 = vmul.f32 %v2165, %v2167
        %v2169 = vadd.f32 %v2165, %v2168
        %vm2170 = vweird.f32 %v2164
        %vm2171 = vweird.f32 %v2165
        %vm2172 = vmor %vm2170, %vm2171
        %v2173 = vsel %vm2172, %v2165, %v2169
        %v2174 = vand.u32 2147483647, %v2164
        %vm2175 = vcmp.eq.f32.partialorder %v2174, 8.507059e+37
        %v2176 = vand.u32 %v2164, 2147483648
        %v2177 = vor.u32 1.1754944e-38, %v2176
        %v2178 = vsel %vm2175, %v2177, %v2173
        %v2179 = vmul.f32 %v2154, %v2178
        %v2180 = vmin.f32 %v2179, 1.0
        %v2181 = vmax.f32 %v2180, -1.0
        %v2182 = vmul.f32 %v870, %v870
        %v2183 = vmin.f32 16.0, %v2182
        %v2184 = vmul.f32 %v2183, 2.1237322e-06
        %v2185 = vadd.f32 %v2184, 0.00028619796
        %v2186 = vmul.f32 %v2183, %v2185
        %v2187 = vadd.f32 %v2186, 0.0036580483
        %v2188 = vmul.f32 %v2183, %v2187
        %v2189 = vadd.f32 %v2188, 0.05243302
        %v2190 = vmul.f32 %v2183, %v2189
        %v2191 = vadd.f32 %v2190, 0.18741608
        %v2192 = vmul.f32 %v2183, %v2191
        %v2193 = vadd.f32 %v2192, 1.1283791
        %v2194 = vmul.f32 %v870, %v2193
        %v2195 = vmul.f32 %v2183, 3.8918573e-05
        %v2196 = vadd.f32 %v2195, 0.001143296
        %v2197 = vmul.f32 %v2183, %v2196
        %v2198 = vadd.f32 %v2197, 0.014752088
        %v2199 = vmul.f32 %v2183, %v2198
        %v2200 = vadd.f32 %v2199, 0.112945676
        %v2201 = vmul.f32 %v2183, %v2200
        %v2202 = vadd.f32 %v2201, 0.4994258
        %v2203 = vmul.f32 %v2183, %v2202
        %v2204 = vadd.f32 %v2203, 1.0
        %v2205 = vrcp.pop %v2204
        %v2206 = vmul.f32 %v2204, %v2205
        %v2207 = vsub.f32 1.0, %v2206
        %v2208 = vmul.f32 %v2205, %v2207
        %v2209 = vadd.f32 %v2205, %v2208
        %vm2210 = vweird.f32 %v2204
        %vm2211 = vweird.f32 %v2205
        %vm2212 = vmor %vm2210, %vm2211
        %v2213 = vsel %vm2212, %v2205, %v2209
        %v2214 = vand.u32 2147483647, %v2204
        %vm2215 = vcmp.eq.f32.partialorder %v2214, 8.507059e+37
        %v2216 = vand.u32 %v2204, 2147483648
        %v2217 = vor.u32 1.1754944e-38, %v2216
        %v2218 = vsel %vm2215, %v2217, %v2213
        %v2219 = vmul.f32 %v2194, %v2218
        %v2220 = vmin.f32 %v2219, 1.0
        %v2221 = vmax.f32 %v2220, -1.0
        %v2222 = vmul.f32 %v871, %v871
        %v2223 = vmin.f32 16.0, %v2222
        %v2224 = vmul.f32 %v2223, 2.1237322e-06
        %v2225 = vadd.f32 %v2224, 0.00028619796
        %v2226 = vmul.f32 %v2223, %v2225
        %v2227 = vadd.f32 %v2226, 0.0036580483
        %v2228 = vmul.f32 %v2223, %v2227
        %v2229 = vadd.f32 %v2228, 0.05243302
        %v2230 = vmul.f32 %v2223, %v2229
        %v2231 = vadd.f32 %v2230, 0.18741608
        %v2232 = vmul.f32 %v2223, %v2231
        %v2233 = vadd.f32 %v2232, 1.1283791
        %v2234 = vmul.f32 %v871, %v2233
        %v2235 = vmul.f32 %v2223, 3.8918573e-05
        %v2236 = vadd.f32 %v2235, 0.001143296
        %v2237 = vmul.f32 %v2223, %v2236
        %v2238 = vadd.f32 %v2237, 0.014752088
        %v2239 = vmul.f32 %v2223, %v2238
        %v2240 = vadd.f32 %v2239, 0.112945676
        %v2241 = vmul.f32 %v2223, %v2240
        %v2242 = vadd.f32 %v2241, 0.4994258
        %v2243 = vmul.f32 %v2223, %v2242
        %v2244 = vadd.f32 %v2243, 1.0
        %v2245 = vrcp.pop %v2244
        %v2246 = vmul.f32 %v2244, %v2245
        %v2247 = vsub.f32 1.0, %v2246
        %v2248 = vmul.f32 %v2245, %v2247
        %v2249 = vadd.f32 %v2245, %v2248
        %vm2250 = vweird.f32 %v2244
        %vm2251 = vweird.f32 %v2245
        %vm2252 = vmor %vm2250, %vm2251
        %v2253 = vsel %vm2252, %v2245, %v2249
        %v2254 = vand.u32 2147483647, %v2244
        %vm2255 = vcmp.eq.f32.partialorder %v2254, 8.507059e+37
        %v2256 = vand.u32 %v2244, 2147483648
        %v2257 = vor.u32 1.1754944e-38, %v2256
        %v2258 = vsel %vm2255, %v2257, %v2253
        %v2259 = vmul.f32 %v2234, %v2258
        %v2260 = vmin.f32 %v2259, 1.0
        %v2261 = vmax.f32 %v2260, -1.0
        %v2262 = vmul.f32 %v872, %v872
        %v2263 = vmin.f32 16.0, %v2262
        %v2264 = vmul.f32 %v2263, 2.1237322e-06
        %v2265 = vadd.f32 %v2264, 0.00028619796
        %v2266 = vmul.f32 %v2263, %v2265
        %v2267 = vadd.f32 %v2266, 0.0036580483
        %v2268 = vmul.f32 %v2263, %v2267
        %v2269 = vadd.f32 %v2268, 0.05243302
        %v2270 = vmul.f32 %v2263, %v2269
        %v2271 = vadd.f32 %v2270, 0.18741608
        %v2272 = vmul.f32 %v2263, %v2271
        %v2273 = vadd.f32 %v2272, 1.1283791
        %v2274 = vmul.f32 %v872, %v2273
        %v2275 = vmul.f32 %v2263, 3.8918573e-05
        %v2276 = vadd.f32 %v2275, 0.001143296
        %v2277 = vmul.f32 %v2263, %v2276
        %v2278 = vadd.f32 %v2277, 0.014752088
        %v2279 = vmul.f32 %v2263, %v2278
        %v2280 = vadd.f32 %v2279, 0.112945676
        %v2281 = vmul.f32 %v2263, %v2280
        %v2282 = vadd.f32 %v2281, 0.4994258
        %v2283 = vmul.f32 %v2263, %v2282
        %v2284 = vadd.f32 %v2283, 1.0
        %v2285 = vrcp.pop %v2284
        %v2286 = vmul.f32 %v2284, %v2285
        %v2287 = vsub.f32 1.0, %v2286
        %v2288 = vmul.f32 %v2285, %v2287
        %v2289 = vadd.f32 %v2285, %v2288
        %vm2290 = vweird.f32 %v2284
        %vm2291 = vweird.f32 %v2285
        %vm2292 = vmor %vm2290, %vm2291
        %v2293 = vsel %vm2292, %v2285, %v2289
        %v2294 = vand.u32 2147483647, %v2284
        %vm2295 = vcmp.eq.f32.partialorder %v2294, 8.507059e+37
        %v2296 = vand.u32 %v2284, 2147483648
        %v2297 = vor.u32 1.1754944e-38, %v2296
        %v2298 = vsel %vm2295, %v2297, %v2293
        %v2299 = vmul.f32 %v2274, %v2298
        %v2300 = vmin.f32 %v2299, 1.0
        %v2301 = vmax.f32 %v2300, -1.0
        %v2302 = vmul.f32 %v873, %v873
        %v2303 = vmin.f32 16.0, %v2302
        %v2304 = vmul.f32 %v2303, 2.1237322e-06
        %v2305 = vadd.f32 %v2304, 0.00028619796
        %v2306 = vmul.f32 %v2303, %v2305
        %v2307 = vadd.f32 %v2306, 0.0036580483
        %v2308 = vmul.f32 %v2303, %v2307
        %v2309 = vadd.f32 %v2308, 0.05243302
        %v2310 = vmul.f32 %v2303, %v2309
        %v2311 = vadd.f32 %v2310, 0.18741608
        %v2312 = vmul.f32 %v2303, %v2311
        %v2313 = vadd.f32 %v2312, 1.1283791
        %v2314 = vmul.f32 %v873, %v2313
        %v2315 = vmul.f32 %v2303, 3.8918573e-05
        %v2316 = vadd.f32 %v2315, 0.001143296
        %v2317 = vmul.f32 %v2303, %v2316
        %v2318 = vadd.f32 %v2317, 0.014752088
        %v2319 = vmul.f32 %v2303, %v2318
        %v2320 = vadd.f32 %v2319, 0.112945676
        %v2321 = vmul.f32 %v2303, %v2320
        %v2322 = vadd.f32 %v2321, 0.4994258
        %v2323 = vmul.f32 %v2303, %v2322
        %v2324 = vadd.f32 %v2323, 1.0
        %v2325 = vrcp.pop %v2324
        %v2326 = vmul.f32 %v2324, %v2325
        %v2327 = vsub.f32 1.0, %v2326
        %v2328 = vmul.f32 %v2325, %v2327
        %v2329 = vadd.f32 %v2325, %v2328
        %vm2330 = vweird.f32 %v2324
        %vm2331 = vweird.f32 %v2325
        %vm2332 = vmor %vm2330, %vm2331
        %v2333 = vsel %vm2332, %v2325, %v2329
        %v2334 = vand.u32 2147483647, %v2324
        %vm2335 = vcmp.eq.f32.partialorder %v2334, 8.507059e+37
        %v2336 = vand.u32 %v2324, 2147483648
        %v2337 = vor.u32 1.1754944e-38, %v2336
        %v2338 = vsel %vm2335, %v2337, %v2333
        %v2339 = vmul.f32 %v2314, %v2338
        %v2340 = vmin.f32 %v2339, 1.0
        %v2341 = vmax.f32 %v2340, -1.0
        %v2342 = vmul.f32 %v874, %v874
        %v2343 = vmin.f32 16.0, %v2342
        %v2344 = vmul.f32 %v2343, 2.1237322e-06
        %v2345 = vadd.f32 %v2344, 0.00028619796
        %v2346 = vmul.f32 %v2343, %v2345
        %v2347 = vadd.f32 %v2346, 0.0036580483
        %v2348 = vmul.f32 %v2343, %v2347
        %v2349 = vadd.f32 %v2348, 0.05243302
        %v2350 = vmul.f32 %v2343, %v2349
        %v2351 = vadd.f32 %v2350, 0.18741608
        %v2352 = vmul.f32 %v2343, %v2351
        %v2353 = vadd.f32 %v2352, 1.1283791
        %v2354 = vmul.f32 %v874, %v2353
        %v2355 = vmul.f32 %v2343, 3.8918573e-05
        %v2356 = vadd.f32 %v2355, 0.001143296
        %v2357 = vmul.f32 %v2343, %v2356
        %v2358 = vadd.f32 %v2357, 0.014752088
        %v2359 = vmul.f32 %v2343, %v2358
        %v2360 = vadd.f32 %v2359, 0.112945676
        %v2361 = vmul.f32 %v2343, %v2360
        %v2362 = vadd.f32 %v2361, 0.4994258
        %v2363 = vmul.f32 %v2343, %v2362
        %v2364 = vadd.f32 %v2363, 1.0
        %v2365 = vrcp.pop %v2364
        %v2366 = vmul.f32 %v2364, %v2365
        %v2367 = vsub.f32 1.0, %v2366
        %v2368 = vmul.f32 %v2365, %v2367
        %v2369 = vadd.f32 %v2365, %v2368
        %vm2370 = vweird.f32 %v2364
        %vm2371 = vweird.f32 %v2365
        %vm2372 = vmor %vm2370, %vm2371
        %v2373 = vsel %vm2372, %v2365, %v2369
        %v2374 = vand.u32 2147483647, %v2364
        %vm2375 = vcmp.eq.f32.partialorder %v2374, 8.507059e+37
        %v2376 = vand.u32 %v2364, 2147483648
        %v2377 = vor.u32 1.1754944e-38, %v2376
        %v2378 = vsel %vm2375, %v2377, %v2373
        %v2379 = vmul.f32 %v2354, %v2378
        %v2380 = vmin.f32 %v2379, 1.0
        %v2381 = vmax.f32 %v2380, -1.0
        %v2382 = vmul.f32 %v875, %v875
        %v2383 = vmin.f32 16.0, %v2382
        %v2384 = vmul.f32 %v2383, 2.1237322e-06
        %v2385 = vadd.f32 %v2384, 0.00028619796
        %v2386 = vmul.f32 %v2383, %v2385
        %v2387 = vadd.f32 %v2386, 0.0036580483
        %v2388 = vmul.f32 %v2383, %v2387
        %v2389 = vadd.f32 %v2388, 0.05243302
        %v2390 = vmul.f32 %v2383, %v2389
        %v2391 = vadd.f32 %v2390, 0.18741608
        %v2392 = vmul.f32 %v2383, %v2391
        %v2393 = vadd.f32 %v2392, 1.1283791
        %v2394 = vmul.f32 %v875, %v2393
        %v2395 = vmul.f32 %v2383, 3.8918573e-05
        %v2396 = vadd.f32 %v2395, 0.001143296
        %v2397 = vmul.f32 %v2383, %v2396
        %v2398 = vadd.f32 %v2397, 0.014752088
        %v2399 = vmul.f32 %v2383, %v2398
        %v2400 = vadd.f32 %v2399, 0.112945676
        %v2401 = vmul.f32 %v2383, %v2400
        %v2402 = vadd.f32 %v2401, 0.4994258
        %v2403 = vmul.f32 %v2383, %v2402
        %v2404 = vadd.f32 %v2403, 1.0
        %v2405 = vrcp.pop %v2404
        %v2406 = vmul.f32 %v2404, %v2405
        %v2407 = vsub.f32 1.0, %v2406
        %v2408 = vmul.f32 %v2405, %v2407
        %v2409 = vadd.f32 %v2405, %v2408
        %vm2410 = vweird.f32 %v2404
        %vm2411 = vweird.f32 %v2405
        %vm2412 = vmor %vm2410, %vm2411
        %v2413 = vsel %vm2412, %v2405, %v2409
        %v2414 = vand.u32 2147483647, %v2404
        %vm2415 = vcmp.eq.f32.partialorder %v2414, 8.507059e+37
        %v2416 = vand.u32 %v2404, 2147483648
        %v2417 = vor.u32 1.1754944e-38, %v2416
        %v2418 = vsel %vm2415, %v2417, %v2413
        %v2419 = vmul.f32 %v2394, %v2418
        %v2420 = vmin.f32 %v2419, 1.0
        %v2421 = vmax.f32 %v2420, -1.0
        %v2422 = vmul.f32 %v876, %v876
        %v2423 = vmin.f32 16.0, %v2422
        %v2424 = vmul.f32 %v2423, 2.1237322e-06
        %v2425 = vadd.f32 %v2424, 0.00028619796
        %v2426 = vmul.f32 %v2423, %v2425
        %v2427 = vadd.f32 %v2426, 0.0036580483
        %v2428 = vmul.f32 %v2423, %v2427
        %v2429 = vadd.f32 %v2428, 0.05243302
        %v2430 = vmul.f32 %v2423, %v2429
        %v2431 = vadd.f32 %v2430, 0.18741608
        %v2432 = vmul.f32 %v2423, %v2431
        %v2433 = vadd.f32 %v2432, 1.1283791
        %v2434 = vmul.f32 %v876, %v2433
        %v2435 = vmul.f32 %v2423, 3.8918573e-05
        %v2436 = vadd.f32 %v2435, 0.001143296
        %v2437 = vmul.f32 %v2423, %v2436
        %v2438 = vadd.f32 %v2437, 0.014752088
        %v2439 = vmul.f32 %v2423, %v2438
        %v2440 = vadd.f32 %v2439, 0.112945676
        %v2441 = vmul.f32 %v2423, %v2440
        %v2442 = vadd.f32 %v2441, 0.4994258
        %v2443 = vmul.f32 %v2423, %v2442
        %v2444 = vadd.f32 %v2443, 1.0
        %v2445 = vrcp.pop %v2444
        %v2446 = vmul.f32 %v2444, %v2445
        %v2447 = vsub.f32 1.0, %v2446
        %v2448 = vmul.f32 %v2445, %v2447
        %v2449 = vadd.f32 %v2445, %v2448
        %vm2450 = vweird.f32 %v2444
        %vm2451 = vweird.f32 %v2445
        %vm2452 = vmor %vm2450, %vm2451
        %v2453 = vsel %vm2452, %v2445, %v2449
        %v2454 = vand.u32 2147483647, %v2444
        %vm2455 = vcmp.eq.f32.partialorder %v2454, 8.507059e+37
        %v2456 = vand.u32 %v2444, 2147483648
        %v2457 = vor.u32 1.1754944e-38, %v2456
        %v2458 = vsel %vm2455, %v2457, %v2453
        %v2459 = vmul.f32 %v2434, %v2458
        %v2460 = vmin.f32 %v2459, 1.0
        %v2461 = vmax.f32 %v2460, -1.0
        %v2462 = vmul.f32 %v877, %v877
        %v2463 = vmin.f32 16.0, %v2462
        %v2464 = vmul.f32 %v2463, 2.1237322e-06
        %v2465 = vadd.f32 %v2464, 0.00028619796
        %v2466 = vmul.f32 %v2463, %v2465
        %v2467 = vadd.f32 %v2466, 0.0036580483
        %v2468 = vmul.f32 %v2463, %v2467
        %v2469 = vadd.f32 %v2468, 0.05243302
        %v2470 = vmul.f32 %v2463, %v2469
        %v2471 = vadd.f32 %v2470, 0.18741608
        %v2472 = vmul.f32 %v2463, %v2471
        %v2473 = vadd.f32 %v2472, 1.1283791
        %v2474 = vmul.f32 %v877, %v2473
        %v2475 = vmul.f32 %v2463, 3.8918573e-05
        %v2476 = vadd.f32 %v2475, 0.001143296
        %v2477 = vmul.f32 %v2463, %v2476
        %v2478 = vadd.f32 %v2477, 0.014752088
        %v2479 = vmul.f32 %v2463, %v2478
        %v2480 = vadd.f32 %v2479, 0.112945676
        %v2481 = vmul.f32 %v2463, %v2480
        %v2482 = vadd.f32 %v2481, 0.4994258
        %v2483 = vmul.f32 %v2463, %v2482
        %v2484 = vadd.f32 %v2483, 1.0
        %v2485 = vrcp.pop %v2484
        %v2486 = vmul.f32 %v2484, %v2485
        %v2487 = vsub.f32 1.0, %v2486
        %v2488 = vmul.f32 %v2485, %v2487
        %v2489 = vadd.f32 %v2485, %v2488
        %vm2490 = vweird.f32 %v2484
        %vm2491 = vweird.f32 %v2485
        %vm2492 = vmor %vm2490, %vm2491
        %v2493 = vsel %vm2492, %v2485, %v2489
        %v2494 = vand.u32 2147483647, %v2484
        %vm2495 = vcmp.eq.f32.partialorder %v2494, 8.507059e+37
        %v2496 = vand.u32 %v2484, 2147483648
        %v2497 = vor.u32 1.1754944e-38, %v2496
        %v2498 = vsel %vm2495, %v2497, %v2493
        %v2499 = vmul.f32 %v2474, %v2498
        %v2500 = vmin.f32 %v2499, 1.0
        %v2501 = vmax.f32 %v2500, -1.0
        %v2502 = vmul.f32 %v878, %v878
        %v2503 = vmin.f32 16.0, %v2502
        %v2504 = vmul.f32 %v2503, 2.1237322e-06
        %v2505 = vadd.f32 %v2504, 0.00028619796
        %v2506 = vmul.f32 %v2503, %v2505
        %v2507 = vadd.f32 %v2506, 0.0036580483
        %v2508 = vmul.f32 %v2503, %v2507
        %v2509 = vadd.f32 %v2508, 0.05243302
        %v2510 = vmul.f32 %v2503, %v2509
        %v2511 = vadd.f32 %v2510, 0.18741608
        %v2512 = vmul.f32 %v2503, %v2511
        %v2513 = vadd.f32 %v2512, 1.1283791
        %v2514 = vmul.f32 %v878, %v2513
        %v2515 = vmul.f32 %v2503, 3.8918573e-05
        %v2516 = vadd.f32 %v2515, 0.001143296
        %v2517 = vmul.f32 %v2503, %v2516
        %v2518 = vadd.f32 %v2517, 0.014752088
        %v2519 = vmul.f32 %v2503, %v2518
        %v2520 = vadd.f32 %v2519, 0.112945676
        %v2521 = vmul.f32 %v2503, %v2520
        %v2522 = vadd.f32 %v2521, 0.4994258
        %v2523 = vmul.f32 %v2503, %v2522
        %v2524 = vadd.f32 %v2523, 1.0
        %v2525 = vrcp.pop %v2524
        %v2526 = vmul.f32 %v2524, %v2525
        %v2527 = vsub.f32 1.0, %v2526
        %v2528 = vmul.f32 %v2525, %v2527
        %v2529 = vadd.f32 %v2525, %v2528
        %vm2530 = vweird.f32 %v2524
        %vm2531 = vweird.f32 %v2525
        %vm2532 = vmor %vm2530, %vm2531
        %v2533 = vsel %vm2532, %v2525, %v2529
        %v2534 = vand.u32 2147483647, %v2524
        %vm2535 = vcmp.eq.f32.partialorder %v2534, 8.507059e+37
        %v2536 = vand.u32 %v2524, 2147483648
        %v2537 = vor.u32 1.1754944e-38, %v2536
        %v2538 = vsel %vm2535, %v2537, %v2533
        %v2539 = vmul.f32 %v2514, %v2538
        %v2540 = vmin.f32 %v2539, 1.0
        %v2541 = vmax.f32 %v2540, -1.0
        %v2542 = vmul.f32 %v879, %v879
        %v2543 = vmin.f32 16.0, %v2542
        %v2544 = vmul.f32 %v2543, 2.1237322e-06
        %v2545 = vadd.f32 %v2544, 0.00028619796
        %v2546 = vmul.f32 %v2543, %v2545
        %v2547 = vadd.f32 %v2546, 0.0036580483
        %v2548 = vmul.f32 %v2543, %v2547
        %v2549 = vadd.f32 %v2548, 0.05243302
        %v2550 = vmul.f32 %v2543, %v2549
        %v2551 = vadd.f32 %v2550, 0.18741608
        %v2552 = vmul.f32 %v2543, %v2551
        %v2553 = vadd.f32 %v2552, 1.1283791
        %v2554 = vmul.f32 %v879, %v2553
        %v2555 = vmul.f32 %v2543, 3.8918573e-05
        %v2556 = vadd.f32 %v2555, 0.001143296
        %v2557 = vmul.f32 %v2543, %v2556
        %v2558 = vadd.f32 %v2557, 0.014752088
        %v2559 = vmul.f32 %v2543, %v2558
        %v2560 = vadd.f32 %v2559, 0.112945676
        %v2561 = vmul.f32 %v2543, %v2560
        %v2562 = vadd.f32 %v2561, 0.4994258
        %v2563 = vmul.f32 %v2543, %v2562
        %v2564 = vadd.f32 %v2563, 1.0
        %v2565 = vrcp.pop %v2564
        %v2566 = vmul.f32 %v2564, %v2565
        %v2567 = vsub.f32 1.0, %v2566
        %v2568 = vmul.f32 %v2565, %v2567
        %v2569 = vadd.f32 %v2565, %v2568
        %vm2570 = vweird.f32 %v2564
        %vm2571 = vweird.f32 %v2565
        %vm2572 = vmor %vm2570, %vm2571
        %v2573 = vsel %vm2572, %v2565, %v2569
        %v2574 = vand.u32 2147483647, %v2564
        %vm2575 = vcmp.eq.f32.partialorder %v2574, 8.507059e+37
        %v2576 = vand.u32 %v2564, 2147483648
        %v2577 = vor.u32 1.1754944e-38, %v2576
        %v2578 = vsel %vm2575, %v2577, %v2573
        %v2579 = vmul.f32 %v2554, %v2578
        %v2580 = vmin.f32 %v2579, 1.0
        %v2581 = vmax.f32 %v2580, -1.0
        %v2582 = vmul.f32 %v880, %v880
        %v2583 = vmin.f32 16.0, %v2582
        %v2584 = vmul.f32 %v2583, 2.1237322e-06
        %v2585 = vadd.f32 %v2584, 0.00028619796
        %v2586 = vmul.f32 %v2583, %v2585
        %v2587 = vadd.f32 %v2586, 0.0036580483
        %v2588 = vmul.f32 %v2583, %v2587
        %v2589 = vadd.f32 %v2588, 0.05243302
        %v2590 = vmul.f32 %v2583, %v2589
        %v2591 = vadd.f32 %v2590, 0.18741608
        %v2592 = vmul.f32 %v2583, %v2591
        %v2593 = vadd.f32 %v2592, 1.1283791
        %v2594 = vmul.f32 %v880, %v2593
        %v2595 = vmul.f32 %v2583, 3.8918573e-05
        %v2596 = vadd.f32 %v2595, 0.001143296
        %v2597 = vmul.f32 %v2583, %v2596
        %v2598 = vadd.f32 %v2597, 0.014752088
        %v2599 = vmul.f32 %v2583, %v2598
        %v2600 = vadd.f32 %v2599, 0.112945676
        %v2601 = vmul.f32 %v2583, %v2600
        %v2602 = vadd.f32 %v2601, 0.4994258
        %v2603 = vmul.f32 %v2583, %v2602
        %v2604 = vadd.f32 %v2603, 1.0
        %v2605 = vrcp.pop %v2604
        %v2606 = vmul.f32 %v2604, %v2605
        %v2607 = vsub.f32 1.0, %v2606
        %v2608 = vmul.f32 %v2605, %v2607
        %v2609 = vadd.f32 %v2605, %v2608
        %vm2610 = vweird.f32 %v2604
        %vm2611 = vweird.f32 %v2605
        %vm2612 = vmor %vm2610, %vm2611
        %v2613 = vsel %vm2612, %v2605, %v2609
        %v2614 = vand.u32 2147483647, %v2604
        %vm2615 = vcmp.eq.f32.partialorder %v2614, 8.507059e+37
        %v2616 = vand.u32 %v2604, 2147483648
        %v2617 = vor.u32 1.1754944e-38, %v2616
        %v2618 = vsel %vm2615, %v2617, %v2613
        %v2619 = vmul.f32 %v2594, %v2618
        %v2620 = vmin.f32 %v2619, 1.0
        %v2621 = vmax.f32 %v2620, -1.0
        %v2622 = vmul.f32 %v881, %v881
        %v2623 = vmin.f32 16.0, %v2622
        %v2624 = vmul.f32 %v2623, 2.1237322e-06
        %v2625 = vadd.f32 %v2624, 0.00028619796
        %v2626 = vmul.f32 %v2623, %v2625
        %v2627 = vadd.f32 %v2626, 0.0036580483
        %v2628 = vmul.f32 %v2623, %v2627
        %v2629 = vadd.f32 %v2628, 0.05243302
        %v2630 = vmul.f32 %v2623, %v2629
        %v2631 = vadd.f32 %v2630, 0.18741608
        %v2632 = vmul.f32 %v2623, %v2631
        %v2633 = vadd.f32 %v2632, 1.1283791
        %v2634 = vmul.f32 %v881, %v2633
        %v2635 = vmul.f32 %v2623, 3.8918573e-05
        %v2636 = vadd.f32 %v2635, 0.001143296
        %v2637 = vmul.f32 %v2623, %v2636
        %v2638 = vadd.f32 %v2637, 0.014752088
        %v2639 = vmul.f32 %v2623, %v2638
        %v2640 = vadd.f32 %v2639, 0.112945676
        %v2641 = vmul.f32 %v2623, %v2640
        %v2642 = vadd.f32 %v2641, 0.4994258
        %v2643 = vmul.f32 %v2623, %v2642
        %v2644 = vadd.f32 %v2643, 1.0
        %v2645 = vrcp.pop %v2644
        %v2646 = vmul.f32 %v2644, %v2645
        %v2647 = vsub.f32 1.0, %v2646
        %v2648 = vmul.f32 %v2645, %v2647
        %v2649 = vadd.f32 %v2645, %v2648
        %vm2650 = vweird.f32 %v2644
        %vm2651 = vweird.f32 %v2645
        %vm2652 = vmor %vm2650, %vm2651
        %v2653 = vsel %vm2652, %v2645, %v2649
        %v2654 = vand.u32 2147483647, %v2644
        %vm2655 = vcmp.eq.f32.partialorder %v2654, 8.507059e+37
        %v2656 = vand.u32 %v2644, 2147483648
        %v2657 = vor.u32 1.1754944e-38, %v2656
        %v2658 = vsel %vm2655, %v2657, %v2653
        %v2659 = vmul.f32 %v2634, %v2658
        %v2660 = vmin.f32 %v2659, 1.0
        %v2661 = vmax.f32 %v2660, -1.0
        %v2662 = vmul.f32 %v882, %v882
        %v2663 = vmin.f32 16.0, %v2662
        %v2664 = vmul.f32 %v2663, 2.1237322e-06
        %v2665 = vadd.f32 %v2664, 0.00028619796
        %v2666 = vmul.f32 %v2663, %v2665
        %v2667 = vadd.f32 %v2666, 0.0036580483
        %v2668 = vmul.f32 %v2663, %v2667
        %v2669 = vadd.f32 %v2668, 0.05243302
        %v2670 = vmul.f32 %v2663, %v2669
        %v2671 = vadd.f32 %v2670, 0.18741608
        %v2672 = vmul.f32 %v2663, %v2671
        %v2673 = vadd.f32 %v2672, 1.1283791
        %v2674 = vmul.f32 %v882, %v2673
        %v2675 = vmul.f32 %v2663, 3.8918573e-05
        %v2676 = vadd.f32 %v2675, 0.001143296
        %v2677 = vmul.f32 %v2663, %v2676
        %v2678 = vadd.f32 %v2677, 0.014752088
        %v2679 = vmul.f32 %v2663, %v2678
        %v2680 = vadd.f32 %v2679, 0.112945676
        %v2681 = vmul.f32 %v2663, %v2680
        %v2682 = vadd.f32 %v2681, 0.4994258
        %v2683 = vmul.f32 %v2663, %v2682
        %v2684 = vadd.f32 %v2683, 1.0
        %v2685 = vrcp.pop %v2684
        %v2686 = vmul.f32 %v2684, %v2685
        %v2687 = vsub.f32 1.0, %v2686
        %v2688 = vmul.f32 %v2685, %v2687
        %v2689 = vadd.f32 %v2685, %v2688
        %vm2690 = vweird.f32 %v2684
        %vm2691 = vweird.f32 %v2685
        %vm2692 = vmor %vm2690, %vm2691
        %v2693 = vsel %vm2692, %v2685, %v2689
        %v2694 = vand.u32 2147483647, %v2684
        %vm2695 = vcmp.eq.f32.partialorder %v2694, 8.507059e+37
        %v2696 = vand.u32 %v2684, 2147483648
        %v2697 = vor.u32 1.1754944e-38, %v2696
        %v2698 = vsel %vm2695, %v2697, %v2693
        %v2699 = vmul.f32 %v2674, %v2698
        %v2700 = vmin.f32 %v2699, 1.0
        %v2701 = vmax.f32 %v2700, -1.0
        %v2702 = vmul.f32 %v883, %v883
        %v2703 = vmin.f32 16.0, %v2702
        %v2704 = vmul.f32 %v2703, 2.1237322e-06
        %v2705 = vadd.f32 %v2704, 0.00028619796
        %v2706 = vmul.f32 %v2703, %v2705
        %v2707 = vadd.f32 %v2706, 0.0036580483
        %v2708 = vmul.f32 %v2703, %v2707
        %v2709 = vadd.f32 %v2708, 0.05243302
        %v2710 = vmul.f32 %v2703, %v2709
        %v2711 = vadd.f32 %v2710, 0.18741608
        %v2712 = vmul.f32 %v2703, %v2711
        %v2713 = vadd.f32 %v2712, 1.1283791
        %v2714 = vmul.f32 %v883, %v2713
        %v2715 = vmul.f32 %v2703, 3.8918573e-05
        %v2716 = vadd.f32 %v2715, 0.001143296
        %v2717 = vmul.f32 %v2703, %v2716
        %v2718 = vadd.f32 %v2717, 0.014752088
        %v2719 = vmul.f32 %v2703, %v2718
        %v2720 = vadd.f32 %v2719, 0.112945676
        %v2721 = vmul.f32 %v2703, %v2720
        %v2722 = vadd.f32 %v2721, 0.4994258
        %v2723 = vmul.f32 %v2703, %v2722
        %v2724 = vadd.f32 %v2723, 1.0
        %v2725 = vrcp.pop %v2724
        %v2726 = vmul.f32 %v2724, %v2725
        %v2727 = vsub.f32 1.0, %v2726
        %v2728 = vmul.f32 %v2725, %v2727
        %v2729 = vadd.f32 %v2725, %v2728
        %vm2730 = vweird.f32 %v2724
        %vm2731 = vweird.f32 %v2725
        %vm2732 = vmor %vm2730, %vm2731
        %v2733 = vsel %vm2732, %v2725, %v2729
        %v2734 = vand.u32 2147483647, %v2724
        %vm2735 = vcmp.eq.f32.partialorder %v2734, 8.507059e+37
        %v2736 = vand.u32 %v2724, 2147483648
        %v2737 = vor.u32 1.1754944e-38, %v2736
        %v2738 = vsel %vm2735, %v2737, %v2733
        %v2739 = vmul.f32 %v2714, %v2738
        %v2740 = vmin.f32 %v2739, 1.0
        %v2741 = vmax.f32 %v2740, -1.0
        %v2742 = vmul.f32 %v884, %v884
        %v2743 = vmin.f32 16.0, %v2742
        %v2744 = vmul.f32 %v2743, 2.1237322e-06
        %v2745 = vadd.f32 %v2744, 0.00028619796
        %v2746 = vmul.f32 %v2743, %v2745
        %v2747 = vadd.f32 %v2746, 0.0036580483
        %v2748 = vmul.f32 %v2743, %v2747
        %v2749 = vadd.f32 %v2748, 0.05243302
        %v2750 = vmul.f32 %v2743, %v2749
        %v2751 = vadd.f32 %v2750, 0.18741608
        %v2752 = vmul.f32 %v2743, %v2751
        %v2753 = vadd.f32 %v2752, 1.1283791
        %v2754 = vmul.f32 %v884, %v2753
        %v2755 = vmul.f32 %v2743, 3.8918573e-05
        %v2756 = vadd.f32 %v2755, 0.001143296
        %v2757 = vmul.f32 %v2743, %v2756
        %v2758 = vadd.f32 %v2757, 0.014752088
        %v2759 = vmul.f32 %v2743, %v2758
        %v2760 = vadd.f32 %v2759, 0.112945676
        %v2761 = vmul.f32 %v2743, %v2760
        %v2762 = vadd.f32 %v2761, 0.4994258
        %v2763 = vmul.f32 %v2743, %v2762
        %v2764 = vadd.f32 %v2763, 1.0
        %v2765 = vrcp.pop %v2764
        %v2766 = vmul.f32 %v2764, %v2765
        %v2767 = vsub.f32 1.0, %v2766
        %v2768 = vmul.f32 %v2765, %v2767
        %v2769 = vadd.f32 %v2765, %v2768
        %vm2770 = vweird.f32 %v2764
        %vm2771 = vweird.f32 %v2765
        %vm2772 = vmor %vm2770, %vm2771
        %v2773 = vsel %vm2772, %v2765, %v2769
        %v2774 = vand.u32 2147483647, %v2764
        %vm2775 = vcmp.eq.f32.partialorder %v2774, 8.507059e+37
        %v2776 = vand.u32 %v2764, 2147483648
        %v2777 = vor.u32 1.1754944e-38, %v2776
        %v2778 = vsel %vm2775, %v2777, %v2773
        %v2779 = vmul.f32 %v2754, %v2778
        %v2780 = vmin.f32 %v2779, 1.0
        %v2781 = vmax.f32 %v2780, -1.0
        %v2782 = vmul.f32 %v885, %v885
        %v2783 = vmin.f32 16.0, %v2782
        %v2784 = vmul.f32 %v2783, 2.1237322e-06
        %v2785 = vadd.f32 %v2784, 0.00028619796
        %v2786 = vmul.f32 %v2783, %v2785
        %v2787 = vadd.f32 %v2786, 0.0036580483
        %v2788 = vmul.f32 %v2783, %v2787
        %v2789 = vadd.f32 %v2788, 0.05243302
        %v2790 = vmul.f32 %v2783, %v2789
        %v2791 = vadd.f32 %v2790, 0.18741608
        %v2792 = vmul.f32 %v2783, %v2791
        %v2793 = vadd.f32 %v2792, 1.1283791
        %v2794 = vmul.f32 %v885, %v2793
        %v2795 = vmul.f32 %v2783, 3.8918573e-05
        %v2796 = vadd.f32 %v2795, 0.001143296
        %v2797 = vmul.f32 %v2783, %v2796
        %v2798 = vadd.f32 %v2797, 0.014752088
        %v2799 = vmul.f32 %v2783, %v2798
        %v2800 = vadd.f32 %v2799, 0.112945676
        %v2801 = vmul.f32 %v2783, %v2800
        %v2802 = vadd.f32 %v2801, 0.4994258
        %v2803 = vmul.f32 %v2783, %v2802
        %v2804 = vadd.f32 %v2803, 1.0
        %v2805 = vrcp.pop %v2804
        %v2806 = vmul.f32 %v2804, %v2805
        %v2807 = vsub.f32 1.0, %v2806
        %v2808 = vmul.f32 %v2805, %v2807
        %v2809 = vadd.f32 %v2805, %v2808
        %vm2810 = vweird.f32 %v2804
        %vm2811 = vweird.f32 %v2805
        %vm2812 = vmor %vm2810, %vm2811
        %v2813 = vsel %vm2812, %v2805, %v2809
        %v2814 = vand.u32 2147483647, %v2804
        %vm2815 = vcmp.eq.f32.partialorder %v2814, 8.507059e+37
        %v2816 = vand.u32 %v2804, 2147483648
        %v2817 = vor.u32 1.1754944e-38, %v2816
        %v2818 = vsel %vm2815, %v2817, %v2813
        %v2819 = vmul.f32 %v2794, %v2818
        %v2820 = vmin.f32 %v2819, 1.0
        %v2821 = vmax.f32 %v2820, -1.0
        %v2822 = vmul.f32 %v886, %v886
        %v2823 = vmin.f32 16.0, %v2822
        %v2824 = vmul.f32 %v2823, 2.1237322e-06
        %v2825 = vadd.f32 %v2824, 0.00028619796
        %v2826 = vmul.f32 %v2823, %v2825
        %v2827 = vadd.f32 %v2826, 0.0036580483
        %v2828 = vmul.f32 %v2823, %v2827
        %v2829 = vadd.f32 %v2828, 0.05243302
        %v2830 = vmul.f32 %v2823, %v2829
        %v2831 = vadd.f32 %v2830, 0.18741608
        %v2832 = vmul.f32 %v2823, %v2831
        %v2833 = vadd.f32 %v2832, 1.1283791
        %v2834 = vmul.f32 %v886, %v2833
        %v2835 = vmul.f32 %v2823, 3.8918573e-05
        %v2836 = vadd.f32 %v2835, 0.001143296
        %v2837 = vmul.f32 %v2823, %v2836
        %v2838 = vadd.f32 %v2837, 0.014752088
        %v2839 = vmul.f32 %v2823, %v2838
        %v2840 = vadd.f32 %v2839, 0.112945676
        %v2841 = vmul.f32 %v2823, %v2840
        %v2842 = vadd.f32 %v2841, 0.4994258
        %v2843 = vmul.f32 %v2823, %v2842
        %v2844 = vadd.f32 %v2843, 1.0
        %v2845 = vrcp.pop %v2844
        %v2846 = vmul.f32 %v2844, %v2845
        %v2847 = vsub.f32 1.0, %v2846
        %v2848 = vmul.f32 %v2845, %v2847
        %v2849 = vadd.f32 %v2845, %v2848
        %vm2850 = vweird.f32 %v2844
        %vm2851 = vweird.f32 %v2845
        %vm2852 = vmor %vm2850, %vm2851
        %v2853 = vsel %vm2852, %v2845, %v2849
        %v2854 = vand.u32 2147483647, %v2844
        %vm2855 = vcmp.eq.f32.partialorder %v2854, 8.507059e+37
        %v2856 = vand.u32 %v2844, 2147483648
        %v2857 = vor.u32 1.1754944e-38, %v2856
        %v2858 = vsel %vm2855, %v2857, %v2853
        %v2859 = vmul.f32 %v2834, %v2858
        %v2860 = vmin.f32 %v2859, 1.0
        %v2861 = vmax.f32 %v2860, -1.0
        %v2862 = vmul.f32 %v887, %v887
        %v2863 = vmin.f32 16.0, %v2862
        %v2864 = vmul.f32 %v2863, 2.1237322e-06
        %v2865 = vadd.f32 %v2864, 0.00028619796
        %v2866 = vmul.f32 %v2863, %v2865
        %v2867 = vadd.f32 %v2866, 0.0036580483
        %v2868 = vmul.f32 %v2863, %v2867
        %v2869 = vadd.f32 %v2868, 0.05243302
        %v2870 = vmul.f32 %v2863, %v2869
        %v2871 = vadd.f32 %v2870, 0.18741608
        %v2872 = vmul.f32 %v2863, %v2871
        %v2873 = vadd.f32 %v2872, 1.1283791
        %v2874 = vmul.f32 %v887, %v2873
        %v2875 = vmul.f32 %v2863, 3.8918573e-05
        %v2876 = vadd.f32 %v2875, 0.001143296
        %v2877 = vmul.f32 %v2863, %v2876
        %v2878 = vadd.f32 %v2877, 0.014752088
        %v2879 = vmul.f32 %v2863, %v2878
        %v2880 = vadd.f32 %v2879, 0.112945676
        %v2881 = vmul.f32 %v2863, %v2880
        %v2882 = vadd.f32 %v2881, 0.4994258
        %v2883 = vmul.f32 %v2863, %v2882
        %v2884 = vadd.f32 %v2883, 1.0
        %v2885 = vrcp.pop %v2884
        %v2886 = vmul.f32 %v2884, %v2885
        %v2887 = vsub.f32 1.0, %v2886
        %v2888 = vmul.f32 %v2885, %v2887
        %v2889 = vadd.f32 %v2885, %v2888
        %vm2890 = vweird.f32 %v2884
        %vm2891 = vweird.f32 %v2885
        %vm2892 = vmor %vm2890, %vm2891
        %v2893 = vsel %vm2892, %v2885, %v2889
        %v2894 = vand.u32 2147483647, %v2884
        %vm2895 = vcmp.eq.f32.partialorder %v2894, 8.507059e+37
        %v2896 = vand.u32 %v2884, 2147483648
        %v2897 = vor.u32 1.1754944e-38, %v2896
        %v2898 = vsel %vm2895, %v2897, %v2893
        %v2899 = vmul.f32 %v2874, %v2898
        %v2900 = vmin.f32 %v2899, 1.0
        %v2901 = vmax.f32 %v2900, -1.0
        %v2902 = vmul.f32 %v888, %v888
        %v2903 = vmin.f32 16.0, %v2902
        %v2904 = vmul.f32 %v2903, 2.1237322e-06
        %v2905 = vadd.f32 %v2904, 0.00028619796
        %v2906 = vmul.f32 %v2903, %v2905
        %v2907 = vadd.f32 %v2906, 0.0036580483
        %v2908 = vmul.f32 %v2903, %v2907
        %v2909 = vadd.f32 %v2908, 0.05243302
        %v2910 = vmul.f32 %v2903, %v2909
        %v2911 = vadd.f32 %v2910, 0.18741608
        %v2912 = vmul.f32 %v2903, %v2911
        %v2913 = vadd.f32 %v2912, 1.1283791
        %v2914 = vmul.f32 %v888, %v2913
        %v2915 = vmul.f32 %v2903, 3.8918573e-05
        %v2916 = vadd.f32 %v2915, 0.001143296
        %v2917 = vmul.f32 %v2903, %v2916
        %v2918 = vadd.f32 %v2917, 0.014752088
        %v2919 = vmul.f32 %v2903, %v2918
        %v2920 = vadd.f32 %v2919, 0.112945676
        %v2921 = vmul.f32 %v2903, %v2920
        %v2922 = vadd.f32 %v2921, 0.4994258
        %v2923 = vmul.f32 %v2903, %v2922
        %v2924 = vadd.f32 %v2923, 1.0
        %v2925 = vrcp.pop %v2924
        %v2926 = vmul.f32 %v2924, %v2925
        %v2927 = vsub.f32 1.0, %v2926
        %v2928 = vmul.f32 %v2925, %v2927
        %v2929 = vadd.f32 %v2925, %v2928
        %vm2930 = vweird.f32 %v2924
        %vm2931 = vweird.f32 %v2925
        %vm2932 = vmor %vm2930, %vm2931
        %v2933 = vsel %vm2932, %v2925, %v2929
        %v2934 = vand.u32 2147483647, %v2924
        %vm2935 = vcmp.eq.f32.partialorder %v2934, 8.507059e+37
        %v2936 = vand.u32 %v2924, 2147483648
        %v2937 = vor.u32 1.1754944e-38, %v2936
        %v2938 = vsel %vm2935, %v2937, %v2933
        %v2939 = vmul.f32 %v2914, %v2938
        %v2940 = vmin.f32 %v2939, 1.0
        %v2941 = vmax.f32 %v2940, -1.0
        %v2942 = vmul.f32 %v889, %v889
        %v2943 = vmin.f32 16.0, %v2942
        %v2944 = vmul.f32 %v2943, 2.1237322e-06
        %v2945 = vadd.f32 %v2944, 0.00028619796
        %v2946 = vmul.f32 %v2943, %v2945
        %v2947 = vadd.f32 %v2946, 0.0036580483
        %v2948 = vmul.f32 %v2943, %v2947
        %v2949 = vadd.f32 %v2948, 0.05243302
        %v2950 = vmul.f32 %v2943, %v2949
        %v2951 = vadd.f32 %v2950, 0.18741608
        %v2952 = vmul.f32 %v2943, %v2951
        %v2953 = vadd.f32 %v2952, 1.1283791
        %v2954 = vmul.f32 %v889, %v2953
        %v2955 = vmul.f32 %v2943, 3.8918573e-05
        %v2956 = vadd.f32 %v2955, 0.001143296
        %v2957 = vmul.f32 %v2943, %v2956
        %v2958 = vadd.f32 %v2957, 0.014752088
        %v2959 = vmul.f32 %v2943, %v2958
        %v2960 = vadd.f32 %v2959, 0.112945676
        %v2961 = vmul.f32 %v2943, %v2960
        %v2962 = vadd.f32 %v2961, 0.4994258
        %v2963 = vmul.f32 %v2943, %v2962
        %v2964 = vadd.f32 %v2963, 1.0
        %v2965 = vrcp.pop %v2964
        %v2966 = vmul.f32 %v2964, %v2965
        %v2967 = vsub.f32 1.0, %v2966
        %v2968 = vmul.f32 %v2965, %v2967
        %v2969 = vadd.f32 %v2965, %v2968
        %vm2970 = vweird.f32 %v2964
        %vm2971 = vweird.f32 %v2965
        %vm2972 = vmor %vm2970, %vm2971
        %v2973 = vsel %vm2972, %v2965, %v2969
        %v2974 = vand.u32 2147483647, %v2964
        %vm2975 = vcmp.eq.f32.partialorder %v2974, 8.507059e+37
        %v2976 = vand.u32 %v2964, 2147483648
        %v2977 = vor.u32 1.1754944e-38, %v2976
        %v2978 = vsel %vm2975, %v2977, %v2973
        %v2979 = vmul.f32 %v2954, %v2978
        %v2980 = vmin.f32 %v2979, 1.0
        %v2981 = vmax.f32 %v2980, -1.0
        %v2982 = vmul.f32 %v890, %v890
        %v2983 = vmin.f32 16.0, %v2982
        %v2984 = vmul.f32 %v2983, 2.1237322e-06
        %v2985 = vadd.f32 %v2984, 0.00028619796
        %v2986 = vmul.f32 %v2983, %v2985
        %v2987 = vadd.f32 %v2986, 0.0036580483
        %v2988 = vmul.f32 %v2983, %v2987
        %v2989 = vadd.f32 %v2988, 0.05243302
        %v2990 = vmul.f32 %v2983, %v2989
        %v2991 = vadd.f32 %v2990, 0.18741608
        %v2992 = vmul.f32 %v2983, %v2991
        %v2993 = vadd.f32 %v2992, 1.1283791
        %v2994 = vmul.f32 %v890, %v2993
        %v2995 = vmul.f32 %v2983, 3.8918573e-05
        %v2996 = vadd.f32 %v2995, 0.001143296
        %v2997 = vmul.f32 %v2983, %v2996
        %v2998 = vadd.f32 %v2997, 0.014752088
        %v2999 = vmul.f32 %v2983, %v2998
        %v3000 = vadd.f32 %v2999, 0.112945676
        %v3001 = vmul.f32 %v2983, %v3000
        %v3002 = vadd.f32 %v3001, 0.4994258
        %v3003 = vmul.f32 %v2983, %v3002
        %v3004 = vadd.f32 %v3003, 1.0
        %v3005 = vrcp.pop %v3004
        %v3006 = vmul.f32 %v3004, %v3005
        %v3007 = vsub.f32 1.0, %v3006
        %v3008 = vmul.f32 %v3005, %v3007
        %v3009 = vadd.f32 %v3005, %v3008
        %vm3010 = vweird.f32 %v3004
        %vm3011 = vweird.f32 %v3005
        %vm3012 = vmor %vm3010, %vm3011
        %v3013 = vsel %vm3012, %v3005, %v3009
        %v3014 = vand.u32 2147483647, %v3004
        %vm3015 = vcmp.eq.f32.partialorder %v3014, 8.507059e+37
        %v3016 = vand.u32 %v3004, 2147483648
        %v3017 = vor.u32 1.1754944e-38, %v3016
        %v3018 = vsel %vm3015, %v3017, %v3013
        %v3019 = vmul.f32 %v2994, %v3018
        %v3020 = vmin.f32 %v3019, 1.0
        %v3021 = vmax.f32 %v3020, -1.0
        %v3022 = vmul.f32 %v891, %v891
        %v3023 = vmin.f32 16.0, %v3022
        %v3024 = vmul.f32 %v3023, 2.1237322e-06
        %v3025 = vadd.f32 %v3024, 0.00028619796
        %v3026 = vmul.f32 %v3023, %v3025
        %v3027 = vadd.f32 %v3026, 0.0036580483
        %v3028 = vmul.f32 %v3023, %v3027
        %v3029 = vadd.f32 %v3028, 0.05243302
        %v3030 = vmul.f32 %v3023, %v3029
        %v3031 = vadd.f32 %v3030, 0.18741608
        %v3032 = vmul.f32 %v3023, %v3031
        %v3033 = vadd.f32 %v3032, 1.1283791
        %v3034 = vmul.f32 %v891, %v3033
        %v3035 = vmul.f32 %v3023, 3.8918573e-05
        %v3036 = vadd.f32 %v3035, 0.001143296
        %v3037 = vmul.f32 %v3023, %v3036
        %v3038 = vadd.f32 %v3037, 0.014752088
        %v3039 = vmul.f32 %v3023, %v3038
        %v3040 = vadd.f32 %v3039, 0.112945676
        %v3041 = vmul.f32 %v3023, %v3040
        %v3042 = vadd.f32 %v3041, 0.4994258
        %v3043 = vmul.f32 %v3023, %v3042
        %v3044 = vadd.f32 %v3043, 1.0
        %v3045 = vrcp.pop %v3044
        %v3046 = vmul.f32 %v3044, %v3045
        %v3047 = vsub.f32 1.0, %v3046
        %v3048 = vmul.f32 %v3045, %v3047
        %v3049 = vadd.f32 %v3045, %v3048
        %vm3050 = vweird.f32 %v3044
        %vm3051 = vweird.f32 %v3045
        %vm3052 = vmor %vm3050, %vm3051
        %v3053 = vsel %vm3052, %v3045, %v3049
        %v3054 = vand.u32 2147483647, %v3044
        %vm3055 = vcmp.eq.f32.partialorder %v3054, 8.507059e+37
        %v3056 = vand.u32 %v3044, 2147483648
        %v3057 = vor.u32 1.1754944e-38, %v3056
        %v3058 = vsel %vm3055, %v3057, %v3053
        %v3059 = vmul.f32 %v3034, %v3058
        %v3060 = vmin.f32 %v3059, 1.0
        %v3061 = vmax.f32 %v3060, -1.0
        %v3062 = vmul.f32 %v892, %v892
        %v3063 = vmin.f32 16.0, %v3062
        %v3064 = vmul.f32 %v3063, 2.1237322e-06
        %v3065 = vadd.f32 %v3064, 0.00028619796
        %v3066 = vmul.f32 %v3063, %v3065
        %v3067 = vadd.f32 %v3066, 0.0036580483
        %v3068 = vmul.f32 %v3063, %v3067
        %v3069 = vadd.f32 %v3068, 0.05243302
        %v3070 = vmul.f32 %v3063, %v3069
        %v3071 = vadd.f32 %v3070, 0.18741608
        %v3072 = vmul.f32 %v3063, %v3071
        %v3073 = vadd.f32 %v3072, 1.1283791
        %v3074 = vmul.f32 %v892, %v3073
        %v3075 = vmul.f32 %v3063, 3.8918573e-05
        %v3076 = vadd.f32 %v3075, 0.001143296
        %v3077 = vmul.f32 %v3063, %v3076
        %v3078 = vadd.f32 %v3077, 0.014752088
        %v3079 = vmul.f32 %v3063, %v3078
        %v3080 = vadd.f32 %v3079, 0.112945676
        %v3081 = vmul.f32 %v3063, %v3080
        %v3082 = vadd.f32 %v3081, 0.4994258
        %v3083 = vmul.f32 %v3063, %v3082
        %v3084 = vadd.f32 %v3083, 1.0
        %v3085 = vrcp.pop %v3084
        %v3086 = vmul.f32 %v3084, %v3085
        %v3087 = vsub.f32 1.0, %v3086
        %v3088 = vmul.f32 %v3085, %v3087
        %v3089 = vadd.f32 %v3085, %v3088
        %vm3090 = vweird.f32 %v3084
        %vm3091 = vweird.f32 %v3085
        %vm3092 = vmor %vm3090, %vm3091
        %v3093 = vsel %vm3092, %v3085, %v3089
        %v3094 = vand.u32 2147483647, %v3084
        %vm3095 = vcmp.eq.f32.partialorder %v3094, 8.507059e+37
        %v3096 = vand.u32 %v3084, 2147483648
        %v3097 = vor.u32 1.1754944e-38, %v3096
        %v3098 = vsel %vm3095, %v3097, %v3093
        %v3099 = vmul.f32 %v3074, %v3098
        %v3100 = vmin.f32 %v3099, 1.0
        %v3101 = vmax.f32 %v3100, -1.0
        %v3102 = vmul.f32 %v893, %v893
        %v3103 = vmin.f32 16.0, %v3102
        %v3104 = vmul.f32 %v3103, 2.1237322e-06
        %v3105 = vadd.f32 %v3104, 0.00028619796
        %v3106 = vmul.f32 %v3103, %v3105
        %v3107 = vadd.f32 %v3106, 0.0036580483
        %v3108 = vmul.f32 %v3103, %v3107
        %v3109 = vadd.f32 %v3108, 0.05243302
        %v3110 = vmul.f32 %v3103, %v3109
        %v3111 = vadd.f32 %v3110, 0.18741608
        %v3112 = vmul.f32 %v3103, %v3111
        %v3113 = vadd.f32 %v3112, 1.1283791
        %v3114 = vmul.f32 %v893, %v3113
        %v3115 = vmul.f32 %v3103, 3.8918573e-05
        %v3116 = vadd.f32 %v3115, 0.001143296
        %v3117 = vmul.f32 %v3103, %v3116
        %v3118 = vadd.f32 %v3117, 0.014752088
        %v3119 = vmul.f32 %v3103, %v3118
        %v3120 = vadd.f32 %v3119, 0.112945676
        %v3121 = vmul.f32 %v3103, %v3120
        %v3122 = vadd.f32 %v3121, 0.4994258
        %v3123 = vmul.f32 %v3103, %v3122
        %v3124 = vadd.f32 %v3123, 1.0
        %v3125 = vrcp.pop %v3124
        %v3126 = vmul.f32 %v3124, %v3125
        %v3127 = vsub.f32 1.0, %v3126
        %v3128 = vmul.f32 %v3125, %v3127
        %v3129 = vadd.f32 %v3125, %v3128
        %vm3130 = vweird.f32 %v3124
        %vm3131 = vweird.f32 %v3125
        %vm3132 = vmor %vm3130, %vm3131
        %v3133 = vsel %vm3132, %v3125, %v3129
        %v3134 = vand.u32 2147483647, %v3124
        %vm3135 = vcmp.eq.f32.partialorder %v3134, 8.507059e+37
        %v3136 = vand.u32 %v3124, 2147483648
        %v3137 = vor.u32 1.1754944e-38, %v3136
        %v3138 = vsel %vm3135, %v3137, %v3133
        %v3139 = vmul.f32 %v3114, %v3138
        %v3140 = vmin.f32 %v3139, 1.0
        %v3141 = vmax.f32 %v3140, -1.0
        %v3142 = vmul.f32 %v894, %v894
        %v3143 = vmin.f32 16.0, %v3142
        %v3144 = vmul.f32 %v3143, 2.1237322e-06
        %v3145 = vadd.f32 %v3144, 0.00028619796
        %v3146 = vmul.f32 %v3143, %v3145
        %v3147 = vadd.f32 %v3146, 0.0036580483
        %v3148 = vmul.f32 %v3143, %v3147
        %v3149 = vadd.f32 %v3148, 0.05243302
        %v3150 = vmul.f32 %v3143, %v3149
        %v3151 = vadd.f32 %v3150, 0.18741608
        %v3152 = vmul.f32 %v3143, %v3151
        %v3153 = vadd.f32 %v3152, 1.1283791
        %v3154 = vmul.f32 %v894, %v3153
        %v3155 = vmul.f32 %v3143, 3.8918573e-05
        %v3156 = vadd.f32 %v3155, 0.001143296
        %v3157 = vmul.f32 %v3143, %v3156
        %v3158 = vadd.f32 %v3157, 0.014752088
        %v3159 = vmul.f32 %v3143, %v3158
        %v3160 = vadd.f32 %v3159, 0.112945676
        %v3161 = vmul.f32 %v3143, %v3160
        %v3162 = vadd.f32 %v3161, 0.4994258
        %v3163 = vmul.f32 %v3143, %v3162
        %v3164 = vadd.f32 %v3163, 1.0
        %v3165 = vrcp.pop %v3164
        %v3166 = vmul.f32 %v3164, %v3165
        %v3167 = vsub.f32 1.0, %v3166
        %v3168 = vmul.f32 %v3165, %v3167
        %v3169 = vadd.f32 %v3165, %v3168
        %vm3170 = vweird.f32 %v3164
        %vm3171 = vweird.f32 %v3165
        %vm3172 = vmor %vm3170, %vm3171
        %v3173 = vsel %vm3172, %v3165, %v3169
        %v3174 = vand.u32 2147483647, %v3164
        %vm3175 = vcmp.eq.f32.partialorder %v3174, 8.507059e+37
        %v3176 = vand.u32 %v3164, 2147483648
        %v3177 = vor.u32 1.1754944e-38, %v3176
        %v3178 = vsel %vm3175, %v3177, %v3173
        %v3179 = vmul.f32 %v3154, %v3178
        %v3180 = vmin.f32 %v3179, 1.0
        %v3181 = vmax.f32 %v3180, -1.0
        %v3182 = vmul.f32 %v895, %v895
        %v3183 = vmin.f32 16.0, %v3182
        %v3184 = vmul.f32 %v3183, 2.1237322e-06
        %v3185 = vadd.f32 %v3184, 0.00028619796
        %v3186 = vmul.f32 %v3183, %v3185
        %v3187 = vadd.f32 %v3186, 0.0036580483
        %v3188 = vmul.f32 %v3183, %v3187
        %v3189 = vadd.f32 %v3188, 0.05243302
        %v3190 = vmul.f32 %v3183, %v3189
        %v3191 = vadd.f32 %v3190, 0.18741608
        %v3192 = vmul.f32 %v3183, %v3191
        %v3193 = vadd.f32 %v3192, 1.1283791
        %v3194 = vmul.f32 %v895, %v3193
        %v3195 = vmul.f32 %v3183, 3.8918573e-05
        %v3196 = vadd.f32 %v3195, 0.001143296
        %v3197 = vmul.f32 %v3183, %v3196
        %v3198 = vadd.f32 %v3197, 0.014752088
        %v3199 = vmul.f32 %v3183, %v3198
        %v3200 = vadd.f32 %v3199, 0.112945676
        %v3201 = vmul.f32 %v3183, %v3200
        %v3202 = vadd.f32 %v3201, 0.4994258
        %v3203 = vmul.f32 %v3183, %v3202
        %v3204 = vadd.f32 %v3203, 1.0
        %v3205 = vrcp.pop %v3204
        %v3206 = vmul.f32 %v3204, %v3205
        %v3207 = vsub.f32 1.0, %v3206
        %v3208 = vmul.f32 %v3205, %v3207
        %v3209 = vadd.f32 %v3205, %v3208
        %vm3210 = vweird.f32 %v3204
        %vm3211 = vweird.f32 %v3205
        %vm3212 = vmor %vm3210, %vm3211
        %v3213 = vsel %vm3212, %v3205, %v3209
        %v3214 = vand.u32 2147483647, %v3204
        %vm3215 = vcmp.eq.f32.partialorder %v3214, 8.507059e+37
        %v3216 = vand.u32 %v3204, 2147483648
        %v3217 = vor.u32 1.1754944e-38, %v3216
        %v3218 = vsel %vm3215, %v3217, %v3213
        %v3219 = vmul.f32 %v3194, %v3218
        %v3220 = vmin.f32 %v3219, 1.0
        %v3221 = vmax.f32 %v3220, -1.0
        %v3222 = vmul.f32 %v896, %v896
        %v3223 = vmin.f32 16.0, %v3222
        %v3224 = vmul.f32 %v3223, 2.1237322e-06
        %v3225 = vadd.f32 %v3224, 0.00028619796
        %v3226 = vmul.f32 %v3223, %v3225
        %v3227 = vadd.f32 %v3226, 0.0036580483
        %v3228 = vmul.f32 %v3223, %v3227
        %v3229 = vadd.f32 %v3228, 0.05243302
        %v3230 = vmul.f32 %v3223, %v3229
        %v3231 = vadd.f32 %v3230, 0.18741608
        %v3232 = vmul.f32 %v3223, %v3231
        %v3233 = vadd.f32 %v3232, 1.1283791
        %v3234 = vmul.f32 %v896, %v3233
        %v3235 = vmul.f32 %v3223, 3.8918573e-05
        %v3236 = vadd.f32 %v3235, 0.001143296
        %v3237 = vmul.f32 %v3223, %v3236
        %v3238 = vadd.f32 %v3237, 0.014752088
        %v3239 = vmul.f32 %v3223, %v3238
        %v3240 = vadd.f32 %v3239, 0.112945676
        %v3241 = vmul.f32 %v3223, %v3240
        %v3242 = vadd.f32 %v3241, 0.4994258
        %v3243 = vmul.f32 %v3223, %v3242
        %v3244 = vadd.f32 %v3243, 1.0
        %v3245 = vrcp.pop %v3244
        %v3246 = vmul.f32 %v3244, %v3245
        %v3247 = vsub.f32 1.0, %v3246
        %v3248 = vmul.f32 %v3245, %v3247
        %v3249 = vadd.f32 %v3245, %v3248
        %vm3250 = vweird.f32 %v3244
        %vm3251 = vweird.f32 %v3245
        %vm3252 = vmor %vm3250, %vm3251
        %v3253 = vsel %vm3252, %v3245, %v3249
        %v3254 = vand.u32 2147483647, %v3244
        %vm3255 = vcmp.eq.f32.partialorder %v3254, 8.507059e+37
        %v3256 = vand.u32 %v3244, 2147483648
        %v3257 = vor.u32 1.1754944e-38, %v3256
        %v3258 = vsel %vm3255, %v3257, %v3253
        %v3259 = vmul.f32 %v3234, %v3258
        %v3260 = vmin.f32 %v3259, 1.0
        %v3261 = vmax.f32 %v3260, -1.0
        %v3262 = vmul.f32 %v897, %v897
        %v3263 = vmin.f32 16.0, %v3262
        %v3264 = vmul.f32 %v3263, 2.1237322e-06
        %v3265 = vadd.f32 %v3264, 0.00028619796
        %v3266 = vmul.f32 %v3263, %v3265
        %v3267 = vadd.f32 %v3266, 0.0036580483
        %v3268 = vmul.f32 %v3263, %v3267
        %v3269 = vadd.f32 %v3268, 0.05243302
        %v3270 = vmul.f32 %v3263, %v3269
        %v3271 = vadd.f32 %v3270, 0.18741608
        %v3272 = vmul.f32 %v3263, %v3271
        %v3273 = vadd.f32 %v3272, 1.1283791
        %v3274 = vmul.f32 %v897, %v3273
        %v3275 = vmul.f32 %v3263, 3.8918573e-05
        %v3276 = vadd.f32 %v3275, 0.001143296
        %v3277 = vmul.f32 %v3263, %v3276
        %v3278 = vadd.f32 %v3277, 0.014752088
        %v3279 = vmul.f32 %v3263, %v3278
        %v3280 = vadd.f32 %v3279, 0.112945676
        %v3281 = vmul.f32 %v3263, %v3280
        %v3282 = vadd.f32 %v3281, 0.4994258
        %v3283 = vmul.f32 %v3263, %v3282
        %v3284 = vadd.f32 %v3283, 1.0
        %v3285 = vrcp.pop %v3284
        %v3286 = vmul.f32 %v3284, %v3285
        %v3287 = vsub.f32 1.0, %v3286
        %v3288 = vmul.f32 %v3285, %v3287
        %v3289 = vadd.f32 %v3285, %v3288
        %vm3290 = vweird.f32 %v3284
        %vm3291 = vweird.f32 %v3285
        %vm3292 = vmor %vm3290, %vm3291
        %v3293 = vsel %vm3292, %v3285, %v3289
        %v3294 = vand.u32 2147483647, %v3284
        %vm3295 = vcmp.eq.f32.partialorder %v3294, 8.507059e+37
        %v3296 = vand.u32 %v3284, 2147483648
        %v3297 = vor.u32 1.1754944e-38, %v3296
        %v3298 = vsel %vm3295, %v3297, %v3293
        %v3299 = vmul.f32 %v3274, %v3298
        %v3300 = vmin.f32 %v3299, 1.0
        %v3301 = vmax.f32 %v3300, -1.0
        %v3302 = vmul.f32 %v898, %v898
        %v3303 = vmin.f32 16.0, %v3302
        %v3304 = vmul.f32 %v3303, 2.1237322e-06
        %v3305 = vadd.f32 %v3304, 0.00028619796
        %v3306 = vmul.f32 %v3303, %v3305
        %v3307 = vadd.f32 %v3306, 0.0036580483
        %v3308 = vmul.f32 %v3303, %v3307
        %v3309 = vadd.f32 %v3308, 0.05243302
        %v3310 = vmul.f32 %v3303, %v3309
        %v3311 = vadd.f32 %v3310, 0.18741608
        %v3312 = vmul.f32 %v3303, %v3311
        %v3313 = vadd.f32 %v3312, 1.1283791
        %v3314 = vmul.f32 %v898, %v3313
        %v3315 = vmul.f32 %v3303, 3.8918573e-05
        %v3316 = vadd.f32 %v3315, 0.001143296
        %v3317 = vmul.f32 %v3303, %v3316
        %v3318 = vadd.f32 %v3317, 0.014752088
        %v3319 = vmul.f32 %v3303, %v3318
        %v3320 = vadd.f32 %v3319, 0.112945676
        %v3321 = vmul.f32 %v3303, %v3320
        %v3322 = vadd.f32 %v3321, 0.4994258
        %v3323 = vmul.f32 %v3303, %v3322
        %v3324 = vadd.f32 %v3323, 1.0
        %v3325 = vrcp.pop %v3324
        %v3326 = vmul.f32 %v3324, %v3325
        %v3327 = vsub.f32 1.0, %v3326
        %v3328 = vmul.f32 %v3325, %v3327
        %v3329 = vadd.f32 %v3325, %v3328
        %vm3330 = vweird.f32 %v3324
        %vm3331 = vweird.f32 %v3325
        %vm3332 = vmor %vm3330, %vm3331
        %v3333 = vsel %vm3332, %v3325, %v3329
        %v3334 = vand.u32 2147483647, %v3324
        %vm3335 = vcmp.eq.f32.partialorder %v3334, 8.507059e+37
        %v3336 = vand.u32 %v3324, 2147483648
        %v3337 = vor.u32 1.1754944e-38, %v3336
        %v3338 = vsel %vm3335, %v3337, %v3333
        %v3339 = vmul.f32 %v3314, %v3338
        %v3340 = vmin.f32 %v3339, 1.0
        %v3341 = vmax.f32 %v3340, -1.0
        %v3342 = vmul.f32 %v899, %v899
        %v3343 = vmin.f32 16.0, %v3342
        %v3344 = vmul.f32 %v3343, 2.1237322e-06
        %v3345 = vadd.f32 %v3344, 0.00028619796
        %v3346 = vmul.f32 %v3343, %v3345
        %v3347 = vadd.f32 %v3346, 0.0036580483
        %v3348 = vmul.f32 %v3343, %v3347
        %v3349 = vadd.f32 %v3348, 0.05243302
        %v3350 = vmul.f32 %v3343, %v3349
        %v3351 = vadd.f32 %v3350, 0.18741608
        %v3352 = vmul.f32 %v3343, %v3351
        %v3353 = vadd.f32 %v3352, 1.1283791
        %v3354 = vmul.f32 %v899, %v3353
        %v3355 = vmul.f32 %v3343, 3.8918573e-05
        %v3356 = vadd.f32 %v3355, 0.001143296
        %v3357 = vmul.f32 %v3343, %v3356
        %v3358 = vadd.f32 %v3357, 0.014752088
        %v3359 = vmul.f32 %v3343, %v3358
        %v3360 = vadd.f32 %v3359, 0.112945676
        %v3361 = vmul.f32 %v3343, %v3360
        %v3362 = vadd.f32 %v3361, 0.4994258
        %v3363 = vmul.f32 %v3343, %v3362
        %v3364 = vadd.f32 %v3363, 1.0
        %v3365 = vrcp.pop %v3364
        %v3366 = vmul.f32 %v3364, %v3365
        %v3367 = vsub.f32 1.0, %v3366
        %v3368 = vmul.f32 %v3365, %v3367
        %v3369 = vadd.f32 %v3365, %v3368
        %vm3370 = vweird.f32 %v3364
        %vm3371 = vweird.f32 %v3365
        %vm3372 = vmor %vm3370, %vm3371
        %v3373 = vsel %vm3372, %v3365, %v3369
        %v3374 = vand.u32 2147483647, %v3364
        %vm3375 = vcmp.eq.f32.partialorder %v3374, 8.507059e+37
        %v3376 = vand.u32 %v3364, 2147483648
        %v3377 = vor.u32 1.1754944e-38, %v3376
        %v3378 = vsel %vm3375, %v3377, %v3373
        %v3379 = vmul.f32 %v3354, %v3378
        %v3380 = vmin.f32 %v3379, 1.0
        %v3381 = vmax.f32 %v3380, -1.0
        %v3382 = vmul.f32 %v900, %v900
        %v3383 = vmin.f32 16.0, %v3382
        %v3384 = vmul.f32 %v3383, 2.1237322e-06
        %v3385 = vadd.f32 %v3384, 0.00028619796
        %v3386 = vmul.f32 %v3383, %v3385
        %v3387 = vadd.f32 %v3386, 0.0036580483
        %v3388 = vmul.f32 %v3383, %v3387
        %v3389 = vadd.f32 %v3388, 0.05243302
        %v3390 = vmul.f32 %v3383, %v3389
        %v3391 = vadd.f32 %v3390, 0.18741608
        %v3392 = vmul.f32 %v3383, %v3391
        %v3393 = vadd.f32 %v3392, 1.1283791
        %v3394 = vmul.f32 %v900, %v3393
        %v3395 = vmul.f32 %v3383, 3.8918573e-05
        %v3396 = vadd.f32 %v3395, 0.001143296
        %v3397 = vmul.f32 %v3383, %v3396
        %v3398 = vadd.f32 %v3397, 0.014752088
        %v3399 = vmul.f32 %v3383, %v3398
        %v3400 = vadd.f32 %v3399, 0.112945676
        %v3401 = vmul.f32 %v3383, %v3400
        %v3402 = vadd.f32 %v3401, 0.4994258
        %v3403 = vmul.f32 %v3383, %v3402
        %v3404 = vadd.f32 %v3403, 1.0
        %v3405 = vrcp.pop %v3404
        %v3406 = vmul.f32 %v3404, %v3405
        %v3407 = vsub.f32 1.0, %v3406
        %v3408 = vmul.f32 %v3405, %v3407
        %v3409 = vadd.f32 %v3405, %v3408
        %vm3410 = vweird.f32 %v3404
        %vm3411 = vweird.f32 %v3405
        %vm3412 = vmor %vm3410, %vm3411
        %v3413 = vsel %vm3412, %v3405, %v3409
        %v3414 = vand.u32 2147483647, %v3404
        %vm3415 = vcmp.eq.f32.partialorder %v3414, 8.507059e+37
        %v3416 = vand.u32 %v3404, 2147483648
        %v3417 = vor.u32 1.1754944e-38, %v3416
        %v3418 = vsel %vm3415, %v3417, %v3413
        %v3419 = vmul.f32 %v3394, %v3418
        %v3420 = vmin.f32 %v3419, 1.0
        %v3421 = vmax.f32 %v3420, -1.0
        %v3422 = vmul.f32 %v901, %v901
        %v3423 = vmin.f32 16.0, %v3422
        %v3424 = vmul.f32 %v3423, 2.1237322e-06
        %v3425 = vadd.f32 %v3424, 0.00028619796
        %v3426 = vmul.f32 %v3423, %v3425
        %v3427 = vadd.f32 %v3426, 0.0036580483
        %v3428 = vmul.f32 %v3423, %v3427
        %v3429 = vadd.f32 %v3428, 0.05243302
        %v3430 = vmul.f32 %v3423, %v3429
        %v3431 = vadd.f32 %v3430, 0.18741608
        %v3432 = vmul.f32 %v3423, %v3431
        %v3433 = vadd.f32 %v3432, 1.1283791
        %v3434 = vmul.f32 %v901, %v3433
        %v3435 = vmul.f32 %v3423, 3.8918573e-05
        %v3436 = vadd.f32 %v3435, 0.001143296
        %v3437 = vmul.f32 %v3423, %v3436
        %v3438 = vadd.f32 %v3437, 0.014752088
        %v3439 = vmul.f32 %v3423, %v3438
        %v3440 = vadd.f32 %v3439, 0.112945676
        %v3441 = vmul.f32 %v3423, %v3440
        %v3442 = vadd.f32 %v3441, 0.4994258
        %v3443 = vmul.f32 %v3423, %v3442
        %v3444 = vadd.f32 %v3443, 1.0
        %v3445 = vrcp.pop %v3444
        %v3446 = vmul.f32 %v3444, %v3445
        %v3447 = vsub.f32 1.0, %v3446
        %v3448 = vmul.f32 %v3445, %v3447
        %v3449 = vadd.f32 %v3445, %v3448
        %vm3450 = vweird.f32 %v3444
        %vm3451 = vweird.f32 %v3445
        %vm3452 = vmor %vm3450, %vm3451
        %v3453 = vsel %vm3452, %v3445, %v3449
        %v3454 = vand.u32 2147483647, %v3444
        %vm3455 = vcmp.eq.f32.partialorder %v3454, 8.507059e+37
        %v3456 = vand.u32 %v3444, 2147483648
        %v3457 = vor.u32 1.1754944e-38, %v3456
        %v3458 = vsel %vm3455, %v3457, %v3453
        %v3459 = vmul.f32 %v3434, %v3458
        %v3460 = vmin.f32 %v3459, 1.0
        %v3461 = vmax.f32 %v3460, -1.0
        %v3462 = vadd.f32 %v941, 1.0
        %v3463 = vadd.f32 %v981, 1.0
        %v3464 = vadd.f32 %v1021, 1.0
        %v3465 = vadd.f32 %v1061, 1.0
        %v3466 = vadd.f32 %v1101, 1.0
        %v3467 = vadd.f32 %v1141, 1.0
        %v3468 = vadd.f32 %v1181, 1.0
        %v3469 = vadd.f32 %v1221, 1.0
        %v3470 = vadd.f32 %v1261, 1.0
        %v3471 = vadd.f32 %v1301, 1.0
        %v3472 = vadd.f32 %v1341, 1.0
        %v3473 = vadd.f32 %v1381, 1.0
        %v3474 = vadd.f32 %v1421, 1.0
        %v3475 = vadd.f32 %v1461, 1.0
        %v3476 = vadd.f32 %v1501, 1.0
        %v3477 = vadd.f32 %v1541, 1.0
        %v3478 = vadd.f32 %v1581, 1.0
        %v3479 = vadd.f32 %v1621, 1.0
        %v3480 = vadd.f32 %v1661, 1.0
        %v3481 = vadd.f32 %v1701, 1.0
        %v3482 = vadd.f32 %v1741, 1.0
        %v3483 = vadd.f32 %v1781, 1.0
        %v3484 = vadd.f32 %v1821, 1.0
        %v3485 = vadd.f32 %v1861, 1.0
        %v3486 = vadd.f32 %v1901, 1.0
        %v3487 = vadd.f32 %v1941, 1.0
        %v3488 = vadd.f32 %v1981, 1.0
        %v3489 = vadd.f32 %v2021, 1.0
        %v3490 = vadd.f32 %v2061, 1.0
        %v3491 = vadd.f32 %v2101, 1.0
        %v3492 = vadd.f32 %v2141, 1.0
        %v3493 = vadd.f32 %v2181, 1.0
        %v3494 = vadd.f32 %v2221, 1.0
        %v3495 = vadd.f32 %v2261, 1.0
        %v3496 = vadd.f32 %v2301, 1.0
        %v3497 = vadd.f32 %v2341, 1.0
        %v3498 = vadd.f32 %v2381, 1.0
        %v3499 = vadd.f32 %v2421, 1.0
        %v3500 = vadd.f32 %v2461, 1.0
        %v3501 = vadd.f32 %v2501, 1.0
        %v3502 = vadd.f32 %v2541, 1.0
        %v3503 = vadd.f32 %v2581, 1.0
        %v3504 = vadd.f32 %v2621, 1.0
        %v3505 = vadd.f32 %v2661, 1.0
        %v3506 = vadd.f32 %v2701, 1.0
        %v3507 = vadd.f32 %v2741, 1.0
        %v3508 = vadd.f32 %v2781, 1.0
        %v3509 = vadd.f32 %v2821, 1.0
        %v3510 = vadd.f32 %v2861, 1.0
        %v3511 = vadd.f32 %v2901, 1.0
        %v3512 = vadd.f32 %v2941, 1.0
        %v3513 = vadd.f32 %v2981, 1.0
        %v3514 = vadd.f32 %v3021, 1.0
        %v3515 = vadd.f32 %v3061, 1.0
        %v3516 = vadd.f32 %v3101, 1.0
        %v3517 = vadd.f32 %v3141, 1.0
        %v3518 = vadd.f32 %v3181, 1.0
        %v3519 = vadd.f32 %v3221, 1.0
        %v3520 = vadd.f32 %v3261, 1.0
        %v3521 = vadd.f32 %v3301, 1.0
        %v3522 = vadd.f32 %v3341, 1.0
        %v3523 = vadd.f32 %v3381, 1.0
        %v3524 = vadd.f32 %v3421, 1.0
        %v3525 = vadd.f32 %v3461, 1.0
        %v3526 = vmul.f32 %v774, %v3462
        %v3527 = vmul.f32 %v775, %v3463
        %v3528 = vmul.f32 %v776, %v3464
        %v3529 = vmul.f32 %v777, %v3465
        %v3530 = vmul.f32 %v778, %v3466
        %v3531 = vmul.f32 %v779, %v3467
        %v3532 = vmul.f32 %v780, %v3468
        %v3533 = vmul.f32 %v781, %v3469
        %v3534 = vmul.f32 %v782, %v3470
        %v3535 = vmul.f32 %v783, %v3471
        %v3536 = vmul.f32 %v784, %v3472
        %v3537 = vmul.f32 %v785, %v3473
        %v3538 = vmul.f32 %v786, %v3474
        %v3539 = vmul.f32 %v787, %v3475
        %v3540 = vmul.f32 %v788, %v3476
        %v3541 = vmul.f32 %v789, %v3477
        %v3542 = vmul.f32 %v790, %v3478
        %v3543 = vmul.f32 %v791, %v3479
        %v3544 = vmul.f32 %v792, %v3480
        %v3545 = vmul.f32 %v793, %v3481
        %v3546 = vmul.f32 %v794, %v3482
        %v3547 = vmul.f32 %v795, %v3483
        %v3548 = vmul.f32 %v796, %v3484
        %v3549 = vmul.f32 %v797, %v3485
        %v3550 = vmul.f32 %v798, %v3486
        %v3551 = vmul.f32 %v799, %v3487
        %v3552 = vmul.f32 %v800, %v3488
        %v3553 = vmul.f32 %v801, %v3489
        %v3554 = vmul.f32 %v802, %v3490
        %v3555 = vmul.f32 %v803, %v3491
        %v3556 = vmul.f32 %v804, %v3492
        %v3557 = vmul.f32 %v805, %v3493
        %v3558 = vmul.f32 %v806, %v3494
        %v3559 = vmul.f32 %v807, %v3495
        %v3560 = vmul.f32 %v808, %v3496
        %v3561 = vmul.f32 %v809, %v3497
        %v3562 = vmul.f32 %v810, %v3498
        %v3563 = vmul.f32 %v811, %v3499
        %v3564 = vmul.f32 %v812, %v3500
        %v3565 = vmul.f32 %v813, %v3501
        %v3566 = vmul.f32 %v814, %v3502
        %v3567 = vmul.f32 %v815, %v3503
        %v3568 = vmul.f32 %v816, %v3504
        %v3569 = vmul.f32 %v817, %v3505
        %v3570 = vmul.f32 %v818, %v3506
        %v3571 = vmul.f32 %v819, %v3507
        %v3572 = vmul.f32 %v820, %v3508
        %v3573 = vmul.f32 %v821, %v3509
        %v3574 = vmul.f32 %v822, %v3510
        %v3575 = vmul.f32 %v823, %v3511
        %v3576 = vmul.f32 %v824, %v3512
        %v3577 = vmul.f32 %v825, %v3513
        %v3578 = vmul.f32 %v826, %v3514
        %v3579 = vmul.f32 %v827, %v3515
        %v3580 = vmul.f32 %v828, %v3516
        %v3581 = vmul.f32 %v829, %v3517
        %v3582 = vmul.f32 %v830, %v3518
        %v3583 = vmul.f32 %v831, %v3519
        %v3584 = vmul.f32 %v832, %v3520
        %v3585 = vmul.f32 %v833, %v3521
        %v3586 = vmul.f32 %v834, %v3522
        %v3587 = vmul.f32 %v835, %v3523
        %v3588 = vmul.f32 %v836, %v3524
        %v3589 = vmul.f32 %v837, %v3525
        %v3590 = vld [vmem:[#allocation7] sm:$0xff]
        %v3591 = vld [vmem:[#allocation7 + $0x8] sm:$0xff]
        %v3592 = vld [vmem:[#allocation7 + $0x10] sm:$0xff]
        %v3593 = vld [vmem:[#allocation7 + $0x18] sm:$0xff]
        %v3594 = vld [vmem:[#allocation7 + $0x20] sm:$0xff]
        %v3595 = vld [vmem:[#allocation7 + $0x28] sm:$0xff]
        %v3596 = vld [vmem:[#allocation7 + $0x30] sm:$0xff]
        %v3597 = vld [vmem:[#allocation7 + $0x38] sm:$0xff]
        %v3598 = vld [vmem:[#allocation7 + $0x40] sm:$0xff]
        %v3599 = vld [vmem:[#allocation7 + $0x48] sm:$0xff]
        %v3600 = vld [vmem:[#allocation7 + $0x50] sm:$0xff]
        %v3601 = vld [vmem:[#allocation7 + $0x58] sm:$0xff]
        %v3602 = vld [vmem:[#allocation7 + $0x60] sm:$0xff]
        %v3603 = vld [vmem:[#allocation7 + $0x68] sm:$0xff]
        %v3604 = vld [vmem:[#allocation7 + $0x70] sm:$0xff]
        %v3605 = vld [vmem:[#allocation7 + $0x78] sm:$0xff]
        %v3606 = vld [vmem:[#allocation7 + $0x80] sm:$0xff]
        %v3607 = vld [vmem:[#allocation7 + $0x88] sm:$0xff]
        %v3608 = vld [vmem:[#allocation7 + $0x90] sm:$0xff]
        %v3609 = vld [vmem:[#allocation7 + $0x98] sm:$0xff]
        %v3610 = vld [vmem:[#allocation7 + $0xa0] sm:$0xff]
        %v3611 = vld [vmem:[#allocation7 + $0xa8] sm:$0xff]
        %v3612 = vld [vmem:[#allocation7 + $0xb0] sm:$0xff]
        %v3613 = vld [vmem:[#allocation7 + $0xb8] sm:$0xff]
        %v3614 = vld [vmem:[#allocation7 + $0xc0] sm:$0xff]
        %v3615 = vld [vmem:[#allocation7 + $0xc8] sm:$0xff]
        %v3616 = vld [vmem:[#allocation7 + $0xd0] sm:$0xff]
        %v3617 = vld [vmem:[#allocation7 + $0xd8] sm:$0xff]
        %v3618 = vld [vmem:[#allocation7 + $0xe0] sm:$0xff]
        %v3619 = vld [vmem:[#allocation7 + $0xe8] sm:$0xff]
        %v3620 = vld [vmem:[#allocation7 + $0xf0] sm:$0xff]
        %v3621 = vld [vmem:[#allocation7 + $0xf8] sm:$0xff]
        %v3622 = vxor.u32 %v679, 2147483648
        %v3623 = vxor.u32 %v682, 2147483648
        %v3624 = vxor.u32 %v685, 2147483648
        %v3625 = vxor.u32 %v688, 2147483648
        %v3626 = vxor.u32 %v691, 2147483648
        %v3627 = vxor.u32 %v694, 2147483648
        %v3628 = vxor.u32 %v697, 2147483648
        %v3629 = vxor.u32 %v700, 2147483648
        %v3630 = vxor.u32 %v703, 2147483648
        %v3631 = vxor.u32 %v706, 2147483648
        %v3632 = vxor.u32 %v709, 2147483648
        %v3633 = vxor.u32 %v712, 2147483648
        %v3634 = vxor.u32 %v715, 2147483648
        %v3635 = vxor.u32 %v718, 2147483648
        %v3636 = vxor.u32 %v721, 2147483648
        %v3637 = vxor.u32 %v724, 2147483648
        %v3638 = vxor.u32 %v727, 2147483648
        %v3639 = vxor.u32 %v730, 2147483648
        %v3640 = vxor.u32 %v733, 2147483648
        %v3641 = vxor.u32 %v736, 2147483648
        %v3642 = vxor.u32 %v739, 2147483648
        %v3643 = vxor.u32 %v742, 2147483648
        %v3644 = vxor.u32 %v745, 2147483648
        %v3645 = vxor.u32 %v748, 2147483648
        %v3646 = vxor.u32 %v751, 2147483648
        %v3647 = vxor.u32 %v754, 2147483648
        %v3648 = vxor.u32 %v757, 2147483648
        %v3649 = vxor.u32 %v760, 2147483648
        %v3650 = vxor.u32 %v763, 2147483648
        %v3651 = vxor.u32 %v766, 2147483648
        %v3652 = vxor.u32 %v769, 2147483648
        %v3653 = vxor.u32 %v772, 2147483648
        %v3654 = vmul.f32 %v3622, 1.442695
        %v3655 = vpow.pop %v3654
        %v3656 = vmul.f32 %v3623, 1.442695
        %v3657 = vpow.pop %v3656
        %v3658 = vmul.f32 %v3624, 1.442695
        %v3659 = vpow.pop %v3658
        %v3660 = vmul.f32 %v3625, 1.442695
        %v3661 = vpow.pop %v3660
        %v3662 = vmul.f32 %v3626, 1.442695
        %v3663 = vpow.pop %v3662
        %v3664 = vmul.f32 %v3627, 1.442695
        %v3665 = vpow.pop %v3664
        %v3666 = vmul.f32 %v3628, 1.442695
        %v3667 = vpow.pop %v3666
        %v3668 = vmul.f32 %v3629, 1.442695
        %v3669 = vpow.pop %v3668
        %v3670 = vmul.f32 %v3630, 1.442695
        %v3671 = vpow.pop %v3670
        %v3672 = vmul.f32 %v3631, 1.442695
        %v3673 = vpow.pop %v3672
        %v3674 = vmul.f32 %v3632, 1.442695
        %v3675 = vpow.pop %v3674
        %v3676 = vmul.f32 %v3633, 1.442695
        %v3677 = vpow.pop %v3676
        %v3678 = vmul.f32 %v3634, 1.442695
        %v3679 = vpow.pop %v3678
        %v3680 = vmul.f32 %v3635, 1.442695
        %v3681 = vpow.pop %v3680
        %v3682 = vmul.f32 %v3636, 1.442695
        %v3683 = vpow.pop %v3682
        %v3684 = vmul.f32 %v3637, 1.442695
        %v3685 = vpow.pop %v3684
        %v3686 = vmul.f32 %v3638, 1.442695
        %v3687 = vpow.pop %v3686
        %v3688 = vmul.f32 %v3639, 1.442695
        %v3689 = vpow.pop %v3688
        %v3690 = vmul.f32 %v3640, 1.442695
        %v3691 = vpow.pop %v3690
        %v3692 = vmul.f32 %v3641, 1.442695
        %v3693 = vpow.pop %v3692
        %v3694 = vmul.f32 %v3642, 1.442695
        %v3695 = vpow.pop %v3694
        %v3696 = vmul.f32 %v3643, 1.442695
        %v3697 = vpow.pop %v3696
        %v3698 = vmul.f32 %v3644, 1.442695
        %v3699 = vpow.pop %v3698
        %v3700 = vmul.f32 %v3645, 1.442695
        %v3701 = vpow.pop %v3700
        %v3702 = vmul.f32 %v3646, 1.442695
        %v3703 = vpow.pop %v3702
        %v3704 = vmul.f32 %v3647, 1.442695
        %v3705 = vpow.pop %v3704
        %v3706 = vmul.f32 %v3648, 1.442695
        %v3707 = vpow.pop %v3706
        %v3708 = vmul.f32 %v3649, 1.442695
        %v3709 = vpow.pop %v3708
        %v3710 = vmul.f32 %v3650, 1.442695
        %v3711 = vpow.pop %v3710
        %v3712 = vmul.f32 %v3651, 1.442695
        %v3713 = vpow.pop %v3712
        %v3714 = vmul.f32 %v3652, 1.442695
        %v3715 = vpow.pop %v3714
        %v3716 = vmul.f32 %v3653, 1.442695
        %v3717 = vpow.pop %v3716
        %v3718 = vadd.f32 %v3655, 1.0
        %v3719 = vadd.f32 %v3657, 1.0
        %v3720 = vadd.f32 %v3659, 1.0
        %v3721 = vadd.f32 %v3661, 1.0
        %v3722 = vadd.f32 %v3663, 1.0
        %v3723 = vadd.f32 %v3665, 1.0
        %v3724 = vadd.f32 %v3667, 1.0
        %v3725 = vadd.f32 %v3669, 1.0
        %v3726 = vadd.f32 %v3671, 1.0
        %v3727 = vadd.f32 %v3673, 1.0
        %v3728 = vadd.f32 %v3675, 1.0
        %v3729 = vadd.f32 %v3677, 1.0
        %v3730 = vadd.f32 %v3679, 1.0
        %v3731 = vadd.f32 %v3681, 1.0
        %v3732 = vadd.f32 %v3683, 1.0
        %v3733 = vadd.f32 %v3685, 1.0
        %v3734 = vadd.f32 %v3687, 1.0
        %v3735 = vadd.f32 %v3689, 1.0
        %v3736 = vadd.f32 %v3691, 1.0
        %v3737 = vadd.f32 %v3693, 1.0
        %v3738 = vadd.f32 %v3695, 1.0
        %v3739 = vadd.f32 %v3697, 1.0
        %v3740 = vadd.f32 %v3699, 1.0
        %v3741 = vadd.f32 %v3701, 1.0
        %v3742 = vadd.f32 %v3703, 1.0
        %v3743 = vadd.f32 %v3705, 1.0
        %v3744 = vadd.f32 %v3707, 1.0
        %v3745 = vadd.f32 %v3709, 1.0
        %v3746 = vadd.f32 %v3711, 1.0
        %v3747 = vadd.f32 %v3713, 1.0
        %v3748 = vadd.f32 %v3715, 1.0
        %v3749 = vadd.f32 %v3717, 1.0
        %v3750 = vrcp.pop %v3718
        %v3751 = vmul.f32 %v3718, %v3750
        %v3752 = vsub.f32 1.0, %v3751
        %v3753 = vmul.f32 %v3750, %v3752
        %v3754 = vadd.f32 %v3750, %v3753
        %vm3755 = vweird.f32 %v3718
        %vm3756 = vweird.f32 %v3750
        %vm3757 = vmor %vm3755, %vm3756
        %v3758 = vsel %vm3757, %v3750, %v3754
        %v3759 = vand.u32 2147483647, %v3718
        %vm3760 = vcmp.eq.f32.partialorder %v3759, 8.507059e+37
        %v3761 = vand.u32 %v3718, 2147483648
        %v3762 = vor.u32 1.1754944e-38, %v3761
        %v3763 = vsel %vm3760, %v3762, %v3758
        %v3764 = vmul.f32 1.0, %v3763
        %v3765 = vrcp.pop %v3719
        %v3766 = vmul.f32 %v3719, %v3765
        %v3767 = vsub.f32 1.0, %v3766
        %v3768 = vmul.f32 %v3765, %v3767
        %v3769 = vadd.f32 %v3765, %v3768
        %vm3770 = vweird.f32 %v3719
        %vm3771 = vweird.f32 %v3765
        %vm3772 = vmor %vm3770, %vm3771
        %v3773 = vsel %vm3772, %v3765, %v3769
        %v3774 = vand.u32 2147483647, %v3719
        %vm3775 = vcmp.eq.f32.partialorder %v3774, 8.507059e+37
        %v3776 = vand.u32 %v3719, 2147483648
        %v3777 = vor.u32 1.1754944e-38, %v3776
        %v3778 = vsel %vm3775, %v3777, %v3773
        %v3779 = vmul.f32 1.0, %v3778
        %v3780 = vrcp.pop %v3720
        %v3781 = vmul.f32 %v3720, %v3780
        %v3782 = vsub.f32 1.0, %v3781
        %v3783 = vmul.f32 %v3780, %v3782
        %v3784 = vadd.f32 %v3780, %v3783
        %vm3785 = vweird.f32 %v3720
        %vm3786 = vweird.f32 %v3780
        %vm3787 = vmor %vm3785, %vm3786
        %v3788 = vsel %vm3787, %v3780, %v3784
        %v3789 = vand.u32 2147483647, %v3720
        %vm3790 = vcmp.eq.f32.partialorder %v3789, 8.507059e+37
        %v3791 = vand.u32 %v3720, 2147483648
        %v3792 = vor.u32 1.1754944e-38, %v3791
        %v3793 = vsel %vm3790, %v3792, %v3788
        %v3794 = vmul.f32 1.0, %v3793
        %v3795 = vrcp.pop %v3721
        %v3796 = vmul.f32 %v3721, %v3795
        %v3797 = vsub.f32 1.0, %v3796
        %v3798 = vmul.f32 %v3795, %v3797
        %v3799 = vadd.f32 %v3795, %v3798
        %vm3800 = vweird.f32 %v3721
        %vm3801 = vweird.f32 %v3795
        %vm3802 = vmor %vm3800, %vm3801
        %v3803 = vsel %vm3802, %v3795, %v3799
        %v3804 = vand.u32 2147483647, %v3721
        %vm3805 = vcmp.eq.f32.partialorder %v3804, 8.507059e+37
        %v3806 = vand.u32 %v3721, 2147483648
        %v3807 = vor.u32 1.1754944e-38, %v3806
        %v3808 = vsel %vm3805, %v3807, %v3803
        %v3809 = vmul.f32 1.0, %v3808
        %v3810 = vrcp.pop %v3722
        %v3811 = vmul.f32 %v3722, %v3810
        %v3812 = vsub.f32 1.0, %v3811
        %v3813 = vmul.f32 %v3810, %v3812
        %v3814 = vadd.f32 %v3810, %v3813
        %vm3815 = vweird.f32 %v3722
        %vm3816 = vweird.f32 %v3810
        %vm3817 = vmor %vm3815, %vm3816
        %v3818 = vsel %vm3817, %v3810, %v3814
        %v3819 = vand.u32 2147483647, %v3722
        %vm3820 = vcmp.eq.f32.partialorder %v3819, 8.507059e+37
        %v3821 = vand.u32 %v3722, 2147483648
        %v3822 = vor.u32 1.1754944e-38, %v3821
        %v3823 = vsel %vm3820, %v3822, %v3818
        %v3824 = vmul.f32 1.0, %v3823
        %v3825 = vrcp.pop %v3723
        %v3826 = vmul.f32 %v3723, %v3825
        %v3827 = vsub.f32 1.0, %v3826
        %v3828 = vmul.f32 %v3825, %v3827
        %v3829 = vadd.f32 %v3825, %v3828
        %vm3830 = vweird.f32 %v3723
        %vm3831 = vweird.f32 %v3825
        %vm3832 = vmor %vm3830, %vm3831
        %v3833 = vsel %vm3832, %v3825, %v3829
        %v3834 = vand.u32 2147483647, %v3723
        %vm3835 = vcmp.eq.f32.partialorder %v3834, 8.507059e+37
        %v3836 = vand.u32 %v3723, 2147483648
        %v3837 = vor.u32 1.1754944e-38, %v3836
        %v3838 = vsel %vm3835, %v3837, %v3833
        %v3839 = vmul.f32 1.0, %v3838
        %v3840 = vrcp.pop %v3724
        %v3841 = vmul.f32 %v3724, %v3840
        %v3842 = vsub.f32 1.0, %v3841
        %v3843 = vmul.f32 %v3840, %v3842
        %v3844 = vadd.f32 %v3840, %v3843
        %vm3845 = vweird.f32 %v3724
        %vm3846 = vweird.f32 %v3840
        %vm3847 = vmor %vm3845, %vm3846
        %v3848 = vsel %vm3847, %v3840, %v3844
        %v3849 = vand.u32 2147483647, %v3724
        %vm3850 = vcmp.eq.f32.partialorder %v3849, 8.507059e+37
        %v3851 = vand.u32 %v3724, 2147483648
        %v3852 = vor.u32 1.1754944e-38, %v3851
        %v3853 = vsel %vm3850, %v3852, %v3848
        %v3854 = vmul.f32 1.0, %v3853
        %v3855 = vrcp.pop %v3725
        %v3856 = vmul.f32 %v3725, %v3855
        %v3857 = vsub.f32 1.0, %v3856
        %v3858 = vmul.f32 %v3855, %v3857
        %v3859 = vadd.f32 %v3855, %v3858
        %vm3860 = vweird.f32 %v3725
        %vm3861 = vweird.f32 %v3855
        %vm3862 = vmor %vm3860, %vm3861
        %v3863 = vsel %vm3862, %v3855, %v3859
        %v3864 = vand.u32 2147483647, %v3725
        %vm3865 = vcmp.eq.f32.partialorder %v3864, 8.507059e+37
        %v3866 = vand.u32 %v3725, 2147483648
        %v3867 = vor.u32 1.1754944e-38, %v3866
        %v3868 = vsel %vm3865, %v3867, %v3863
        %v3869 = vmul.f32 1.0, %v3868
        %v3870 = vrcp.pop %v3726
        %v3871 = vmul.f32 %v3726, %v3870
        %v3872 = vsub.f32 1.0, %v3871
        %v3873 = vmul.f32 %v3870, %v3872
        %v3874 = vadd.f32 %v3870, %v3873
        %vm3875 = vweird.f32 %v3726
        %vm3876 = vweird.f32 %v3870
        %vm3877 = vmor %vm3875, %vm3876
        %v3878 = vsel %vm3877, %v3870, %v3874
        %v3879 = vand.u32 2147483647, %v3726
        %vm3880 = vcmp.eq.f32.partialorder %v3879, 8.507059e+37
        %v3881 = vand.u32 %v3726, 2147483648
        %v3882 = vor.u32 1.1754944e-38, %v3881
        %v3883 = vsel %vm3880, %v3882, %v3878
        %v3884 = vmul.f32 1.0, %v3883
        %v3885 = vrcp.pop %v3727
        %v3886 = vmul.f32 %v3727, %v3885
        %v3887 = vsub.f32 1.0, %v3886
        %v3888 = vmul.f32 %v3885, %v3887
        %v3889 = vadd.f32 %v3885, %v3888
        %vm3890 = vweird.f32 %v3727
        %vm3891 = vweird.f32 %v3885
        %vm3892 = vmor %vm3890, %vm3891
        %v3893 = vsel %vm3892, %v3885, %v3889
        %v3894 = vand.u32 2147483647, %v3727
        %vm3895 = vcmp.eq.f32.partialorder %v3894, 8.507059e+37
        %v3896 = vand.u32 %v3727, 2147483648
        %v3897 = vor.u32 1.1754944e-38, %v3896
        %v3898 = vsel %vm3895, %v3897, %v3893
        %v3899 = vmul.f32 1.0, %v3898
        %v3900 = vrcp.pop %v3728
        %v3901 = vmul.f32 %v3728, %v3900
        %v3902 = vsub.f32 1.0, %v3901
        %v3903 = vmul.f32 %v3900, %v3902
        %v3904 = vadd.f32 %v3900, %v3903
        %vm3905 = vweird.f32 %v3728
        %vm3906 = vweird.f32 %v3900
        %vm3907 = vmor %vm3905, %vm3906
        %v3908 = vsel %vm3907, %v3900, %v3904
        %v3909 = vand.u32 2147483647, %v3728
        %vm3910 = vcmp.eq.f32.partialorder %v3909, 8.507059e+37
        %v3911 = vand.u32 %v3728, 2147483648
        %v3912 = vor.u32 1.1754944e-38, %v3911
        %v3913 = vsel %vm3910, %v3912, %v3908
        %v3914 = vmul.f32 1.0, %v3913
        %v3915 = vrcp.pop %v3729
        %v3916 = vmul.f32 %v3729, %v3915
        %v3917 = vsub.f32 1.0, %v3916
        %v3918 = vmul.f32 %v3915, %v3917
        %v3919 = vadd.f32 %v3915, %v3918
        %vm3920 = vweird.f32 %v3729
        %vm3921 = vweird.f32 %v3915
        %vm3922 = vmor %vm3920, %vm3921
        %v3923 = vsel %vm3922, %v3915, %v3919
        %v3924 = vand.u32 2147483647, %v3729
        %vm3925 = vcmp.eq.f32.partialorder %v3924, 8.507059e+37
        %v3926 = vand.u32 %v3729, 2147483648
        %v3927 = vor.u32 1.1754944e-38, %v3926
        %v3928 = vsel %vm3925, %v3927, %v3923
        %v3929 = vmul.f32 1.0, %v3928
        %v3930 = vrcp.pop %v3730
        %v3931 = vmul.f32 %v3730, %v3930
        %v3932 = vsub.f32 1.0, %v3931
        %v3933 = vmul.f32 %v3930, %v3932
        %v3934 = vadd.f32 %v3930, %v3933
        %vm3935 = vweird.f32 %v3730
        %vm3936 = vweird.f32 %v3930
        %vm3937 = vmor %vm3935, %vm3936
        %v3938 = vsel %vm3937, %v3930, %v3934
        %v3939 = vand.u32 2147483647, %v3730
        %vm3940 = vcmp.eq.f32.partialorder %v3939, 8.507059e+37
        %v3941 = vand.u32 %v3730, 2147483648
        %v3942 = vor.u32 1.1754944e-38, %v3941
        %v3943 = vsel %vm3940, %v3942, %v3938
        %v3944 = vmul.f32 1.0, %v3943
        %v3945 = vrcp.pop %v3731
        %v3946 = vmul.f32 %v3731, %v3945
        %v3947 = vsub.f32 1.0, %v3946
        %v3948 = vmul.f32 %v3945, %v3947
        %v3949 = vadd.f32 %v3945, %v3948
        %vm3950 = vweird.f32 %v3731
        %vm3951 = vweird.f32 %v3945
        %vm3952 = vmor %vm3950, %vm3951
        %v3953 = vsel %vm3952, %v3945, %v3949
        %v3954 = vand.u32 2147483647, %v3731
        %vm3955 = vcmp.eq.f32.partialorder %v3954, 8.507059e+37
        %v3956 = vand.u32 %v3731, 2147483648
        %v3957 = vor.u32 1.1754944e-38, %v3956
        %v3958 = vsel %vm3955, %v3957, %v3953
        %v3959 = vmul.f32 1.0, %v3958
        %v3960 = vrcp.pop %v3732
        %v3961 = vmul.f32 %v3732, %v3960
        %v3962 = vsub.f32 1.0, %v3961
        %v3963 = vmul.f32 %v3960, %v3962
        %v3964 = vadd.f32 %v3960, %v3963
        %vm3965 = vweird.f32 %v3732
        %vm3966 = vweird.f32 %v3960
        %vm3967 = vmor %vm3965, %vm3966
        %v3968 = vsel %vm3967, %v3960, %v3964
        %v3969 = vand.u32 2147483647, %v3732
        %vm3970 = vcmp.eq.f32.partialorder %v3969, 8.507059e+37
        %v3971 = vand.u32 %v3732, 2147483648
        %v3972 = vor.u32 1.1754944e-38, %v3971
        %v3973 = vsel %vm3970, %v3972, %v3968
        %v3974 = vmul.f32 1.0, %v3973
        %v3975 = vrcp.pop %v3733
        %v3976 = vmul.f32 %v3733, %v3975
        %v3977 = vsub.f32 1.0, %v3976
        %v3978 = vmul.f32 %v3975, %v3977
        %v3979 = vadd.f32 %v3975, %v3978
        %vm3980 = vweird.f32 %v3733
        %vm3981 = vweird.f32 %v3975
        %vm3982 = vmor %vm3980, %vm3981
        %v3983 = vsel %vm3982, %v3975, %v3979
        %v3984 = vand.u32 2147483647, %v3733
        %vm3985 = vcmp.eq.f32.partialorder %v3984, 8.507059e+37
        %v3986 = vand.u32 %v3733, 2147483648
        %v3987 = vor.u32 1.1754944e-38, %v3986
        %v3988 = vsel %vm3985, %v3987, %v3983
        %v3989 = vmul.f32 1.0, %v3988
        %v3990 = vrcp.pop %v3734
        %v3991 = vmul.f32 %v3734, %v3990
        %v3992 = vsub.f32 1.0, %v3991
        %v3993 = vmul.f32 %v3990, %v3992
        %v3994 = vadd.f32 %v3990, %v3993
        %vm3995 = vweird.f32 %v3734
        %vm3996 = vweird.f32 %v3990
        %vm3997 = vmor %vm3995, %vm3996
        %v3998 = vsel %vm3997, %v3990, %v3994
        %v3999 = vand.u32 2147483647, %v3734
        %vm4000 = vcmp.eq.f32.partialorder %v3999, 8.507059e+37
        %v4001 = vand.u32 %v3734, 2147483648
        %v4002 = vor.u32 1.1754944e-38, %v4001
        %v4003 = vsel %vm4000, %v4002, %v3998
        %v4004 = vmul.f32 1.0, %v4003
        %v4005 = vrcp.pop %v3735
        %v4006 = vmul.f32 %v3735, %v4005
        %v4007 = vsub.f32 1.0, %v4006
        %v4008 = vmul.f32 %v4005, %v4007
        %v4009 = vadd.f32 %v4005, %v4008
        %vm4010 = vweird.f32 %v3735
        %vm4011 = vweird.f32 %v4005
        %vm4012 = vmor %vm4010, %vm4011
        %v4013 = vsel %vm4012, %v4005, %v4009
        %v4014 = vand.u32 2147483647, %v3735
        %vm4015 = vcmp.eq.f32.partialorder %v4014, 8.507059e+37
        %v4016 = vand.u32 %v3735, 2147483648
        %v4017 = vor.u32 1.1754944e-38, %v4016
        %v4018 = vsel %vm4015, %v4017, %v4013
        %v4019 = vmul.f32 1.0, %v4018
        %v4020 = vrcp.pop %v3736
        %v4021 = vmul.f32 %v3736, %v4020
        %v4022 = vsub.f32 1.0, %v4021
        %v4023 = vmul.f32 %v4020, %v4022
        %v4024 = vadd.f32 %v4020, %v4023
        %vm4025 = vweird.f32 %v3736
        %vm4026 = vweird.f32 %v4020
        %vm4027 = vmor %vm4025, %vm4026
        %v4028 = vsel %vm4027, %v4020, %v4024
        %v4029 = vand.u32 2147483647, %v3736
        %vm4030 = vcmp.eq.f32.partialorder %v4029, 8.507059e+37
        %v4031 = vand.u32 %v3736, 2147483648
        %v4032 = vor.u32 1.1754944e-38, %v4031
        %v4033 = vsel %vm4030, %v4032, %v4028
        %v4034 = vmul.f32 1.0, %v4033
        %v4035 = vrcp.pop %v3737
        %v4036 = vmul.f32 %v3737, %v4035
        %v4037 = vsub.f32 1.0, %v4036
        %v4038 = vmul.f32 %v4035, %v4037
        %v4039 = vadd.f32 %v4035, %v4038
        %vm4040 = vweird.f32 %v3737
        %vm4041 = vweird.f32 %v4035
        %vm4042 = vmor %vm4040, %vm4041
        %v4043 = vsel %vm4042, %v4035, %v4039
        %v4044 = vand.u32 2147483647, %v3737
        %vm4045 = vcmp.eq.f32.partialorder %v4044, 8.507059e+37
        %v4046 = vand.u32 %v3737, 2147483648
        %v4047 = vor.u32 1.1754944e-38, %v4046
        %v4048 = vsel %vm4045, %v4047, %v4043
        %v4049 = vmul.f32 1.0, %v4048
        %v4050 = vrcp.pop %v3738
        %v4051 = vmul.f32 %v3738, %v4050
        %v4052 = vsub.f32 1.0, %v4051
        %v4053 = vmul.f32 %v4050, %v4052
        %v4054 = vadd.f32 %v4050, %v4053
        %vm4055 = vweird.f32 %v3738
        %vm4056 = vweird.f32 %v4050
        %vm4057 = vmor %vm4055, %vm4056
        %v4058 = vsel %vm4057, %v4050, %v4054
        %v4059 = vand.u32 2147483647, %v3738
        %vm4060 = vcmp.eq.f32.partialorder %v4059, 8.507059e+37
        %v4061 = vand.u32 %v3738, 2147483648
        %v4062 = vor.u32 1.1754944e-38, %v4061
        %v4063 = vsel %vm4060, %v4062, %v4058
        %v4064 = vmul.f32 1.0, %v4063
        %v4065 = vrcp.pop %v3739
        %v4066 = vmul.f32 %v3739, %v4065
        %v4067 = vsub.f32 1.0, %v4066
        %v4068 = vmul.f32 %v4065, %v4067
        %v4069 = vadd.f32 %v4065, %v4068
        %vm4070 = vweird.f32 %v3739
        %vm4071 = vweird.f32 %v4065
        %vm4072 = vmor %vm4070, %vm4071
        %v4073 = vsel %vm4072, %v4065, %v4069
        %v4074 = vand.u32 2147483647, %v3739
        %vm4075 = vcmp.eq.f32.partialorder %v4074, 8.507059e+37
        %v4076 = vand.u32 %v3739, 2147483648
        %v4077 = vor.u32 1.1754944e-38, %v4076
        %v4078 = vsel %vm4075, %v4077, %v4073
        %v4079 = vmul.f32 1.0, %v4078
        %v4080 = vrcp.pop %v3740
        %v4081 = vmul.f32 %v3740, %v4080
        %v4082 = vsub.f32 1.0, %v4081
        %v4083 = vmul.f32 %v4080, %v4082
        %v4084 = vadd.f32 %v4080, %v4083
        %vm4085 = vweird.f32 %v3740
        %vm4086 = vweird.f32 %v4080
        %vm4087 = vmor %vm4085, %vm4086
        %v4088 = vsel %vm4087, %v4080, %v4084
        %v4089 = vand.u32 2147483647, %v3740
        %vm4090 = vcmp.eq.f32.partialorder %v4089, 8.507059e+37
        %v4091 = vand.u32 %v3740, 2147483648
        %v4092 = vor.u32 1.1754944e-38, %v4091
        %v4093 = vsel %vm4090, %v4092, %v4088
        %v4094 = vmul.f32 1.0, %v4093
        %v4095 = vrcp.pop %v3741
        %v4096 = vmul.f32 %v3741, %v4095
        %v4097 = vsub.f32 1.0, %v4096
        %v4098 = vmul.f32 %v4095, %v4097
        %v4099 = vadd.f32 %v4095, %v4098
        %vm4100 = vweird.f32 %v3741
        %vm4101 = vweird.f32 %v4095
        %vm4102 = vmor %vm4100, %vm4101
        %v4103 = vsel %vm4102, %v4095, %v4099
        %v4104 = vand.u32 2147483647, %v3741
        %vm4105 = vcmp.eq.f32.partialorder %v4104, 8.507059e+37
        %v4106 = vand.u32 %v3741, 2147483648
        %v4107 = vor.u32 1.1754944e-38, %v4106
        %v4108 = vsel %vm4105, %v4107, %v4103
        %v4109 = vmul.f32 1.0, %v4108
        %v4110 = vrcp.pop %v3742
        %v4111 = vmul.f32 %v3742, %v4110
        %v4112 = vsub.f32 1.0, %v4111
        %v4113 = vmul.f32 %v4110, %v4112
        %v4114 = vadd.f32 %v4110, %v4113
        %vm4115 = vweird.f32 %v3742
        %vm4116 = vweird.f32 %v4110
        %vm4117 = vmor %vm4115, %vm4116
        %v4118 = vsel %vm4117, %v4110, %v4114
        %v4119 = vand.u32 2147483647, %v3742
        %vm4120 = vcmp.eq.f32.partialorder %v4119, 8.507059e+37
        %v4121 = vand.u32 %v3742, 2147483648
        %v4122 = vor.u32 1.1754944e-38, %v4121
        %v4123 = vsel %vm4120, %v4122, %v4118
        %v4124 = vmul.f32 1.0, %v4123
        %v4125 = vrcp.pop %v3743
        %v4126 = vmul.f32 %v3743, %v4125
        %v4127 = vsub.f32 1.0, %v4126
        %v4128 = vmul.f32 %v4125, %v4127
        %v4129 = vadd.f32 %v4125, %v4128
        %vm4130 = vweird.f32 %v3743
        %vm4131 = vweird.f32 %v4125
        %vm4132 = vmor %vm4130, %vm4131
        %v4133 = vsel %vm4132, %v4125, %v4129
        %v4134 = vand.u32 2147483647, %v3743
        %vm4135 = vcmp.eq.f32.partialorder %v4134, 8.507059e+37
        %v4136 = vand.u32 %v3743, 2147483648
        %v4137 = vor.u32 1.1754944e-38, %v4136
        %v4138 = vsel %vm4135, %v4137, %v4133
        %v4139 = vmul.f32 1.0, %v4138
        %v4140 = vrcp.pop %v3744
        %v4141 = vmul.f32 %v3744, %v4140
        %v4142 = vsub.f32 1.0, %v4141
        %v4143 = vmul.f32 %v4140, %v4142
        %v4144 = vadd.f32 %v4140, %v4143
        %vm4145 = vweird.f32 %v3744
        %vm4146 = vweird.f32 %v4140
        %vm4147 = vmor %vm4145, %vm4146
        %v4148 = vsel %vm4147, %v4140, %v4144
        %v4149 = vand.u32 2147483647, %v3744
        %vm4150 = vcmp.eq.f32.partialorder %v4149, 8.507059e+37
        %v4151 = vand.u32 %v3744, 2147483648
        %v4152 = vor.u32 1.1754944e-38, %v4151
        %v4153 = vsel %vm4150, %v4152, %v4148
        %v4154 = vmul.f32 1.0, %v4153
        %v4155 = vrcp.pop %v3745
        %v4156 = vmul.f32 %v3745, %v4155
        %v4157 = vsub.f32 1.0, %v4156
        %v4158 = vmul.f32 %v4155, %v4157
        %v4159 = vadd.f32 %v4155, %v4158
        %vm4160 = vweird.f32 %v3745
        %vm4161 = vweird.f32 %v4155
        %vm4162 = vmor %vm4160, %vm4161
        %v4163 = vsel %vm4162, %v4155, %v4159
        %v4164 = vand.u32 2147483647, %v3745
        %vm4165 = vcmp.eq.f32.partialorder %v4164, 8.507059e+37
        %v4166 = vand.u32 %v3745, 2147483648
        %v4167 = vor.u32 1.1754944e-38, %v4166
        %v4168 = vsel %vm4165, %v4167, %v4163
        %v4169 = vmul.f32 1.0, %v4168
        %v4170 = vrcp.pop %v3746
        %v4171 = vmul.f32 %v3746, %v4170
        %v4172 = vsub.f32 1.0, %v4171
        %v4173 = vmul.f32 %v4170, %v4172
        %v4174 = vadd.f32 %v4170, %v4173
        %vm4175 = vweird.f32 %v3746
        %vm4176 = vweird.f32 %v4170
        %vm4177 = vmor %vm4175, %vm4176
        %v4178 = vsel %vm4177, %v4170, %v4174
        %v4179 = vand.u32 2147483647, %v3746
        %vm4180 = vcmp.eq.f32.partialorder %v4179, 8.507059e+37
        %v4181 = vand.u32 %v3746, 2147483648
        %v4182 = vor.u32 1.1754944e-38, %v4181
        %v4183 = vsel %vm4180, %v4182, %v4178
        %v4184 = vmul.f32 1.0, %v4183
        %v4185 = vrcp.pop %v3747
        %v4186 = vmul.f32 %v3747, %v4185
        %v4187 = vsub.f32 1.0, %v4186
        %v4188 = vmul.f32 %v4185, %v4187
        %v4189 = vadd.f32 %v4185, %v4188
        %vm4190 = vweird.f32 %v3747
        %vm4191 = vweird.f32 %v4185
        %vm4192 = vmor %vm4190, %vm4191
        %v4193 = vsel %vm4192, %v4185, %v4189
        %v4194 = vand.u32 2147483647, %v3747
        %vm4195 = vcmp.eq.f32.partialorder %v4194, 8.507059e+37
        %v4196 = vand.u32 %v3747, 2147483648
        %v4197 = vor.u32 1.1754944e-38, %v4196
        %v4198 = vsel %vm4195, %v4197, %v4193
        %v4199 = vmul.f32 1.0, %v4198
        %v4200 = vrcp.pop %v3748
        %v4201 = vmul.f32 %v3748, %v4200
        %v4202 = vsub.f32 1.0, %v4201
        %v4203 = vmul.f32 %v4200, %v4202
        %v4204 = vadd.f32 %v4200, %v4203
        %vm4205 = vweird.f32 %v3748
        %vm4206 = vweird.f32 %v4200
        %vm4207 = vmor %vm4205, %vm4206
        %v4208 = vsel %vm4207, %v4200, %v4204
        %v4209 = vand.u32 2147483647, %v3748
        %vm4210 = vcmp.eq.f32.partialorder %v4209, 8.507059e+37
        %v4211 = vand.u32 %v3748, 2147483648
        %v4212 = vor.u32 1.1754944e-38, %v4211
        %v4213 = vsel %vm4210, %v4212, %v4208
        %v4214 = vmul.f32 1.0, %v4213
        %v4215 = vrcp.pop %v3749
        %v4216 = vmul.f32 %v3749, %v4215
        %v4217 = vsub.f32 1.0, %v4216
        %v4218 = vmul.f32 %v4215, %v4217
        %v4219 = vadd.f32 %v4215, %v4218
        %vm4220 = vweird.f32 %v3749
        %vm4221 = vweird.f32 %v4215
        %vm4222 = vmor %vm4220, %vm4221
        %v4223 = vsel %vm4222, %v4215, %v4219
        %v4224 = vand.u32 2147483647, %v3749
        %vm4225 = vcmp.eq.f32.partialorder %v4224, 8.507059e+37
        %v4226 = vand.u32 %v3749, 2147483648
        %v4227 = vor.u32 1.1754944e-38, %v4226
        %v4228 = vsel %vm4225, %v4227, %v4223
        %v4229 = vmul.f32 1.0, %v4228
        %v4230 = vmul.f32 %v566, %v3764
        %v4231 = vmul.f32 %v569, %v3779
        %v4232 = vmul.f32 %v572, %v3794
        %v4233 = vmul.f32 %v575, %v3809
        %v4234 = vmul.f32 %v578, %v3824
        %v4235 = vmul.f32 %v581, %v3839
        %v4236 = vmul.f32 %v584, %v3854
        %v4237 = vmul.f32 %v587, %v3869
        %v4238 = vmul.f32 %v590, %v3884
        %v4239 = vmul.f32 %v593, %v3899
        %v4240 = vmul.f32 %v596, %v3914
        %v4241 = vmul.f32 %v599, %v3929
        %v4242 = vmul.f32 %v602, %v3944
        %v4243 = vmul.f32 %v605, %v3959
        %v4244 = vmul.f32 %v608, %v3974
        %v4245 = vmul.f32 %v611, %v3989
        %v4246 = vmul.f32 %v614, %v4004
        %v4247 = vmul.f32 %v617, %v4019
        %v4248 = vmul.f32 %v620, %v4034
        %v4249 = vmul.f32 %v623, %v4049
        %v4250 = vmul.f32 %v626, %v4064
        %v4251 = vmul.f32 %v629, %v4079
        %v4252 = vmul.f32 %v632, %v4094
        %v4253 = vmul.f32 %v635, %v4109
        %v4254 = vmul.f32 %v638, %v4124
        %v4255 = vmul.f32 %v641, %v4139
        %v4256 = vmul.f32 %v644, %v4154
        %v4257 = vmul.f32 %v647, %v4169
        %v4258 = vmul.f32 %v650, %v4184
        %v4259 = vmul.f32 %v653, %v4199
        %v4260 = vmul.f32 %v656, %v4214
        %v4261 = vmul.f32 %v659, %v4229
        %4262 = vmatpush.msra.mxu0 %v3605
        %4263 = vmatpush.msra.mxu0 %v3604
        %4264 = vmatpush.msra.mxu0 %v3603
        %4265 = vmatpush.msra.mxu0 %v3602
        %4266 = vmatpush.msra.mxu0 %v3601
        %4267 = vmatpush.msra.mxu0 %v3600
        %4268 = vmatpush.msra.mxu0 %v3599
        %4269 = vmatpush.msra.mxu0 %v3598
        %4270 = vmatpush.msra.mxu0 %v3597
        %4271 = vmatpush.msra.mxu0 %v3596
        %4272 = vmatpush.msra.mxu0 %v3595
        %4273 = vmatpush.msra.mxu0 %v3594
        %4274 = vmatpush.msra.mxu0 %v3593
        %4275 = vmatpush.msra.mxu0 %v3592
        %4276 = vmatpush.msra.mxu0 %v3591
        %4277 = vmatpush.msra.mxu0 %v3590
        %4278 = vmatmul.f32.gmra.mxu0 %v3526
        %v4279 = vpop.f32.mrf.mxu0
        %v4280 = vadd.f32 %v4230, %v4279
        %4281 = vmatmul.f32.gmra.mxu0 %v3528
        %v4282 = vpop.f32.mrf.mxu0
        %v4283 = vadd.f32 %v4231, %v4282
        %4284 = vmatmul.f32.gmra.mxu0 %v3530
        %v4285 = vpop.f32.mrf.mxu0
        %v4286 = vadd.f32 %v4232, %v4285
        %4287 = vmatmul.f32.gmra.mxu0 %v3532
        %v4288 = vpop.f32.mrf.mxu0
        %v4289 = vadd.f32 %v4233, %v4288
        %4290 = vmatmul.f32.gmra.mxu0 %v3534
        %v4291 = vpop.f32.mrf.mxu0
        %v4292 = vadd.f32 %v4234, %v4291
        %4293 = vmatmul.f32.gmra.mxu0 %v3536
        %v4294 = vpop.f32.mrf.mxu0
        %v4295 = vadd.f32 %v4235, %v4294
        %4296 = vmatmul.f32.gmra.mxu0 %v3538
        %v4297 = vpop.f32.mrf.mxu0
        %v4298 = vadd.f32 %v4236, %v4297
        %4299 = vmatmul.f32.gmra.mxu0 %v3540
        %v4300 = vpop.f32.mrf.mxu0
        %v4301 = vadd.f32 %v4237, %v4300
        %4302 = vmatmul.f32.gmra.mxu0 %v3542
        %v4303 = vpop.f32.mrf.mxu0
        %v4304 = vadd.f32 %v4238, %v4303
        %4305 = vmatmul.f32.gmra.mxu0 %v3544
        %v4306 = vpop.f32.mrf.mxu0
        %v4307 = vadd.f32 %v4239, %v4306
        %4308 = vmatmul.f32.gmra.mxu0 %v3546
        %v4309 = vpop.f32.mrf.mxu0
        %v4310 = vadd.f32 %v4240, %v4309
        %4311 = vmatmul.f32.gmra.mxu0 %v3548
        %v4312 = vpop.f32.mrf.mxu0
        %v4313 = vadd.f32 %v4241, %v4312
        %4314 = vmatmul.f32.gmra.mxu0 %v3550
        %v4315 = vpop.f32.mrf.mxu0
        %v4316 = vadd.f32 %v4242, %v4315
        %4317 = vmatmul.f32.gmra.mxu0 %v3552
        %v4318 = vpop.f32.mrf.mxu0
        %v4319 = vadd.f32 %v4243, %v4318
        %4320 = vmatmul.f32.gmra.mxu0 %v3554
        %v4321 = vpop.f32.mrf.mxu0
        %v4322 = vadd.f32 %v4244, %v4321
        %4323 = vmatmul.f32.gmra.mxu0 %v3556
        %v4324 = vpop.f32.mrf.mxu0
        %v4325 = vadd.f32 %v4245, %v4324
        %4326 = vmatmul.f32.gmra.mxu0 %v3558
        %v4327 = vpop.f32.mrf.mxu0
        %v4328 = vadd.f32 %v4246, %v4327
        %4329 = vmatmul.f32.gmra.mxu0 %v3560
        %v4330 = vpop.f32.mrf.mxu0
        %v4331 = vadd.f32 %v4247, %v4330
        %4332 = vmatmul.f32.gmra.mxu0 %v3562
        %v4333 = vpop.f32.mrf.mxu0
        %v4334 = vadd.f32 %v4248, %v4333
        %4335 = vmatmul.f32.gmra.mxu0 %v3564
        %v4336 = vpop.f32.mrf.mxu0
        %v4337 = vadd.f32 %v4249, %v4336
        %4338 = vmatmul.f32.gmra.mxu0 %v3566
        %v4339 = vpop.f32.mrf.mxu0
        %v4340 = vadd.f32 %v4250, %v4339
        %4341 = vmatmul.f32.gmra.mxu0 %v3568
        %v4342 = vpop.f32.mrf.mxu0
        %v4343 = vadd.f32 %v4251, %v4342
        %4344 = vmatmul.f32.gmra.mxu0 %v3570
        %v4345 = vpop.f32.mrf.mxu0
        %v4346 = vadd.f32 %v4252, %v4345
        %4347 = vmatmul.f32.gmra.mxu0 %v3572
        %v4348 = vpop.f32.mrf.mxu0
        %v4349 = vadd.f32 %v4253, %v4348
        %4350 = vmatmul.f32.gmra.mxu0 %v3574
        %v4351 = vpop.f32.mrf.mxu0
        %v4352 = vadd.f32 %v4254, %v4351
        %4353 = vmatmul.f32.gmra.mxu0 %v3576
        %v4354 = vpop.f32.mrf.mxu0
        %v4355 = vadd.f32 %v4255, %v4354
        %4356 = vmatmul.f32.gmra.mxu0 %v3578
        %v4357 = vpop.f32.mrf.mxu0
        %v4358 = vadd.f32 %v4256, %v4357
        %4359 = vmatmul.f32.gmra.mxu0 %v3580
        %v4360 = vpop.f32.mrf.mxu0
        %v4361 = vadd.f32 %v4257, %v4360
        %4362 = vmatmul.f32.gmra.mxu0 %v3582
        %v4363 = vpop.f32.mrf.mxu0
        %v4364 = vadd.f32 %v4258, %v4363
        %4365 = vmatmul.f32.gmra.mxu0 %v3584
        %v4366 = vpop.f32.mrf.mxu0
        %v4367 = vadd.f32 %v4259, %v4366
        %4368 = vmatmul.f32.gmra.mxu0 %v3586
        %v4369 = vpop.f32.mrf.mxu0
        %v4370 = vadd.f32 %v4260, %v4369
        %4371 = vmatmul.f32.gmra.mxu0 %v3588
        %v4372 = vpop.f32.mrf.mxu0
        %v4373 = vadd.f32 %v4261, %v4372
        %4374 = vdwg.mxu0
        %4375 = vmatpush.msra.mxu0 %v3621
        %4376 = vmatpush.msra.mxu0 %v3620
        %4377 = vmatpush.msra.mxu0 %v3619
        %4378 = vmatpush.msra.mxu0 %v3618
        %4379 = vmatpush.msra.mxu0 %v3617
        %4380 = vmatpush.msra.mxu0 %v3616
        %4381 = vmatpush.msra.mxu0 %v3615
        %4382 = vmatpush.msra.mxu0 %v3614
        %4383 = vmatpush.msra.mxu0 %v3613
        %4384 = vmatpush.msra.mxu0 %v3612
        %4385 = vmatpush.msra.mxu0 %v3611
        %4386 = vmatpush.msra.mxu0 %v3610
        %4387 = vmatpush.msra.mxu0 %v3609
        %4388 = vmatpush.msra.mxu0 %v3608
        %4389 = vmatpush.msra.mxu0 %v3607
        %4390 = vmatpush.msra.mxu0 %v3606
        %4391 = vmatmul.f32.gmra.mxu0 %v3527
        %v4392 = vpop.f32.mrf.mxu0
        %v4393 = vadd.f32 %v4280, %v4392
        %4394 = vmatmul.f32.gmra.mxu0 %v3529
        %v4395 = vpop.f32.mrf.mxu0
        %v4396 = vadd.f32 %v4283, %v4395
        %4397 = vmatmul.f32.gmra.mxu0 %v3531
        %v4398 = vpop.f32.mrf.mxu0
        %v4399 = vadd.f32 %v4286, %v4398
        %4400 = vmatmul.f32.gmra.mxu0 %v3533
        %v4401 = vpop.f32.mrf.mxu0
        %v4402 = vadd.f32 %v4289, %v4401
        %4403 = vmatmul.f32.gmra.mxu0 %v3535
        %v4404 = vpop.f32.mrf.mxu0
        %v4405 = vadd.f32 %v4292, %v4404
        %4406 = vmatmul.f32.gmra.mxu0 %v3537
        %v4407 = vpop.f32.mrf.mxu0
        %v4408 = vadd.f32 %v4295, %v4407
        %4409 = vmatmul.f32.gmra.mxu0 %v3539
        %v4410 = vpop.f32.mrf.mxu0
        %v4411 = vadd.f32 %v4298, %v4410
        %4412 = vmatmul.f32.gmra.mxu0 %v3541
        %v4413 = vpop.f32.mrf.mxu0
        %v4414 = vadd.f32 %v4301, %v4413
        %4415 = vmatmul.f32.gmra.mxu0 %v3543
        %v4416 = vpop.f32.mrf.mxu0
        %v4417 = vadd.f32 %v4304, %v4416
        %4418 = vmatmul.f32.gmra.mxu0 %v3545
        %v4419 = vpop.f32.mrf.mxu0
        %v4420 = vadd.f32 %v4307, %v4419
        %4421 = vmatmul.f32.gmra.mxu0 %v3547
        %v4422 = vpop.f32.mrf.mxu0
        %v4423 = vadd.f32 %v4310, %v4422
        %4424 = vmatmul.f32.gmra.mxu0 %v3549
        %v4425 = vpop.f32.mrf.mxu0
        %v4426 = vadd.f32 %v4313, %v4425
        %4427 = vmatmul.f32.gmra.mxu0 %v3551
        %v4428 = vpop.f32.mrf.mxu0
        %v4429 = vadd.f32 %v4316, %v4428
        %4430 = vmatmul.f32.gmra.mxu0 %v3553
        %v4431 = vpop.f32.mrf.mxu0
        %v4432 = vadd.f32 %v4319, %v4431
        %4433 = vmatmul.f32.gmra.mxu0 %v3555
        %v4434 = vpop.f32.mrf.mxu0
        %v4435 = vadd.f32 %v4322, %v4434
        %4436 = vmatmul.f32.gmra.mxu0 %v3557
        %v4437 = vpop.f32.mrf.mxu0
        %v4438 = vadd.f32 %v4325, %v4437
        %4439 = vmatmul.f32.gmra.mxu0 %v3559
        %v4440 = vpop.f32.mrf.mxu0
        %v4441 = vadd.f32 %v4328, %v4440
        %4442 = vmatmul.f32.gmra.mxu0 %v3561
        %v4443 = vpop.f32.mrf.mxu0
        %v4444 = vadd.f32 %v4331, %v4443
        %4445 = vmatmul.f32.gmra.mxu0 %v3563
        %v4446 = vpop.f32.mrf.mxu0
        %v4447 = vadd.f32 %v4334, %v4446
        %4448 = vmatmul.f32.gmra.mxu0 %v3565
        %v4449 = vpop.f32.mrf.mxu0
        %v4450 = vadd.f32 %v4337, %v4449
        %4451 = vmatmul.f32.gmra.mxu0 %v3567
        %v4452 = vpop.f32.mrf.mxu0
        %v4453 = vadd.f32 %v4340, %v4452
        %4454 = vmatmul.f32.gmra.mxu0 %v3569
        %v4455 = vpop.f32.mrf.mxu0
        %v4456 = vadd.f32 %v4343, %v4455
        %4457 = vmatmul.f32.gmra.mxu0 %v3571
        %v4458 = vpop.f32.mrf.mxu0
        %v4459 = vadd.f32 %v4346, %v4458
        %4460 = vmatmul.f32.gmra.mxu0 %v3573
        %v4461 = vpop.f32.mrf.mxu0
        %v4462 = vadd.f32 %v4349, %v4461
        %4463 = vmatmul.f32.gmra.mxu0 %v3575
        %v4464 = vpop.f32.mrf.mxu0
        %v4465 = vadd.f32 %v4352, %v4464
        %4466 = vmatmul.f32.gmra.mxu0 %v3577
        %v4467 = vpop.f32.mrf.mxu0
        %v4468 = vadd.f32 %v4355, %v4467
        %4469 = vmatmul.f32.gmra.mxu0 %v3579
        %v4470 = vpop.f32.mrf.mxu0
        %v4471 = vadd.f32 %v4358, %v4470
        %4472 = vmatmul.f32.gmra.mxu0 %v3581
        %v4473 = vpop.f32.mrf.mxu0
        %v4474 = vadd.f32 %v4361, %v4473
        %4475 = vmatmul.f32.gmra.mxu0 %v3583
        %v4476 = vpop.f32.mrf.mxu0
        %v4477 = vadd.f32 %v4364, %v4476
        %4478 = vmatmul.f32.gmra.mxu0 %v3585
        %v4479 = vpop.f32.mrf.mxu0
        %v4480 = vadd.f32 %v4367, %v4479
        %4481 = vmatmul.f32.gmra.mxu0 %v3587
        %v4482 = vpop.f32.mrf.mxu0
        %v4483 = vadd.f32 %v4370, %v4482
        %4484 = vmatmul.f32.gmra.mxu0 %v3589
        %v4485 = vpop.f32.mrf.mxu0
        %v4486 = vadd.f32 %v4373, %v4485
        %4487 = vdwg.mxu0
        %4488 = vst [vmem:[%s223] sm:$0xff] %v4393
        %4489 = vst [vmem:[%s223 + $0x8] sm:$0xff] %v4396
        %4490 = vst [vmem:[%s223 + $0x10] sm:$0xff] %v4399
        %4491 = vst [vmem:[%s223 + $0x18] sm:$0xff] %v4402
        %4492 = vst [vmem:[%s223 + $0x20] sm:$0xff] %v4405
        %4493 = vst [vmem:[%s223 + $0x28] sm:$0xff] %v4408
        %4494 = vst [vmem:[%s223 + $0x30] sm:$0xff] %v4411
        %4495 = vst [vmem:[%s223 + $0x38] sm:$0xff] %v4414
        %4496 = vst [vmem:[%s223 + $0x40] sm:$0xff] %v4417
        %4497 = vst [vmem:[%s223 + $0x48] sm:$0xff] %v4420
        %4498 = vst [vmem:[%s223 + $0x50] sm:$0xff] %v4423
        %4499 = vst [vmem:[%s223 + $0x58] sm:$0xff] %v4426
        %4500 = vst [vmem:[%s223 + $0x60] sm:$0xff] %v4429
        %4501 = vst [vmem:[%s223 + $0x68] sm:$0xff] %v4432
        %4502 = vst [vmem:[%s223 + $0x70] sm:$0xff] %v4435
        %4503 = vst [vmem:[%s223 + $0x78] sm:$0xff] %v4438
        %4504 = vst [vmem:[%s223 + $0x80] sm:$0xff] %v4441
        %4505 = vst [vmem:[%s223 + $0x88] sm:$0xff] %v4444
        %4506 = vst [vmem:[%s223 + $0x90] sm:$0xff] %v4447
        %4507 = vst [vmem:[%s223 + $0x98] sm:$0xff] %v4450
        %4508 = vst [vmem:[%s223 + $0xa0] sm:$0xff] %v4453
        %4509 = vst [vmem:[%s223 + $0xa8] sm:$0xff] %v4456
        %4510 = vst [vmem:[%s223 + $0xb0] sm:$0xff] %v4459
        %4511 = vst [vmem:[%s223 + $0xb8] sm:$0xff] %v4462
        %4512 = vst [vmem:[%s223 + $0xc0] sm:$0xff] %v4465
        %4513 = vst [vmem:[%s223 + $0xc8] sm:$0xff] %v4468
        %4514 = vst [vmem:[%s223 + $0xd0] sm:$0xff] %v4471
        %4515 = vst [vmem:[%s223 + $0xd8] sm:$0xff] %v4474
        %4516 = vst [vmem:[%s223 + $0xe0] sm:$0xff] %v4477
        %4517 = vst [vmem:[%s223 + $0xe8] sm:$0xff] %v4480
        %4518 = vst [vmem:[%s223 + $0xf0] sm:$0xff] %v4483
        %4519 = vst [vmem:[%s223 + $0xf8] sm:$0xff] %v4486
        %s4520 = sand.u32 %s97, 1
        %s4521 = scalar_lea.sflag [#allocation4], %s4520
        %s4522 = sand.u32 %s97, 1
        %s4523 = smul.addr %s4522, 256
        %s4524 = scalar_lea.vmem [#allocation8], %s4523
        // Predicated region
        $region45: #{_smffn_impl.1} parent=31 // pred_check
          %p4525 = pneg %p107
        $region46: #{_smffn_impl.1} parent=31 // pred_check_branch
          %4527 = sbr.rel (%p4525) target = $region48
        $region47: #{_smffn_impl.1} parent=31 // pred_region
          %s4528 = smul.u32 32, %s21
          %4530 = vsyncadd %s4521, 0
          %s4531 = smul.addr %s4528, 8
          %s4532 = scalar_lea.hbm %s3, %s4531
          %s4533 = sshll.u32 %s4524, 4
          %s4534 = int_to_ptr.vmem [resolvable:$true] %s4533
          %s4535 = sshll.u32 %s4532, 4
          %s4536 = int_to_ptr.hbm [resolvable:$true] %s4535
          %4541 = dma.vmem_to_hbm [thread:$0]  %s4534, 4096, %s4536, %s4521, 128, 128, 8
        $region48: #{_smffn_impl.1} parent=31 // pred_fallthru
          _
      $region32: #{_smffn_impl.1} parent=5 // pred_fallthru
        _
      %p4542 = scmp.le.s32.totalorder 2, %s16
      // Predicated region
      $region49: #{_smffn_impl.1} parent=5 // pred_check
        %p4543 = pneg %p4542
      $region50: #{_smffn_impl.1} parent=5 // pred_check_branch
        %4545 = sbr.rel (%p4543) target = $region52
      $region51: #{_smffn_impl.1} parent=5 // pred_region
        %s4546 = ssub.s32 %s16, 2
        // Predicated region
        $region53: #{_smffn_impl.1} parent=51 // pred_check
          %p4547 = pneg %p113
        $region54: #{_smffn_impl.1} parent=51 // pred_check_branch
          %4549 = sbr.rel (%p4547) target = $region56
        $region55: #{_smffn_impl.1} parent=51 // pred_region
          %s4550 = sand.u32 %s98, 1
          %s4551 = scalar_lea.sflag [#allocation4], %s4550
          %s4552 = sand.u32 %s98, 1
          %s4553 = smul.addr %s4552, 256
          %s4554 = scalar_lea.vmem [#allocation8], %s4553
          %4556 = dma.done %s4551, 4096
        $region56: #{_smffn_impl.1} parent=51 // pred_fallthru
          _
      $region52: #{_smffn_impl.1} parent=5 // pred_fallthru
        _
    $region6: #{_smffn_impl.1} parent=1 // loop_footer
      %s20 = sadd.s32 1, %s16
    $region7: #{_smffn_impl.1} parent=1 // loop_footer_branch
      %15 = sbr.rel target = $region3
    $region8: #{_smffn_impl.1} parent=1 // loop_exit
      _
    %4557 = vsyncpa [#allocation3], 1
    %s4558 = scalar_lea.sflag [#allocation3], 1
    %4559 = vsyncpa %s4558, 1
    %4560 = vsyncpa [#allocation6], 1
    %4561 = vsyncpa [#allocation4], 1
    %s4562 = scalar_lea.sflag [#allocation4], 1
    %4563 = vsyncpa %s4562, 1

</llo_original>
